<compile_context>
chip_gen: v5e
topology: v5e:2x2
jax: 0.10.0
libtpu: 0.0.40
codegen_flags: <defaults>
</compile_context>

<pallas_src>
import functools
import math

import jax
import jax.numpy as jnp
from jax.experimental import pallas as pl
from jax.experimental.pallas import tpu as pltpu

EPS = 1e-5  # PyTorch nn.LayerNorm default eps


# --------------------------------------------------------------------------- #
# helpers
# --------------------------------------------------------------------------- #
def _round_up(x, m):
    return ((x + m - 1) // m) * m


def img_to_patch(x, patch_size):
    """[B, C, H, W] -> [B, num_patches, C*patch*patch] (PyTorch img_to_patch)."""
    B, C, H, W = x.shape
    x = x.reshape(B, C, H // patch_size, patch_size, W // patch_size, patch_size)
    x = jnp.transpose(x, (0, 2, 4, 1, 3, 5))
    return x.reshape(B, (H // patch_size) * (W // patch_size), C * patch_size * patch_size)


def _layer_norm(x2d, w, b):
    mu = jnp.mean(x2d, axis=-1, keepdims=True)
    var = jnp.mean(jnp.square(x2d - mu), axis=-1, keepdims=True)
    return (x2d - mu) * jax.lax.rsqrt(var + EPS) * w + b


def _gelu_exact(x):
    # PyTorch nn.GELU() default (approximate='none') -> erf-based GELU.
    return 0.5 * x * (1.0 + jax.lax.erf(x * (1.0 / math.sqrt(2.0))))


# --------------------------------------------------------------------------- #
# fused ViT kernel: grid axis = transformer layer
# --------------------------------------------------------------------------- #
def vit_kernel(
    # layer-invariant inputs
    patches_ref, pos_add_ref, w_emb_ref, mask_ref,
    # per-layer (selected by BlockSpec index_map on the grid axis)
    ln1_w_ref, ln1_b_ref, w_in_ref, b_in_ref, w_out_ref, b_out_ref,
    ln2_w_ref, ln2_b_ref, w_fc1_ref, b_fc1_ref, w_fc2_ref, b_fc2_ref,
    # classification head (layer-invariant)
    lnh_w_ref, lnh_b_ref, w_head_ref, b_head_ref,
    # output + scratch
    o_ref, state_ref,
    *, num_heads,
):
    f32, bf16 = jnp.float32, jnp.bfloat16
    TNp, E = state_ref.shape               # padded token rows (row = t*B + b)
    Bp, _ = o_ref.shape
    H = num_heads
    Dh = E // H

    layer = pl.program_id(0)
    n_layers = pl.num_programs(0)

    # ---- layer 0 only: fused patch embedding + CLS token + pos embedding -----
    # patches has zero rows for the CLS/pad positions; pos_add carries
    # cls+pos[0] on the CLS rows, pos[1:]+embed_bias on patch rows, 0 on pads.
    @pl.when(layer == 0)
    def _():
        state_ref[...] = jnp.dot(patches_ref[...], w_emb_ref[...],
                                 preferred_element_type=f32) + pos_add_ref[...]

    x2 = state_ref[...]                                             # (TNp, E) f32

    # ------------- LayerNorm1 + fused QKV projection (Q pre-scaled) -----------
    h1 = _layer_norm(x2, ln1_w_ref[...], ln1_b_ref[...])
    qkv = jnp.dot(h1.astype(bf16), w_in_ref[...],
                  preferred_element_type=f32) + b_in_ref[...]       # (TNp, 3E)

    # ------------- batched multi-head attention (head axis = batch dim) -------
    def to_heads(block):   # (TNp, E) -> (H, TNp, Dh), one reshape+transpose
        return jnp.transpose(block.reshape(TNp, H, Dh), (1, 0, 2)).astype(bf16)

    q = to_heads(qkv[:, :E])
    k = to_heads(qkv[:, E:2 * E])
    v = to_heads(qkv[:, 2 * E:])

    s = jnp.einsum("hqd,hkd->hqk", q, k, preferred_element_type=f32)  # (H,TNp,TNp)
    s = s + mask_ref[...]            # precomputed additive cross-batch/pad mask

    m = jnp.max(s, axis=-1, keepdims=True)
    p = jnp.exp(s - m)
    p = p * pl.reciprocal(jnp.sum(p, axis=-1, keepdims=True), approx=True)

    ctx = jnp.einsum("hqk,hkd->hqd", p.astype(bf16), v,
                     preferred_element_type=f32)                    # (H, TNp, Dh)

    # head re-concat folded into the output projection: w_out is (H, Dh, E)
    attn = jnp.einsum("hqd,hde->hqe", ctx.astype(bf16), w_out_ref[...],
                      preferred_element_type=f32)                   # (H, TNp, E)
    attn = jnp.sum(attn, axis=0) + b_out_ref[...]                   # (TNp, E)
    x2 = x2 + attn                                                  # residual 1

    # ------------------------- LayerNorm2 + MLP (GELU) ------------------------
    h2 = _layer_norm(x2, ln2_w_ref[...], ln2_b_ref[...])
    h2 = jnp.dot(h2.astype(bf16), w_fc1_ref[...],
                 preferred_element_type=f32) + b_fc1_ref[...]
    h2 = _gelu_exact(h2)
    h2 = jnp.dot(h2.astype(bf16), w_fc2_ref[...],
                 preferred_element_type=f32) + b_fc2_ref[...]
    x2 = x2 + h2                                                    # residual 2

    state_ref[...] = x2

    # ---- last layer only: LayerNorm + Linear head, dense (Bp, NCp) store -----
    @pl.when(layer == n_layers - 1)
    def _():
        rows = x2[:Bp, :]            # first B rows are CLS tokens; rest discarded
        hc = _layer_norm(rows, lnh_w_ref[...], lnh_b_ref[...])
        o_ref[...] = (jnp.dot(hc.astype(bf16), w_head_ref[...],
                              preferred_element_type=f32) + b_head_ref[...]
                      ).astype(o_ref.dtype)


# --------------------------------------------------------------------------- #
# wrapper: parameter packing / padding + pallas_call
# --------------------------------------------------------------------------- #
def vit_forward(x_img, params, *, patch_size, num_heads):
    f32, bf16 = jnp.float32, jnp.bfloat16

    patches = img_to_patch(x_img, patch_size)                # (B, T_p, P)
    B, T_p, P = patches.shape
    E = params["cls_token"].shape[-1]
    H = num_heads
    Dh = E // H
    T = T_p + 1
    TN = T * B
    L = len(params["layers"])
    HID = params["layers"][0]["fc1_w"].shape[0]
    NC = params["head_w"].shape[0]
    scale = 1.0 / math.sqrt(Dh)

    # padded (lane/sublane-dense) shapes
    TNp = _round_up(TN, 16)        # token rows (bf16 sublane multiple)
    Bp = _round_up(B, 8)           # output rows
    Pp = _round_up(P, 128)         # patch feature dim
    NCp = _round_up(NC, 128)       # head output dim

    # ---- token-major, row/lane-padded patch matrix ---------------------------
    # rows 0:B = CLS (zeros), rows B:B+T_p*B = patch features (row = t*B + b),
    # trailing rows / columns = zero padding.
    patches_tb = jnp.transpose(patches, (1, 0, 2)).reshape(T_p * B, P)
    patches_pad = (jnp.zeros((TNp, Pp), f32)
                   .at[B:B + T_p * B, :P].set(patches_tb)).astype(bf16)

    pos = params["pos_embedding"][0, :T]                     # (T, E)
    cls_pos0 = (params["cls_token"][0, 0] + pos[0]).reshape(1, E)
    pos_add = jnp.concatenate(
        [jnp.broadcast_to(cls_pos0, (B, E)),
         jnp.repeat(pos[1:], B, axis=0) + params["embed_b"][None, :],
         jnp.zeros((TNp - TN, E), f32)], axis=0).astype(f32)   # (TNp, E)

    w_emb = (jnp.zeros((Pp, E), f32)
             .at[:P, :].set(params["embed_w"].T)).astype(bf16)  # (Pp, E)

    # additive attention-mask bias: 0 for same-batch real columns, -1e30 else
    ridx = jnp.arange(TNp)
    same_batch = (ridx[:, None] % B) == (ridx[None, :] % B)
    valid_col = ridx[None, :] < TN
    mask_bias = jnp.where(same_batch & valid_col, 0.0, -1e30).astype(f32)

    def stack(name):
        return jnp.stack([lp[name] for lp in params["layers"]], axis=0)

    ln1_w = stack("ln1_w").reshape(L, 1, E).astype(f32)
    ln1_b = stack("ln1_b").reshape(L, 1, E).astype(f32)
    # fold the 1/sqrt(Dh) attention scale into the Q projection (weights + bias)
    w_in = jnp.transpose(stack("in_proj_w"), (0, 2, 1))      # (L, E, 3E)
    w_in = w_in.at[:, :, :E].multiply(scale).astype(bf16)
    b_in = stack("in_proj_b").at[:, :E].multiply(scale).reshape(L, 1, 3 * E).astype(f32)
    # output projection reshaped per-head so the concat is folded into the matmul
    w_out = jnp.transpose(stack("out_proj_w"), (0, 2, 1)).reshape(L, H, Dh, E).astype(bf16)
    b_out = stack("out_proj_b").reshape(L, 1, E).astype(f32)
    ln2_w = stack("ln2_w").reshape(L, 1, E).astype(f32)
    ln2_b = stack("ln2_b").reshape(L, 1, E).astype(f32)
    w_fc1 = jnp.transpose(stack("fc1_w"), (0, 2, 1)).astype(bf16)        # (L, E, HID)
    b_fc1 = stack("fc1_b").reshape(L, 1, HID).astype(f32)
    w_fc2 = jnp.transpose(stack("fc2_w"), (0, 2, 1)).astype(bf16)        # (L, HID, E)
    b_fc2 = stack("fc2_b").reshape(L, 1, E).astype(f32)

    lnh_w = params["head_ln_w"].reshape(1, E).astype(f32)
    lnh_b = params["head_ln_b"].reshape(1, E).astype(f32)
    w_head = (jnp.zeros((E, NCp), f32)
              .at[:, :NC].set(params["head_w"].T)).astype(bf16)          # (E, NCp)
    b_head = (jnp.zeros((1, NCp), f32)
              .at[0, :NC].set(params["head_b"])).astype(f32)

    args = (patches_pad, pos_add, w_emb, mask_bias,
            ln1_w, ln1_b, w_in, b_in, w_out, b_out, ln2_w, ln2_b,
            w_fc1, b_fc1, w_fc2, b_fc2,
            lnh_w, lnh_b, w_head, b_head)

    def const(shape):          # layer-invariant, fetched once, stays resident
        return pl.BlockSpec(shape, lambda l: (0,) * len(shape))

    def per_layer(shape):      # stacked on leading L axis, selected per grid step
        return pl.BlockSpec((None,) + shape, lambda l: (l,) + (0,) * len(shape))

    in_specs = [
        const((TNp, Pp)), const((TNp, E)), const((Pp, E)), const((TNp, TNp)),
        per_layer((1, E)), per_layer((1, E)),
        per_layer((E, 3 * E)), per_layer((1, 3 * E)),
        per_layer((H, Dh, E)), per_layer((1, E)),
        per_layer((1, E)), per_layer((1, E)),
        per_layer((E, HID)), per_layer((1, HID)),
        per_layer((HID, E)), per_layer((1, E)),
        const((1, E)), const((1, E)), const((E, NCp)), const((1, NCp)),
    ]

    out = pl.pallas_call(
        functools.partial(vit_kernel, num_heads=num_heads),
        grid=(L,),
        in_specs=in_specs,
        out_specs=pl.BlockSpec((Bp, NCp), lambda l: (0, 0)),
        out_shape=jax.ShapeDtypeStruct((Bp, NCp), f32),
        scratch_shapes=[pltpu.VMEM((TNp, E), f32)],          # resident token state
        compiler_params=pltpu.CompilerParams(
            dimension_semantics=("arbitrary",),              # layers are sequential
            vmem_limit_bytes=32 * 1024 * 1024,
        ),
    )(*args)
    return out[:B, :NC]


# --------------------------------------------------------------------------- #
# pure-JAX reference (mirrors the kernel's bf16-MXU / f32-accumulate policy)
# --------------------------------------------------------------------------- #
def reference_forward(x_img, params, *, patch_size, num_heads):
    f32, bf16 = jnp.float32, jnp.bfloat16
    E = params["cls_token"].shape[-1]
    H = num_heads
    Dh = E // H

    def mm(a, w):
        return jnp.dot(a.astype(bf16), w.astype(bf16), preferred_element_type=f32)

    def ln(v, w, b):
        mu = v.mean(-1, keepdims=True)
        var = ((v - mu) ** 2).mean(-1, keepdims=True)
        return (v - mu) / jnp.sqrt(var + EPS) * w + b

    patches = img_to_patch(x_img, patch_size)                # (B, T_p, P)
    B, T_p, _ = patches.shape
    T = T_p + 1

    tok = mm(patches, params["embed_w"].T) + params["embed_b"]
    cls = jnp.broadcast_to(params["cls_token"], (B, 1, E))
    x = jnp.concatenate([cls, tok], axis=1) + params["pos_embedding"][:, :T]
    x = jnp.transpose(x, (1, 0, 2))                          # (T, B, E)

    for lp in params["layers"]:
        inp = ln(x, lp["ln1_w"], lp["ln1_b"])
        qkv = mm(inp, lp["in_proj_w"].T) + lp["in_proj_b"]
        q, k, v = jnp.split(qkv, 3, axis=-1)
        q = q * (1.0 / math.sqrt(Dh))

        def heads(a):
            return a.reshape(T, B, H, Dh).transpose(1, 2, 0, 3)   # (B,H,T,Dh)

        qh, kh, vh = heads(q), heads(k), heads(v)
        s = jnp.einsum("bhqd,bhkd->bhqk", qh.astype(bf16), kh.astype(bf16),
                       preferred_element_type=f32)
        a = jax.nn.softmax(s, axis=-1)
        ctx = jnp.einsum("bhqk,bhkd->bhqd", a.astype(bf16), vh.astype(bf16),
                         preferred_element_type=f32)
        ctx = ctx.transpose(2, 0, 1, 3).reshape(T, B, E)
        x = x + mm(ctx, lp["out_proj_w"].T) + lp["out_proj_b"]

        h = ln(x, lp["ln2_w"], lp["ln2_b"])
        h = mm(h, lp["fc1_w"].T) + lp["fc1_b"]
        h = 0.5 * h * (1.0 + jax.lax.erf(h / math.sqrt(2.0)))
        h = mm(h, lp["fc2_w"].T) + lp["fc2_b"]
        x = x + h

    cls_out = x[0]                                           # (B, E)
    hc = ln(cls_out, params["head_ln_w"], params["head_ln_b"])
    return mm(hc, params["head_w"].T) + params["head_b"]


# --------------------------------------------------------------------------- #
# deterministic parameter init (PyTorch layouts)
# --------------------------------------------------------------------------- #
def init_params(key, embed_dim, hidden_dim, num_layers, num_classes,
                num_channels, patch_size, num_patches):
    f32 = jnp.float32
    P = num_channels * patch_size ** 2
    s = 0.1
    keys = iter(jax.random.split(key, 8 + 6 * num_layers))

    def rnd(shape, scale=s):
        return scale * jax.random.normal(next(keys), shape, f32)

    layers = []
    for _ in range(num_layers):
        layers.append(dict(
            ln1_w=jnp.ones((embed_dim,), f32), ln1_b=jnp.zeros((embed_dim,), f32),
            in_proj_w=rnd((3 * embed_dim, embed_dim)),
            in_proj_b=rnd((3 * embed_dim,)),
            out_proj_w=rnd((embed_dim, embed_dim)),
            out_proj_b=jnp.zeros((embed_dim,), f32),
            ln2_w=jnp.ones((embed_dim,), f32), ln2_b=jnp.zeros((embed_dim,), f32),
            fc1_w=rnd((hidden_dim, embed_dim)),
            fc1_b=rnd((hidden_dim,)),
            fc2_w=rnd((embed_dim, hidden_dim)),
            fc2_b=jnp.zeros((embed_dim,), f32),
        ))

    return dict(
        embed_w=rnd((embed_dim, P)),
        embed_b=rnd((embed_dim,)),
        cls_token=rnd((1, 1, embed_dim), 0.5),
        pos_embedding=rnd((1, 1 + num_patches, embed_dim), 0.5),
        layers=layers,
        head_ln_w=jnp.ones((embed_dim,), f32),
        head_ln_b=jnp.zeros((embed_dim,), f32),
        head_w=rnd((num_classes, embed_dim)),
        head_b=jnp.zeros((num_classes,), f32),
    )


if __name__ == "__main__":
    EMBED_DIM, HIDDEN_DIM, NUM_HEADS = 128, 256, 4
    NUM_LAYERS, NUM_CLASSES = 3, 10
    PATCH_SIZE = 4
    B, C, HW = 2, 3, 16                       # image: (2, 3, 16, 16) -> 16 patches
    NUM_PATCHES = (HW // PATCH_SIZE) ** 2

    key = jax.random.PRNGKey(0)
    k_param, k_x = jax.random.split(key)
    params = init_params(k_param, EMBED_DIM, HIDDEN_DIM, NUM_LAYERS, NUM_CLASSES,
                         num_channels=C, patch_size=PATCH_SIZE,
                         num_patches=NUM_PATCHES)
    x = jax.random.normal(k_x, (B, C, HW, HW), jnp.float32)

    out = vit_forward(x, params, patch_size=PATCH_SIZE, num_heads=NUM_HEADS)
    out = jax.block_until_ready(out)

    ref = jax.block_until_ready(
        reference_forward(x, params, patch_size=PATCH_SIZE, num_heads=NUM_HEADS))
    assert out.shape == (B, NUM_CLASSES)
    max_err = float(jnp.max(jnp.abs(out - ref)))
    assert jnp.allclose(out, ref, atol=5e-2, rtol=5e-2), max_err

    print("KERNEL_OK")
</pallas_src>

<mosaic_0001>
module attributes {stable_mosaic.version = 11 : i64} {
  func.func @vit_kernel(%arg0: i32, %arg1: memref<48x128xbf16, #tpu.memory_space<vmem>>, %arg2: memref<48x128xf32, #tpu.memory_space<vmem>>, %arg3: memref<128x128xbf16, #tpu.memory_space<vmem>>, %arg4: memref<48x48xf32, #tpu.memory_space<vmem>>, %arg5: memref<1x1x128xf32, #tpu.memory_space<vmem>>, %arg6: memref<1x1x128xf32, #tpu.memory_space<vmem>>, %arg7: memref<1x128x384xbf16, #tpu.memory_space<vmem>>, %arg8: memref<1x1x384xf32, #tpu.memory_space<vmem>>, %arg9: memref<1x4x32x128xbf16, #tpu.memory_space<vmem>>, %arg10: memref<1x1x128xf32, #tpu.memory_space<vmem>>, %arg11: memref<1x1x128xf32, #tpu.memory_space<vmem>>, %arg12: memref<1x1x128xf32, #tpu.memory_space<vmem>>, %arg13: memref<1x128x256xbf16, #tpu.memory_space<vmem>>, %arg14: memref<1x1x256xf32, #tpu.memory_space<vmem>>, %arg15: memref<1x256x128xbf16, #tpu.memory_space<vmem>>, %arg16: memref<1x1x128xf32, #tpu.memory_space<vmem>>, %arg17: memref<1x128xf32, #tpu.memory_space<vmem>>, %arg18: memref<1x128xf32, #tpu.memory_space<vmem>>, %arg19: memref<128x128xbf16, #tpu.memory_space<vmem>>, %arg20: memref<1x128xf32, #tpu.memory_space<vmem>>, %arg21: memref<8x128xf32, #tpu.memory_space<vmem>>, %arg22: memref<48x128xf32, #tpu.memory_space<vmem>>) attributes {dimension_semantics = [#tpu.dimension_semantics<arbitrary>], iteration_bounds = array<i64: 3>, scalar_prefetch = 0 : i64, scratch_operands = 1 : i64, tpu.core_type = #tpu.core_type<tc>, window_params = [{pipeline_mode = #tpu.pipeline_mode<synchronous>, transform_indices = @transform_0, window_bounds = array<i64: 48, 128>}, {pipeline_mode = #tpu.pipeline_mode<synchronous>, transform_indices = @transform_1, window_bounds = array<i64: 48, 128>}, {pipeline_mode = #tpu.pipeline_mode<synchronous>, transform_indices = @transform_2, window_bounds = array<i64: 128, 128>}, {pipeline_mode = #tpu.pipeline_mode<synchronous>, transform_indices = @transform_3, window_bounds = array<i64: 48, 48>}, {transform_indices = @transform_4, window_bounds = array<i64: 1, 1, 128>}, {transform_indices = @transform_5, window_bounds = array<i64: 1, 1, 128>}, {transform_indices = @transform_6, window_bounds = array<i64: 1, 128, 384>}, {transform_indices = @transform_7, window_bounds = array<i64: 1, 1, 384>}, {transform_indices = @transform_8, window_bounds = array<i64: 1, 4, 32, 128>}, {transform_indices = @transform_9, window_bounds = array<i64: 1, 1, 128>}, {transform_indices = @transform_10, window_bounds = array<i64: 1, 1, 128>}, {transform_indices = @transform_11, window_bounds = array<i64: 1, 1, 128>}, {transform_indices = @transform_12, window_bounds = array<i64: 1, 128, 256>}, {transform_indices = @transform_13, window_bounds = array<i64: 1, 1, 256>}, {transform_indices = @transform_14, window_bounds = array<i64: 1, 256, 128>}, {transform_indices = @transform_15, window_bounds = array<i64: 1, 1, 128>}, {pipeline_mode = #tpu.pipeline_mode<synchronous>, transform_indices = @transform_16, window_bounds = array<i64: 1, 128>}, {pipeline_mode = #tpu.pipeline_mode<synchronous>, transform_indices = @transform_17, window_bounds = array<i64: 1, 128>}, {pipeline_mode = #tpu.pipeline_mode<synchronous>, transform_indices = @transform_18, window_bounds = array<i64: 128, 128>}, {pipeline_mode = #tpu.pipeline_mode<synchronous>, transform_indices = @transform_19, window_bounds = array<i64: 1, 128>}, {pipeline_mode = #tpu.pipeline_mode<synchronous>, transform_indices = @transform_20, window_bounds = array<i64: 8, 128>}]} {
    %c0_i32 = arith.constant 0 : i32
    %0 = arith.cmpi eq, %arg0, %c0_i32 : i32
    %1 = arith.extui %0 : i1 to i32
    %c0_i32_0 = arith.constant 0 : i32
    %2 = arith.cmpi ne, %1, %c0_i32_0 : i32
    scf.if %2 {
      %c0_65 = arith.constant 0 : index
      %c0_66 = arith.constant 0 : index
      %132 = vector.load %arg1[%c0_65, %c0_66] : memref<48x128xbf16, #tpu.memory_space<vmem>>, vector<48x128xbf16>
      %c0_67 = arith.constant 0 : index
      %c0_68 = arith.constant 0 : index
      %133 = vector.load %arg3[%c0_67, %c0_68] : memref<128x128xbf16, #tpu.memory_space<vmem>>, vector<128x128xbf16>
      %cst_69 = arith.constant dense<0.000000e+00> : vector<48x128xf32>
      %134 = tpu.matmul %132, %133, %cst_69 {dimension_numbers = #tpu.dot_dimension_numbers<[1], [0], [0], [1], [0, 0, 1, 1], [], []>} : vector<48x128xbf16>, vector<128x128xbf16>, vector<48x128xf32> -> vector<48x128xf32>
      %c0_70 = arith.constant 0 : index
      %c0_71 = arith.constant 0 : index
      %135 = vector.load %arg2[%c0_70, %c0_71] : memref<48x128xf32, #tpu.memory_space<vmem>>, vector<48x128xf32>
      %136 = arith.addf %134, %135 : vector<48x128xf32>
      %c0_72 = arith.constant 0 : index
      %c0_73 = arith.constant 0 : index
      %137 = vector.load %arg22[%c0_72, %c0_73] : memref<48x128xf32, #tpu.memory_space<vmem>>, vector<48x128xf32>
      tpu.vector_store %arg22[%c0_72, %c0_73], %136 {strides = array<i32>} : memref<48x128xf32, #tpu.memory_space<vmem>>, vector<48x128xf32>,
    } else {
    }
    %c0 = arith.constant 0 : index
    %c0_1 = arith.constant 0 : index
    %3 = vector.load %arg22[%c0, %c0_1] : memref<48x128xf32, #tpu.memory_space<vmem>>, vector<48x128xf32>
    %c0_2 = arith.constant 0 : index
    %c0_3 = arith.constant 0 : index
    %c0_4 = arith.constant 0 : index
    %4 = vector.load %arg5[%c0_2, %c0_3, %c0_4] : memref<1x1x128xf32, #tpu.memory_space<vmem>>, vector<1x1x128xf32>
    %5 = vector.shape_cast %4 : vector<1x1x128xf32> to vector<1x128xf32>
    %c0_5 = arith.constant 0 : index
    %c0_6 = arith.constant 0 : index
    %c0_7 = arith.constant 0 : index
    %6 = vector.load %arg6[%c0_5, %c0_6, %c0_7] : memref<1x1x128xf32, #tpu.memory_space<vmem>>, vector<1x1x128xf32>
    %7 = vector.shape_cast %6 : vector<1x1x128xf32> to vector<1x128xf32>
    %cst = arith.constant dense<0.000000e+00> : vector<48xf32>
    %8 = vector.multi_reduction <add>, %3, %cst [1] : vector<48x128xf32> to vector<48xf32>
    %9 = vector.shape_cast %8 : vector<48xf32> to vector<48x1xf32>
    %cst_8 = arith.constant 1.280000e+02 : f32
    %10 = vector.broadcast %cst_8 : f32 to vector<48x1xf32>
    %11 = arith.divf %9, %10 : vector<48x1xf32>
    %12 = vector.broadcast %11 : vector<48x1xf32> to vector<48x128xf32>
    %13 = arith.subf %3, %12 : vector<48x128xf32>
    %14 = arith.mulf %13, %13 : vector<48x128xf32>
    %cst_9 = arith.constant dense<0.000000e+00> : vector<48xf32>
    %15 = vector.multi_reduction <add>, %14, %cst_9 [1] : vector<48x128xf32> to vector<48xf32>
    %16 = vector.shape_cast %15 : vector<48xf32> to vector<48x1xf32>
    %cst_10 = arith.constant 1.280000e+02 : f32
    %17 = vector.broadcast %cst_10 : f32 to vector<48x1xf32>
    %18 = arith.divf %16, %17 : vector<48x1xf32>
    %19 = vector.broadcast %11 : vector<48x1xf32> to vector<48x128xf32>
    %20 = arith.subf %3, %19 : vector<48x128xf32>
    %cst_11 = arith.constant 9.99999974E-6 : f32
    %21 = vector.broadcast %cst_11 : f32 to vector<48x1xf32>
    %22 = arith.addf %18, %21 : vector<48x1xf32>
    %23 = math.rsqrt %22 : vector<48x1xf32>
    %24 = vector.broadcast %23 : vector<48x1xf32> to vector<48x128xf32>
    %25 = arith.mulf %20, %24 : vector<48x128xf32>
    %26 = vector.broadcast %5 : vector<1x128xf32> to vector<48x128xf32>
    %27 = arith.mulf %25, %26 : vector<48x128xf32>
    %28 = vector.broadcast %7 : vector<1x128xf32> to vector<48x128xf32>
    %29 = arith.addf %27, %28 : vector<48x128xf32>
    %30 = arith.truncf %29 : vector<48x128xf32> to vector<48x128xbf16>
    %c0_12 = arith.constant 0 : index
    %c0_13 = arith.constant 0 : index
    %c0_14 = arith.constant 0 : index
    %31 = vector.load %arg7[%c0_12, %c0_13, %c0_14] : memref<1x128x384xbf16, #tpu.memory_space<vmem>>, vector<1x128x384xbf16>
    %32 = vector.shape_cast %31 : vector<1x128x384xbf16> to vector<128x384xbf16>
    %cst_15 = arith.constant dense<0.000000e+00> : vector<48x384xf32>
    %33 = tpu.matmul %30, %32, %cst_15 {dimension_numbers = #tpu.dot_dimension_numbers<[1], [0], [0], [1], [0, 0, 1, 1], [], []>} : vector<48x128xbf16>, vector<128x384xbf16>, vector<48x384xf32> -> vector<48x384xf32>
    %c0_16 = arith.constant 0 : index
    %c0_17 = arith.constant 0 : index
    %c0_18 = arith.constant 0 : index
    %34 = vector.load %arg8[%c0_16, %c0_17, %c0_18] : memref<1x1x384xf32, #tpu.memory_space<vmem>>, vector<1x1x384xf32>
    %35 = vector.shape_cast %34 : vector<1x1x384xf32> to vector<1x384xf32>
    %36 = vector.broadcast %35 : vector<1x384xf32> to vector<48x384xf32>
    %37 = arith.addf %33, %36 : vector<48x384xf32>
    %38 = vector.extract_strided_slice %37 {offsets = [0, 0], sizes = [48, 128], strides = [1, 1]} : vector<48x384xf32> to vector<48x128xf32>
    %39 = vector.shape_cast %38 : vector<48x128xf32> to vector<48x4x32xf32>
    %40 = tpu.transpose %39, [1, 0, 2] : vector<48x4x32xf32> -> vector<4x48x32xf32>
    %41 = arith.truncf %40 : vector<4x48x32xf32> to vector<4x48x32xbf16>
    %42 = vector.extract_strided_slice %37 {offsets = [0, 128], sizes = [48, 128], strides = [1, 1]} : vector<48x384xf32> to vector<48x128xf32>
    %43 = vector.shape_cast %42 : vector<48x128xf32> to vector<48x4x32xf32>
    %44 = tpu.transpose %43, [1, 0, 2] : vector<48x4x32xf32> -> vector<4x48x32xf32>
    %45 = arith.truncf %44 : vector<4x48x32xf32> to vector<4x48x32xbf16>
    %46 = vector.extract_strided_slice %37 {offsets = [0, 256], sizes = [48, 128], strides = [1, 1]} : vector<48x384xf32> to vector<48x128xf32>
    %47 = vector.shape_cast %46 : vector<48x128xf32> to vector<48x4x32xf32>
    %48 = tpu.transpose %47, [1, 0, 2] : vector<48x4x32xf32> -> vector<4x48x32xf32>
    %49 = arith.truncf %48 : vector<4x48x32xf32> to vector<4x48x32xbf16>
    "tpu.trace_start"() <{level = 10 : i32, message = "hqd,hkd->hqk"}> : () -> ()
    %cst_19 = arith.constant dense<0.000000e+00> : vector<4x48x48xf32>
    %50 = tpu.matmul %41, %45, %cst_19 {dimension_numbers = #tpu.dot_dimension_numbers<[2], [2], [1], [1], [0, 0, 0, 1, 1, 1], [0], [0]>} : vector<4x48x32xbf16>, vector<4x48x32xbf16>, vector<4x48x48xf32> -> vector<4x48x48xf32>
    "tpu.trace_stop"() : () -> ()
    %c0_20 = arith.constant 0 : index
    %c0_21 = arith.constant 0 : index
    %51 = vector.load %arg4[%c0_20, %c0_21] : memref<48x48xf32, #tpu.memory_space<vmem>>, vector<48x48xf32>
    %52 = vector.shape_cast %51 : vector<48x48xf32> to vector<1x48x48xf32>
    %53 = vector.broadcast %52 : vector<1x48x48xf32> to vector<4x48x48xf32>
    %54 = arith.addf %50, %53 : vector<4x48x48xf32>
    %cst_22 = arith.constant dense<0xFF800000> : vector<4x48xf32>
    %55 = vector.multi_reduction <maximumf>, %54, %cst_22 [2] : vector<4x48x48xf32> to vector<4x48xf32>
    %56 = vector.shape_cast %55 : vector<4x48xf32> to vector<4x48x1xf32>
    %57 = vector.broadcast %56 : vector<4x48x1xf32> to vector<4x48x48xf32>
    %58 = arith.subf %54, %57 : vector<4x48x48xf32>
    %59 = math.exp %58 : vector<4x48x48xf32>
    %cst_23 = arith.constant dense<0.000000e+00> : vector<4x48xf32>
    %60 = vector.multi_reduction <add>, %59, %cst_23 [2] : vector<4x48x48xf32> to vector<4x48xf32>
    %61 = vector.shape_cast %60 : vector<4x48xf32> to vector<4x48x1xf32>
    %62 = tpu.reciprocal %61 {approx = true} : vector<4x48x1xf32> -> vector<4x48x1xf32>
    %63 = vector.broadcast %62 : vector<4x48x1xf32> to vector<4x48x48xf32>
    %64 = arith.mulf %59, %63 : vector<4x48x48xf32>
    %65 = arith.truncf %64 : vector<4x48x48xf32> to vector<4x48x48xbf16>
    "tpu.trace_start"() <{level = 10 : i32, message = "hqk,hkd->hqd"}> : () -> ()
    %cst_24 = arith.constant dense<0.000000e+00> : vector<4x48x32xf32>
    %66 = tpu.matmul %65, %49, %cst_24 {dimension_numbers = #tpu.dot_dimension_numbers<[2], [1], [1], [2], [0, 0, 0, 1, 1, 2], [0], [0]>} : vector<4x48x48xbf16>, vector<4x48x32xbf16>, vector<4x48x32xf32> -> vector<4x48x32xf32>
    "tpu.trace_stop"() : () -> ()
    %67 = arith.truncf %66 : vector<4x48x32xf32> to vector<4x48x32xbf16>
    %c0_25 = arith.constant 0 : index
    %c0_26 = arith.constant 0 : index
    %c0_27 = arith.constant 0 : index
    %c0_28 = arith.constant 0 : index
    %68 = vector.load %arg9[%c0_25, %c0_26, %c0_27, %c0_28] : memref<1x4x32x128xbf16, #tpu.memory_space<vmem>>, vector<1x4x32x128xbf16>
    %69 = vector.shape_cast %68 : vector<1x4x32x128xbf16> to vector<4x32x128xbf16>
    "tpu.trace_start"() <{level = 10 : i32, message = "hqd,hde->hqe"}> : () -> ()
    %cst_29 = arith.constant dense<0.000000e+00> : vector<4x48x128xf32>
    %70 = tpu.matmul %67, %69, %cst_29 {dimension_numbers = #tpu.dot_dimension_numbers<[2], [1], [1], [2], [0, 0, 0, 1, 1, 2], [0], [0]>} : vector<4x48x32xbf16>, vector<4x32x128xbf16>, vector<4x48x128xf32> -> vector<4x48x128xf32>
    "tpu.trace_stop"() : () -> ()
    %cst_30 = arith.constant dense<0.000000e+00> : vector<48x128xf32>
    %71 = vector.multi_reduction <add>, %70, %cst_30 [0] : vector<4x48x128xf32> to vector<48x128xf32>
    %c0_31 = arith.constant 0 : index
    %c0_32 = arith.constant 0 : index
    %c0_33 = arith.constant 0 : index
    %72 = vector.load %arg10[%c0_31, %c0_32, %c0_33] : memref<1x1x128xf32, #tpu.memory_space<vmem>>, vector<1x1x128xf32>
    %73 = vector.shape_cast %72 : vector<1x1x128xf32> to vector<1x128xf32>
    %74 = vector.broadcast %73 : vector<1x128xf32> to vector<48x128xf32>
    %75 = arith.addf %71, %74 : vector<48x128xf32>
    %76 = arith.addf %3, %75 : vector<48x128xf32>
    %c0_34 = arith.constant 0 : index
    %c0_35 = arith.constant 0 : index
    %c0_36 = arith.constant 0 : index
    %77 = vector.load %arg11[%c0_34, %c0_35, %c0_36] : memref<1x1x128xf32, #tpu.memory_space<vmem>>, vector<1x1x128xf32>
    %78 = vector.shape_cast %77 : vector<1x1x128xf32> to vector<1x128xf32>
    %c0_37 = arith.constant 0 : index
    %c0_38 = arith.constant 0 : index
    %c0_39 = arith.constant 0 : index
    %79 = vector.load %arg12[%c0_37, %c0_38, %c0_39] : memref<1x1x128xf32, #tpu.memory_space<vmem>>, vector<1x1x128xf32>
    %80 = vector.shape_cast %79 : vector<1x1x128xf32> to vector<1x128xf32>
    %cst_40 = arith.constant dense<0.000000e+00> : vector<48xf32>
    %81 = vector.multi_reduction <add>, %76, %cst_40 [1] : vector<48x128xf32> to vector<48xf32>
    %82 = vector.shape_cast %81 : vector<48xf32> to vector<48x1xf32>
    %cst_41 = arith.constant 1.280000e+02 : f32
    %83 = vector.broadcast %cst_41 : f32 to vector<48x1xf32>
    %84 = arith.divf %82, %83 : vector<48x1xf32>
    %85 = vector.broadcast %84 : vector<48x1xf32> to vector<48x128xf32>
    %86 = arith.subf %76, %85 : vector<48x128xf32>
    %87 = arith.mulf %86, %86 : vector<48x128xf32>
    %cst_42 = arith.constant dense<0.000000e+00> : vector<48xf32>
    %88 = vector.multi_reduction <add>, %87, %cst_42 [1] : vector<48x128xf32> to vector<48xf32>
    %89 = vector.shape_cast %88 : vector<48xf32> to vector<48x1xf32>
    %cst_43 = arith.constant 1.280000e+02 : f32
    %90 = vector.broadcast %cst_43 : f32 to vector<48x1xf32>
    %91 = arith.divf %89, %90 : vector<48x1xf32>
    %92 = vector.broadcast %84 : vector<48x1xf32> to vector<48x128xf32>
    %93 = arith.subf %76, %92 : vector<48x128xf32>
    %cst_44 = arith.constant 9.99999974E-6 : f32
    %94 = vector.broadcast %cst_44 : f32 to vector<48x1xf32>
    %95 = arith.addf %91, %94 : vector<48x1xf32>
    %96 = math.rsqrt %95 : vector<48x1xf32>
    %97 = vector.broadcast %96 : vector<48x1xf32> to vector<48x128xf32>
    %98 = arith.mulf %93, %97 : vector<48x128xf32>
    %99 = vector.broadcast %78 : vector<1x128xf32> to vector<48x128xf32>
    %100 = arith.mulf %98, %99 : vector<48x128xf32>
    %101 = vector.broadcast %80 : vector<1x128xf32> to vector<48x128xf32>
    %102 = arith.addf %100, %101 : vector<48x128xf32>
    %103 = arith.truncf %102 : vector<48x128xf32> to vector<48x128xbf16>
    %c0_45 = arith.constant 0 : index
    %c0_46 = arith.constant 0 : index
    %c0_47 = arith.constant 0 : index
    %104 = vector.load %arg13[%c0_45, %c0_46, %c0_47] : memref<1x128x256xbf16, #tpu.memory_space<vmem>>, vector<1x128x256xbf16>
    %105 = vector.shape_cast %104 : vector<1x128x256xbf16> to vector<128x256xbf16>
    %cst_48 = arith.constant dense<0.000000e+00> : vector<48x256xf32>
    %106 = tpu.matmul %103, %105, %cst_48 {dimension_numbers = #tpu.dot_dimension_numbers<[1], [0], [0], [1], [0, 0, 1, 1], [], []>} : vector<48x128xbf16>, vector<128x256xbf16>, vector<48x256xf32> -> vector<48x256xf32>
    %c0_49 = arith.constant 0 : index
    %c0_50 = arith.constant 0 : index
    %c0_51 = arith.constant 0 : index
    %107 = vector.load %arg14[%c0_49, %c0_50, %c0_51] : memref<1x1x256xf32, #tpu.memory_space<vmem>>, vector<1x1x256xf32>
    %108 = vector.shape_cast %107 : vector<1x1x256xf32> to vector<1x256xf32>
    %109 = vector.broadcast %108 : vector<1x256xf32> to vector<48x256xf32>
    %110 = arith.addf %106, %109 : vector<48x256xf32>
    %cst_52 = arith.constant 5.000000e-01 : f32
    %111 = vector.broadcast %cst_52 : f32 to vector<48x256xf32>
    %112 = arith.mulf %111, %110 : vector<48x256xf32>
    %cst_53 = arith.constant 0.707106769 : f32
    %113 = vector.broadcast %cst_53 : f32 to vector<48x256xf32>
    %114 = arith.mulf %110, %113 : vector<48x256xf32>
    %115 = math.erf %114 : vector<48x256xf32>
    %cst_54 = arith.constant 1.000000e+00 : f32
    %116 = vector.broadcast %cst_54 : f32 to vector<48x256xf32>
    %117 = arith.addf %116, %115 : vector<48x256xf32>
    %118 = arith.mulf %112, %117 : vector<48x256xf32>
    %119 = arith.truncf %118 : vector<48x256xf32> to vector<48x256xbf16>
    %c0_55 = arith.constant 0 : index
    %c0_56 = arith.constant 0 : index
    %c0_57 = arith.constant 0 : index
    %120 = vector.load %arg15[%c0_55, %c0_56, %c0_57] : memref<1x256x128xbf16, #tpu.memory_space<vmem>>, vector<1x256x128xbf16>
    %121 = vector.shape_cast %120 : vector<1x256x128xbf16> to vector<256x128xbf16>
    %cst_58 = arith.constant dense<0.000000e+00> : vector<48x128xf32>
    %122 = tpu.matmul %119, %121, %cst_58 {dimension_numbers = #tpu.dot_dimension_numbers<[1], [0], [0], [1], [0, 0, 1, 1], [], []>} : vector<48x256xbf16>, vector<256x128xbf16>, vector<48x128xf32> -> vector<48x128xf32>
    %c0_59 = arith.constant 0 : index
    %c0_60 = arith.constant 0 : index
    %c0_61 = arith.constant 0 : index
    %123 = vector.load %arg16[%c0_59, %c0_60, %c0_61] : memref<1x1x128xf32, #tpu.memory_space<vmem>>, vector<1x1x128xf32>
    %124 = vector.shape_cast %123 : vector<1x1x128xf32> to vector<1x128xf32>
    %125 = vector.broadcast %124 : vector<1x128xf32> to vector<48x128xf32>
    %126 = arith.addf %122, %125 : vector<48x128xf32>
    %127 = arith.addf %76, %126 : vector<48x128xf32>
    %c0_62 = arith.constant 0 : index
    %c0_63 = arith.constant 0 : index
    %128 = vector.load %arg22[%c0_62, %c0_63] : memref<48x128xf32, #tpu.memory_space<vmem>>, vector<48x128xf32>
    tpu.vector_store %arg22[%c0_62, %c0_63], %127 {strides = array<i32>} : memref<48x128xf32, #tpu.memory_space<vmem>>, vector<48x128xf32>,
    %c2_i32 = arith.constant 2 : i32
    %129 = arith.cmpi eq, %arg0, %c2_i32 : i32
    %130 = arith.extui %129 : i1 to i32
    %c0_i32_64 = arith.constant 0 : i32
    %131 = arith.cmpi ne, %130, %c0_i32_64 : i32
    scf.if %131 {
      %132 = vector.extract_strided_slice %127 {offsets = [0, 0], sizes = [8, 128], strides = [1, 1]} : vector<48x128xf32> to vector<8x128xf32>
      %c0_65 = arith.constant 0 : index
      %c0_66 = arith.constant 0 : index
      %133 = vector.load %arg17[%c0_65, %c0_66] : memref<1x128xf32, #tpu.memory_space<vmem>>, vector<1x128xf32>
      %c0_67 = arith.constant 0 : index
      %c0_68 = arith.constant 0 : index
      %134 = vector.load %arg18[%c0_67, %c0_68] : memref<1x128xf32, #tpu.memory_space<vmem>>, vector<1x128xf32>
      %cst_69 = arith.constant dense<0.000000e+00> : vector<8xf32>
      %135 = vector.multi_reduction <add>, %132, %cst_69 [1] : vector<8x128xf32> to vector<8xf32>
      %136 = vector.shape_cast %135 : vector<8xf32> to vector<8x1xf32>
      %cst_70 = arith.constant 1.280000e+02 : f32
      %137 = vector.broadcast %cst_70 : f32 to vector<8x1xf32>
      %138 = arith.divf %136, %137 : vector<8x1xf32>
      %139 = vector.broadcast %138 : vector<8x1xf32> to vector<8x128xf32>
      %140 = arith.subf %132, %139 : vector<8x128xf32>
      %141 = arith.mulf %140, %140 : vector<8x128xf32>
      %cst_71 = arith.constant dense<0.000000e+00> : vector<8xf32>
      %142 = vector.multi_reduction <add>, %141, %cst_71 [1] : vector<8x128xf32> to vector<8xf32>
      %143 = vector.shape_cast %142 : vector<8xf32> to vector<8x1xf32>
      %cst_72 = arith.constant 1.280000e+02 : f32
      %144 = vector.broadcast %cst_72 : f32 to vector<8x1xf32>
      %145 = arith.divf %143, %144 : vector<8x1xf32>
      %146 = vector.broadcast %138 : vector<8x1xf32> to vector<8x128xf32>
      %147 = arith.subf %132, %146 : vector<8x128xf32>
      %cst_73 = arith.constant 9.99999974E-6 : f32
      %148 = vector.broadcast %cst_73 : f32 to vector<8x1xf32>
      %149 = arith.addf %145, %148 : vector<8x1xf32>
      %150 = math.rsqrt %149 : vector<8x1xf32>
      %151 = vector.broadcast %150 : vector<8x1xf32> to vector<8x128xf32>
      %152 = arith.mulf %147, %151 : vector<8x128xf32>
      %153 = vector.broadcast %133 : vector<1x128xf32> to vector<8x128xf32>
      %154 = arith.mulf %152, %153 : vector<8x128xf32>
      %155 = vector.broadcast %134 : vector<1x128xf32> to vector<8x128xf32>
      %156 = arith.addf %154, %155 : vector<8x128xf32>
      %157 = arith.truncf %156 : vector<8x128xf32> to vector<8x128xbf16>
      %c0_74 = arith.constant 0 : index
      %c0_75 = arith.constant 0 : index
      %158 = vector.load %arg19[%c0_74, %c0_75] : memref<128x128xbf16, #tpu.memory_space<vmem>>, vector<128x128xbf16>
      %cst_76 = arith.constant dense<0.000000e+00> : vector<8x128xf32>
      %159 = tpu.matmul %157, %158, %cst_76 {dimension_numbers = #tpu.dot_dimension_numbers<[1], [0], [0], [1], [0, 0, 1, 1], [], []>} : vector<8x128xbf16>, vector<128x128xbf16>, vector<8x128xf32> -> vector<8x128xf32>
      %c0_77 = arith.constant 0 : index
      %c0_78 = arith.constant 0 : index
      %160 = vector.load %arg20[%c0_77, %c0_78] : memref<1x128xf32, #tpu.memory_space<vmem>>, vector<1x128xf32>
      %161 = vector.broadcast %160 : vector<1x128xf32> to vector<8x128xf32>
      %162 = arith.addf %159, %161 : vector<8x128xf32>
      %c0_79 = arith.constant 0 : index
      %c0_80 = arith.constant 0 : index
      %163 = vector.load %arg21[%c0_79, %c0_80] : memref<8x128xf32, #tpu.memory_space<vmem>>, vector<8x128xf32>
      tpu.vector_store %arg21[%c0_79, %c0_80], %162 {strides = array<i32>} : memref<8x128xf32, #tpu.memory_space<vmem>>, vector<8x128xf32>,
    } else {
    }
    return
  }
  func.func @transform_0(%arg0: i32) -> (i32, i32) {
    %c0_i32 = arith.constant 0 : i32
    %c0_i32_0 = arith.constant 0 : i32
    %c0_i32_1 = arith.constant 0 : i32
    return %c0_i32, %c0_i32_0 : i32, i32
  }
  func.func @transform_1(%arg0: i32) -> (i32, i32) {
    %c0_i32 = arith.constant 0 : i32
    %c0_i32_0 = arith.constant 0 : i32
    %c0_i32_1 = arith.constant 0 : i32
    return %c0_i32, %c0_i32_0 : i32, i32
  }
  func.func @transform_2(%arg0: i32) -> (i32, i32) {
    %c0_i32 = arith.constant 0 : i32
    %c0_i32_0 = arith.constant 0 : i32
    %c0_i32_1 = arith.constant 0 : i32
    return %c0_i32, %c0_i32_0 : i32, i32
  }
  func.func @transform_3(%arg0: i32) -> (i32, i32) {
    %c0_i32 = arith.constant 0 : i32
    %c0_i32_0 = arith.constant 0 : i32
    %c0_i32_1 = arith.constant 0 : i32
    return %c0_i32, %c0_i32_0 : i32, i32
  }
  func.func @transform_4(%arg0: i32) -> (i32, i32, i32) {
    %c0_i32 = arith.constant 0 : i32
    %c0_i32_0 = arith.constant 0 : i32
    %c0_i32_1 = arith.constant 0 : i32
    return %arg0, %c0_i32, %c0_i32_0 : i32, i32, i32
  }
  func.func @transform_5(%arg0: i32) -> (i32, i32, i32) {
    %c0_i32 = arith.constant 0 : i32
    %c0_i32_0 = arith.constant 0 : i32
    %c0_i32_1 = arith.constant 0 : i32
    return %arg0, %c0_i32, %c0_i32_0 : i32, i32, i32
  }
  func.func @transform_6(%arg0: i32) -> (i32, i32, i32) {
    %c0_i32 = arith.constant 0 : i32
    %c0_i32_0 = arith.constant 0 : i32
    %c0_i32_1 = arith.constant 0 : i32
    return %arg0, %c0_i32, %c0_i32_0 : i32, i32, i32
  }
  func.func @transform_7(%arg0: i32) -> (i32, i32, i32) {
    %c0_i32 = arith.constant 0 : i32
    %c0_i32_0 = arith.constant 0 : i32
    %c0_i32_1 = arith.constant 0 : i32
    return %arg0, %c0_i32, %c0_i32_0 : i32, i32, i32
  }
  func.func @transform_8(%arg0: i32) -> (i32, i32, i32, i32) {
    %c0_i32 = arith.constant 0 : i32
    %c0_i32_0 = arith.constant 0 : i32
    %c0_i32_1 = arith.constant 0 : i32
    %c0_i32_2 = arith.constant 0 : i32
    return %arg0, %c0_i32, %c0_i32_0, %c0_i32_1 : i32, i32, i32, i32
  }
  func.func @transform_9(%arg0: i32) -> (i32, i32, i32) {
    %c0_i32 = arith.constant 0 : i32
    %c0_i32_0 = arith.constant 0 : i32
    %c0_i32_1 = arith.constant 0 : i32
    return %arg0, %c0_i32, %c0_i32_0 : i32, i32, i32
  }
  func.func @transform_10(%arg0: i32) -> (i32, i32, i32) {
    %c0_i32 = arith.constant 0 : i32
    %c0_i32_0 = arith.constant 0 : i32
    %c0_i32_1 = arith.constant 0 : i32
    return %arg0, %c0_i32, %c0_i32_0 : i32, i32, i32
  }
  func.func @transform_11(%arg0: i32) -> (i32, i32, i32) {
    %c0_i32 = arith.constant 0 : i32
    %c0_i32_0 = arith.constant 0 : i32
    %c0_i32_1 = arith.constant 0 : i32
    return %arg0, %c0_i32, %c0_i32_0 : i32, i32, i32
  }
  func.func @transform_12(%arg0: i32) -> (i32, i32, i32) {
    %c0_i32 = arith.constant 0 : i32
    %c0_i32_0 = arith.constant 0 : i32
    %c0_i32_1 = arith.constant 0 : i32
    return %arg0, %c0_i32, %c0_i32_0 : i32, i32, i32
  }
  func.func @transform_13(%arg0: i32) -> (i32, i32, i32) {
    %c0_i32 = arith.constant 0 : i32
    %c0_i32_0 = arith.constant 0 : i32
    %c0_i32_1 = arith.constant 0 : i32
    return %arg0, %c0_i32, %c0_i32_0 : i32, i32, i32
  }
  func.func @transform_14(%arg0: i32) -> (i32, i32, i32) {
    %c0_i32 = arith.constant 0 : i32
    %c0_i32_0 = arith.constant 0 : i32
    %c0_i32_1 = arith.constant 0 : i32
    return %arg0, %c0_i32, %c0_i32_0 : i32, i32, i32
  }
  func.func @transform_15(%arg0: i32) -> (i32, i32, i32) {
    %c0_i32 = arith.constant 0 : i32
    %c0_i32_0 = arith.constant 0 : i32
    %c0_i32_1 = arith.constant 0 : i32
    return %arg0, %c0_i32, %c0_i32_0 : i32, i32, i32
  }
  func.func @transform_16(%arg0: i32) -> (i32, i32) {
    %c0_i32 = arith.constant 0 : i32
    %c0_i32_0 = arith.constant 0 : i32
    %c0_i32_1 = arith.constant 0 : i32
    return %c0_i32, %c0_i32_0 : i32, i32
  }
  func.func @transform_17(%arg0: i32) -> (i32, i32) {
    %c0_i32 = arith.constant 0 : i32
    %c0_i32_0 = arith.constant 0 : i32
    %c0_i32_1 = arith.constant 0 : i32
    return %c0_i32, %c0_i32_0 : i32, i32
  }
  func.func @transform_18(%arg0: i32) -> (i32, i32) {
    %c0_i32 = arith.constant 0 : i32
    %c0_i32_0 = arith.constant 0 : i32
    %c0_i32_1 = arith.constant 0 : i32
    return %c0_i32, %c0_i32_0 : i32, i32
  }
  func.func @transform_19(%arg0: i32) -> (i32, i32) {
    %c0_i32 = arith.constant 0 : i32
    %c0_i32_0 = arith.constant 0 : i32
    %c0_i32_1 = arith.constant 0 : i32
    return %c0_i32, %c0_i32_0 : i32, i32
  }
  func.func @transform_20(%arg0: i32) -> (i32, i32) {
    %c0_i32 = arith.constant 0 : i32
    %c0_i32_0 = arith.constant 0 : i32
    %c0_i32_1 = arith.constant 0 : i32
    return %c0_i32, %c0_i32_0 : i32, i32
  }
}

</mosaic_0001>

<llo_original>
// kernel: tpu_custom_call.1
$region0: #{tpu_custom_call.1}
  #allocation0 [shape = 'u32[]', space=smem, size = 0x4, offset = 0x4, fixed_abs, tag = 'smem constant byte address 0x4 - core index']
  #allocation1 [shape = 'u32[72,128]{1,0:T(1,128)}', space=vmem, size = 0x9000, scoped, tag = 'internal scratch']
  #allocation2 [shape = 'f32[48,128]{1,0:T(8,128)}', space=vmem, size = 0x6000, scoped, tag = 'scratch operand']
  %s0 = inlined_call_operand.hbm [shape: bf16[48,128], index: 0, kind: input, shape index: {}]
  %s1 = inlined_call_operand.hbm [shape: f32[48,128], index: 1, kind: input, shape index: {}]
  %s2 = inlined_call_operand.hbm [shape: bf16[128,128], index: 2, kind: input, shape index: {}]
  %s3 = inlined_call_operand.hbm [shape: f32[48,48], index: 3, kind: input, shape index: {}]
  %s4 = inlined_call_operand.vmem [shape: f32[3,1,128], index: 4, kind: input, shape index: {}]
  %s5 = inlined_call_operand.hbm [shape: f32[3,1,128], index: 5, kind: input, shape index: {}]
  %s6 = inlined_call_operand.hbm [shape: bf16[3,128,384], index: 6, kind: input, shape index: {}]
  %s7 = inlined_call_operand.hbm [shape: f32[3,1,384], index: 7, kind: input, shape index: {}]
  %s8 = inlined_call_operand.hbm [shape: bf16[3,4,32,128], index: 8, kind: input, shape index: {}]
  %s9 = inlined_call_operand.hbm [shape: f32[3,1,128], index: 9, kind: input, shape index: {}]
  %s10 = inlined_call_operand.hbm [shape: f32[3,1,128], index: 10, kind: input, shape index: {}]
  %s11 = inlined_call_operand.hbm [shape: f32[3,1,128], index: 11, kind: input, shape index: {}]
  %s12 = inlined_call_operand.hbm [shape: bf16[3,128,256], index: 12, kind: input, shape index: {}]
  %s13 = inlined_call_operand.vmem [shape: f32[3,1,256], index: 13, kind: input, shape index: {}]
  %s14 = inlined_call_operand.hbm [shape: bf16[3,256,128], index: 14, kind: input, shape index: {}]
  %s15 = inlined_call_operand.vmem [shape: f32[3,1,128], index: 15, kind: input, shape index: {}]
  %s16 = inlined_call_operand.vmem [shape: f32[1,128], index: 16, kind: input, shape index: {}]
  %s17 = inlined_call_operand.vmem [shape: f32[1,128], index: 17, kind: input, shape index: {}]
  %s18 = inlined_call_operand.hbm [shape: bf16[128,128], index: 18, kind: input, shape index: {}]
  %s19 = inlined_call_operand.vmem [shape: f32[1,128], index: 19, kind: input, shape index: {}]
  %s20 = inlined_call_operand.hbm [shape: f32[8,128], index: 20, kind: output, shape index: {}]
  %s21 = sld [smem:[#allocation0]]
  $region177: #{tpu_custom_call.1} parent=0
    _
  %s23 = ssub.s32 1, %s21
  %s24 = scalar_select 0, %s23, %s21
  $region1: #{tpu_custom_call.1} parent=0
    #allocation3 [shape = 'u8[12288]{0}', space=vmem, size = 0x3000, scoped, tag = 'input window, operand 0, single buffered']
    #allocation4 [shape = 's32[2]{0}', space=sflag, size = 0x8, scoped, tag = 'scoped memory for tpu_custom_call.1']
    #allocation5 [shape = 's32[2]{0}', space=sflag, size = 0x8, scoped, tag = 'scoped memory for tpu_custom_call.1']
    #allocation6 [shape = 'u8[24576]{0}', space=vmem, size = 0x6000, scoped, tag = 'input window, operand 1, single buffered']
    #allocation7 [shape = 's32[1]{0}', space=sflag, size = 0x4, scoped, tag = 'scoped memory for tpu_custom_call.1']
    #allocation8 [shape = 'u8[32768]{0}', space=vmem, size = 0x8000, scoped, tag = 'input window, operand 2, single buffered']
    #allocation9 [shape = 'u8[24576]{0}', space=vmem, size = 0x6000, scoped, tag = 'input window, operand 3, single buffered']
    #allocation10 [shape = 's32[1]{0}', space=sflag, size = 0x4, scoped, tag = 'scoped memory for tpu_custom_call.1']
    #allocation11 [shape = 'u8[1024]{0}', space=vmem, size = 0x400, scoped, tag = 'input window, operand 5']
    #allocation12 [shape = 'u8[196608]{0}', space=vmem, size = 0x30000, scoped, tag = 'input window, operand 6']
    #allocation13 [shape = 'u8[3072]{0}', space=vmem, size = 0xc00, scoped, tag = 'input window, operand 7']
    #allocation14 [shape = 'u8[65536]{0}', space=vmem, size = 0x10000, scoped, tag = 'input window, operand 8']
    #allocation15 [shape = 'u8[1024]{0}', space=vmem, size = 0x400, scoped, tag = 'input window, operand 9']
    #allocation16 [shape = 'u8[1024]{0}', space=vmem, size = 0x400, scoped, tag = 'input window, operand 10']
    #allocation17 [shape = 'u8[1024]{0}', space=vmem, size = 0x400, scoped, tag = 'input window, operand 11']
    #allocation18 [shape = 'u8[131072]{0}', space=vmem, size = 0x20000, scoped, tag = 'input window, operand 12']
    #allocation19 [shape = 'u8[131072]{0}', space=vmem, size = 0x20000, scoped, tag = 'input window, operand 14']
    #allocation20 [shape = 'u8[32768]{0}', space=vmem, size = 0x8000, scoped, tag = 'input window, operand 18, single buffered']
    #allocation21 [shape = 'u8[4096]{0}', space=vmem, size = 0x1000, scoped, tag = 'output window, operand 0, single buffered']
    %25 = vsyncpa [#allocation4], 0
    %26 = vsyncpa [#allocation7], 0
    %27 = vsyncpa [#allocation10], 0
    %28 = vsyncpa [#allocation5], 0
    loop: start=0, step=1, limit=5
    $region2: #{tpu_custom_call.1} parent=1 // loop_pre_header
      _
    $region3: #{tpu_custom_call.1} parent=1 // loop_header
      %s30 = sphi 0, %s34
      %p31 = scmp.ge.s32.totalorder %s30, 5
      %s38 = sphi 0, %s38
      %s40 = sphi 0, %s38
      %s41 = sphi 0, %s40
      %s55 = sphi 0, %s41
      %s59 = sphi 0, %s59
      %s61 = sphi 0, %s59
      %s62 = sphi 0, %s61
      %s76 = sphi 0, %s62
      %s80 = sphi 0, %s80
      %s82 = sphi 0, %s80
      %s83 = sphi 0, %s82
      %s97 = sphi 0, %s83
      %s101 = sphi 0, %s101
      %s103 = sphi 0, %s101
      %s104 = sphi 0, %s103
      %s118 = sphi 0, %s104
      %s124 = sphi 0, %s126
      %s127 = sphi 0, %s124
      %s128 = sphi 0, %s127
      %s144 = sphi 0, %s128
      %s150 = sphi 0, %s152
      %s153 = sphi 0, %s150
      %s154 = sphi 0, %s153
      %s170 = sphi 0, %s154
      %s176 = sphi 0, %s178
      %s179 = sphi 0, %s176
      %s180 = sphi 0, %s179
      %s196 = sphi 0, %s180
      %s202 = sphi 0, %s204
      %s205 = sphi 0, %s202
      %s206 = sphi 0, %s205
      %s222 = sphi 0, %s206
      %s228 = sphi 0, %s230
      %s231 = sphi 0, %s228
      %s232 = sphi 0, %s231
      %s248 = sphi 0, %s232
      %s254 = sphi 0, %s256
      %s257 = sphi 0, %s254
      %s258 = sphi 0, %s257
      %s274 = sphi 0, %s258
      %s280 = sphi 0, %s282
      %s283 = sphi 0, %s280
      %s284 = sphi 0, %s283
      %s300 = sphi 0, %s284
      %s306 = sphi 0, %s308
      %s309 = sphi 0, %s306
      %s310 = sphi 0, %s309
      %s326 = sphi 0, %s310
      %s332 = sphi 0, %s334
      %s335 = sphi 0, %s332
      %s336 = sphi 0, %s335
      %s352 = sphi 0, %s336
      %s358 = sphi 0, %s360
      %s361 = sphi 0, %s358
      %s362 = sphi 0, %s361
      %s378 = sphi 0, %s362
      %s384 = sphi 0, %s386
      %s387 = sphi 0, %s384
      %s388 = sphi 0, %s387
      %s404 = sphi 0, %s388
      %s410 = sphi 0, %s412
      %s413 = sphi 0, %s410
      %s414 = sphi 0, %s413
      %s430 = sphi 0, %s414
      %s434 = sphi 0, %s434
      %s436 = sphi 0, %s434
      %s437 = sphi 0, %s436
      %s451 = sphi 0, %s437
      %s455 = sphi 0, %s455
      %s457 = sphi 0, %s455
      %s458 = sphi 0, %s457
      %s472 = sphi 0, %s458
      %s476 = sphi 0, %s476
      %s478 = sphi 0, %s476
      %s479 = sphi 0, %s478
      %s493 = sphi 0, %s479
      %s497 = sphi 0, %s497
      %s499 = sphi 0, %s497
      %s500 = sphi 0, %s499
      %s514 = sphi 0, %s500
      %s518 = sphi 0, %s518
      %s520 = sphi 0, %s518
      %s521 = sphi 0, %s520
      %s535 = sphi 0, %s521
    $region4: #{tpu_custom_call.1} parent=1 // loop_header_branch
      %33 = sbr.rel (%p31) target = $region8
    $region5: #{tpu_custom_call.1} parent=1 // loop_body
      %s35 = ssub.s32 %s30, 1
      %s36 = ssub.s32 %s30, 2
      %s37 = sadd.s32 %s30, 1
      %s39 = sadd.s32 %s38, 1
      %p42 = scmp.eq.s32.totalorder %s30, 2
      %p43 = scmp.ne.s32.totalorder %s38, %s40
      %p44 = scmp.eq.s32.totalorder %s30, 0
      %p45 = por %p43, %p44
      %p46 = scmp.ne.s32.totalorder %s38, %s40
      %p47 = scmp.eq.s32.totalorder %s35, 2
      %p48 = por %p46, %p47
      %p49 = scmp.ne.s32.totalorder %s40, %s41
      %p50 = scmp.eq.s32.totalorder %s35, 0
      %p51 = por %p49, %p50
      %p52 = scmp.ne.s32.totalorder %s40, %s41
      %p53 = scmp.eq.s32.totalorder %s36, 2
      %p54 = por %p52, %p53
      %p56 = scmp.ne.s32.totalorder %s41, %s55
      %p57 = scmp.eq.s32.totalorder %s36, 0
      %p58 = por %p56, %p57
      %s60 = sadd.s32 %s59, 1
      %p63 = scmp.eq.s32.totalorder %s30, 2
      %p64 = scmp.ne.s32.totalorder %s59, %s61
      %p65 = scmp.eq.s32.totalorder %s30, 0
      %p66 = por %p64, %p65
      %p67 = scmp.ne.s32.totalorder %s59, %s61
      %p68 = scmp.eq.s32.totalorder %s35, 2
      %p69 = por %p67, %p68
      %p70 = scmp.ne.s32.totalorder %s61, %s62
      %p71 = scmp.eq.s32.totalorder %s35, 0
      %p72 = por %p70, %p71
      %p73 = scmp.ne.s32.totalorder %s61, %s62
      %p74 = scmp.eq.s32.totalorder %s36, 2
      %p75 = por %p73, %p74
      %p77 = scmp.ne.s32.totalorder %s62, %s76
      %p78 = scmp.eq.s32.totalorder %s36, 0
      %p79 = por %p77, %p78
      %s81 = sadd.s32 %s80, 1
      %p84 = scmp.eq.s32.totalorder %s30, 2
      %p85 = scmp.ne.s32.totalorder %s80, %s82
      %p86 = scmp.eq.s32.totalorder %s30, 0
      %p87 = por %p85, %p86
      %p88 = scmp.ne.s32.totalorder %s80, %s82
      %p89 = scmp.eq.s32.totalorder %s35, 2
      %p90 = por %p88, %p89
      %p91 = scmp.ne.s32.totalorder %s82, %s83
      %p92 = scmp.eq.s32.totalorder %s35, 0
      %p93 = por %p91, %p92
      %p94 = scmp.ne.s32.totalorder %s82, %s83
      %p95 = scmp.eq.s32.totalorder %s36, 2
      %p96 = por %p94, %p95
      %p98 = scmp.ne.s32.totalorder %s83, %s97
      %p99 = scmp.eq.s32.totalorder %s36, 0
      %p100 = por %p98, %p99
      %s102 = sadd.s32 %s101, 1
      %p105 = scmp.eq.s32.totalorder %s30, 2
      %p106 = scmp.ne.s32.totalorder %s101, %s103
      %p107 = scmp.eq.s32.totalorder %s30, 0
      %p108 = por %p106, %p107
      %p109 = scmp.ne.s32.totalorder %s101, %s103
      %p110 = scmp.eq.s32.totalorder %s35, 2
      %p111 = por %p109, %p110
      %p112 = scmp.ne.s32.totalorder %s103, %s104
      %p113 = scmp.eq.s32.totalorder %s35, 0
      %p114 = por %p112, %p113
      %p115 = scmp.ne.s32.totalorder %s103, %s104
      %p116 = scmp.eq.s32.totalorder %s36, 2
      %p117 = por %p115, %p116
      %p119 = scmp.ne.s32.totalorder %s104, %s118
      %p120 = scmp.eq.s32.totalorder %s36, 0
      %p121 = por %p119, %p120
      %s122 = ssub.s32 %s30, %s37
      %p123 = scmp.eq.s32.totalorder %s122, 0
      %s125 = sadd.s32 %s124, 1
      %s126 = scalar_select %p123, %s124, %s125
      %p129 = pneg %p123
      %p130 = scmp.eq.s32.totalorder %s30, 2
      %p131 = por %p129, %p130
      %p132 = scmp.ne.s32.totalorder %s124, %s127
      %p133 = scmp.eq.s32.totalorder %s30, 0
      %p134 = por %p132, %p133
      %p135 = scmp.ne.s32.totalorder %s124, %s127
      %p136 = scmp.eq.s32.totalorder %s35, 2
      %p137 = por %p135, %p136
      %p138 = scmp.ne.s32.totalorder %s127, %s128
      %p139 = scmp.eq.s32.totalorder %s35, 0
      %p140 = por %p138, %p139
      %p141 = scmp.ne.s32.totalorder %s127, %s128
      %p142 = scmp.eq.s32.totalorder %s36, 2
      %p143 = por %p141, %p142
      %p145 = scmp.ne.s32.totalorder %s128, %s144
      %p146 = scmp.eq.s32.totalorder %s36, 0
      %p147 = por %p145, %p146
      %s148 = ssub.s32 %s30, %s37
      %p149 = scmp.eq.s32.totalorder %s148, 0
      %s151 = sadd.s32 %s150, 1
      %s152 = scalar_select %p149, %s150, %s151
      %p155 = pneg %p149
      %p156 = scmp.eq.s32.totalorder %s30, 2
      %p157 = por %p155, %p156
      %p158 = scmp.ne.s32.totalorder %s150, %s153
      %p159 = scmp.eq.s32.totalorder %s30, 0
      %p160 = por %p158, %p159
      %p161 = scmp.ne.s32.totalorder %s150, %s153
      %p162 = scmp.eq.s32.totalorder %s35, 2
      %p163 = por %p161, %p162
      %p164 = scmp.ne.s32.totalorder %s153, %s154
      %p165 = scmp.eq.s32.totalorder %s35, 0
      %p166 = por %p164, %p165
      %p167 = scmp.ne.s32.totalorder %s153, %s154
      %p168 = scmp.eq.s32.totalorder %s36, 2
      %p169 = por %p167, %p168
      %p171 = scmp.ne.s32.totalorder %s154, %s170
      %p172 = scmp.eq.s32.totalorder %s36, 0
      %p173 = por %p171, %p172
      %s174 = ssub.s32 %s30, %s37
      %p175 = scmp.eq.s32.totalorder %s174, 0
      %s177 = sadd.s32 %s176, 1
      %s178 = scalar_select %p175, %s176, %s177
      %p181 = pneg %p175
      %p182 = scmp.eq.s32.totalorder %s30, 2
      %p183 = por %p181, %p182
      %p184 = scmp.ne.s32.totalorder %s176, %s179
      %p185 = scmp.eq.s32.totalorder %s30, 0
      %p186 = por %p184, %p185
      %p187 = scmp.ne.s32.totalorder %s176, %s179
      %p188 = scmp.eq.s32.totalorder %s35, 2
      %p189 = por %p187, %p188
      %p190 = scmp.ne.s32.totalorder %s179, %s180
      %p191 = scmp.eq.s32.totalorder %s35, 0
      %p192 = por %p190, %p191
      %p193 = scmp.ne.s32.totalorder %s179, %s180
      %p194 = scmp.eq.s32.totalorder %s36, 2
      %p195 = por %p193, %p194
      %p197 = scmp.ne.s32.totalorder %s180, %s196
      %p198 = scmp.eq.s32.totalorder %s36, 0
      %p199 = por %p197, %p198
      %s200 = ssub.s32 %s30, %s37
      %p201 = scmp.eq.s32.totalorder %s200, 0
      %s203 = sadd.s32 %s202, 1
      %s204 = scalar_select %p201, %s202, %s203
      %p207 = pneg %p201
      %p208 = scmp.eq.s32.totalorder %s30, 2
      %p209 = por %p207, %p208
      %p210 = scmp.ne.s32.totalorder %s202, %s205
      %p211 = scmp.eq.s32.totalorder %s30, 0
      %p212 = por %p210, %p211
      %p213 = scmp.ne.s32.totalorder %s202, %s205
      %p214 = scmp.eq.s32.totalorder %s35, 2
      %p215 = por %p213, %p214
      %p216 = scmp.ne.s32.totalorder %s205, %s206
      %p217 = scmp.eq.s32.totalorder %s35, 0
      %p218 = por %p216, %p217
      %p219 = scmp.ne.s32.totalorder %s205, %s206
      %p220 = scmp.eq.s32.totalorder %s36, 2
      %p221 = por %p219, %p220
      %p223 = scmp.ne.s32.totalorder %s206, %s222
      %p224 = scmp.eq.s32.totalorder %s36, 0
      %p225 = por %p223, %p224
      %s226 = ssub.s32 %s30, %s37
      %p227 = scmp.eq.s32.totalorder %s226, 0
      %s229 = sadd.s32 %s228, 1
      %s230 = scalar_select %p227, %s228, %s229
      %p233 = pneg %p227
      %p234 = scmp.eq.s32.totalorder %s30, 2
      %p235 = por %p233, %p234
      %p236 = scmp.ne.s32.totalorder %s228, %s231
      %p237 = scmp.eq.s32.totalorder %s30, 0
      %p238 = por %p236, %p237
      %p239 = scmp.ne.s32.totalorder %s228, %s231
      %p240 = scmp.eq.s32.totalorder %s35, 2
      %p241 = por %p239, %p240
      %p242 = scmp.ne.s32.totalorder %s231, %s232
      %p243 = scmp.eq.s32.totalorder %s35, 0
      %p244 = por %p242, %p243
      %p245 = scmp.ne.s32.totalorder %s231, %s232
      %p246 = scmp.eq.s32.totalorder %s36, 2
      %p247 = por %p245, %p246
      %p249 = scmp.ne.s32.totalorder %s232, %s248
      %p250 = scmp.eq.s32.totalorder %s36, 0
      %p251 = por %p249, %p250
      %s252 = ssub.s32 %s30, %s37
      %p253 = scmp.eq.s32.totalorder %s252, 0
      %s255 = sadd.s32 %s254, 1
      %s256 = scalar_select %p253, %s254, %s255
      %p259 = pneg %p253
      %p260 = scmp.eq.s32.totalorder %s30, 2
      %p261 = por %p259, %p260
      %p262 = scmp.ne.s32.totalorder %s254, %s257
      %p263 = scmp.eq.s32.totalorder %s30, 0
      %p264 = por %p262, %p263
      %p265 = scmp.ne.s32.totalorder %s254, %s257
      %p266 = scmp.eq.s32.totalorder %s35, 2
      %p267 = por %p265, %p266
      %p268 = scmp.ne.s32.totalorder %s257, %s258
      %p269 = scmp.eq.s32.totalorder %s35, 0
      %p270 = por %p268, %p269
      %p271 = scmp.ne.s32.totalorder %s257, %s258
      %p272 = scmp.eq.s32.totalorder %s36, 2
      %p273 = por %p271, %p272
      %p275 = scmp.ne.s32.totalorder %s258, %s274
      %p276 = scmp.eq.s32.totalorder %s36, 0
      %p277 = por %p275, %p276
      %s278 = ssub.s32 %s30, %s37
      %p279 = scmp.eq.s32.totalorder %s278, 0
      %s281 = sadd.s32 %s280, 1
      %s282 = scalar_select %p279, %s280, %s281
      %p285 = pneg %p279
      %p286 = scmp.eq.s32.totalorder %s30, 2
      %p287 = por %p285, %p286
      %p288 = scmp.ne.s32.totalorder %s280, %s283
      %p289 = scmp.eq.s32.totalorder %s30, 0
      %p290 = por %p288, %p289
      %p291 = scmp.ne.s32.totalorder %s280, %s283
      %p292 = scmp.eq.s32.totalorder %s35, 2
      %p293 = por %p291, %p292
      %p294 = scmp.ne.s32.totalorder %s283, %s284
      %p295 = scmp.eq.s32.totalorder %s35, 0
      %p296 = por %p294, %p295
      %p297 = scmp.ne.s32.totalorder %s283, %s284
      %p298 = scmp.eq.s32.totalorder %s36, 2
      %p299 = por %p297, %p298
      %p301 = scmp.ne.s32.totalorder %s284, %s300
      %p302 = scmp.eq.s32.totalorder %s36, 0
      %p303 = por %p301, %p302
      %s304 = ssub.s32 %s30, %s37
      %p305 = scmp.eq.s32.totalorder %s304, 0
      %s307 = sadd.s32 %s306, 1
      %s308 = scalar_select %p305, %s306, %s307
      %p311 = pneg %p305
      %p312 = scmp.eq.s32.totalorder %s30, 2
      %p313 = por %p311, %p312
      %p314 = scmp.ne.s32.totalorder %s306, %s309
      %p315 = scmp.eq.s32.totalorder %s30, 0
      %p316 = por %p314, %p315
      %p317 = scmp.ne.s32.totalorder %s306, %s309
      %p318 = scmp.eq.s32.totalorder %s35, 2
      %p319 = por %p317, %p318
      %p320 = scmp.ne.s32.totalorder %s309, %s310
      %p321 = scmp.eq.s32.totalorder %s35, 0
      %p322 = por %p320, %p321
      %p323 = scmp.ne.s32.totalorder %s309, %s310
      %p324 = scmp.eq.s32.totalorder %s36, 2
      %p325 = por %p323, %p324
      %p327 = scmp.ne.s32.totalorder %s310, %s326
      %p328 = scmp.eq.s32.totalorder %s36, 0
      %p329 = por %p327, %p328
      %s330 = ssub.s32 %s30, %s37
      %p331 = scmp.eq.s32.totalorder %s330, 0
      %s333 = sadd.s32 %s332, 1
      %s334 = scalar_select %p331, %s332, %s333
      %p337 = pneg %p331
      %p338 = scmp.eq.s32.totalorder %s30, 2
      %p339 = por %p337, %p338
      %p340 = scmp.ne.s32.totalorder %s332, %s335
      %p341 = scmp.eq.s32.totalorder %s30, 0
      %p342 = por %p340, %p341
      %p343 = scmp.ne.s32.totalorder %s332, %s335
      %p344 = scmp.eq.s32.totalorder %s35, 2
      %p345 = por %p343, %p344
      %p346 = scmp.ne.s32.totalorder %s335, %s336
      %p347 = scmp.eq.s32.totalorder %s35, 0
      %p348 = por %p346, %p347
      %p349 = scmp.ne.s32.totalorder %s335, %s336
      %p350 = scmp.eq.s32.totalorder %s36, 2
      %p351 = por %p349, %p350
      %p353 = scmp.ne.s32.totalorder %s336, %s352
      %p354 = scmp.eq.s32.totalorder %s36, 0
      %p355 = por %p353, %p354
      %s356 = ssub.s32 %s30, %s37
      %p357 = scmp.eq.s32.totalorder %s356, 0
      %s359 = sadd.s32 %s358, 1
      %s360 = scalar_select %p357, %s358, %s359
      %p363 = pneg %p357
      %p364 = scmp.eq.s32.totalorder %s30, 2
      %p365 = por %p363, %p364
      %p366 = scmp.ne.s32.totalorder %s358, %s361
      %p367 = scmp.eq.s32.totalorder %s30, 0
      %p368 = por %p366, %p367
      %p369 = scmp.ne.s32.totalorder %s358, %s361
      %p370 = scmp.eq.s32.totalorder %s35, 2
      %p371 = por %p369, %p370
      %p372 = scmp.ne.s32.totalorder %s361, %s362
      %p373 = scmp.eq.s32.totalorder %s35, 0
      %p374 = por %p372, %p373
      %p375 = scmp.ne.s32.totalorder %s361, %s362
      %p376 = scmp.eq.s32.totalorder %s36, 2
      %p377 = por %p375, %p376
      %p379 = scmp.ne.s32.totalorder %s362, %s378
      %p380 = scmp.eq.s32.totalorder %s36, 0
      %p381 = por %p379, %p380
      %s382 = ssub.s32 %s30, %s37
      %p383 = scmp.eq.s32.totalorder %s382, 0
      %s385 = sadd.s32 %s384, 1
      %s386 = scalar_select %p383, %s384, %s385
      %p389 = pneg %p383
      %p390 = scmp.eq.s32.totalorder %s30, 2
      %p391 = por %p389, %p390
      %p392 = scmp.ne.s32.totalorder %s384, %s387
      %p393 = scmp.eq.s32.totalorder %s30, 0
      %p394 = por %p392, %p393
      %p395 = scmp.ne.s32.totalorder %s384, %s387
      %p396 = scmp.eq.s32.totalorder %s35, 2
      %p397 = por %p395, %p396
      %p398 = scmp.ne.s32.totalorder %s387, %s388
      %p399 = scmp.eq.s32.totalorder %s35, 0
      %p400 = por %p398, %p399
      %p401 = scmp.ne.s32.totalorder %s387, %s388
      %p402 = scmp.eq.s32.totalorder %s36, 2
      %p403 = por %p401, %p402
      %p405 = scmp.ne.s32.totalorder %s388, %s404
      %p406 = scmp.eq.s32.totalorder %s36, 0
      %p407 = por %p405, %p406
      %s408 = ssub.s32 %s30, %s37
      %p409 = scmp.eq.s32.totalorder %s408, 0
      %s411 = sadd.s32 %s410, 1
      %s412 = scalar_select %p409, %s410, %s411
      %p415 = pneg %p409
      %p416 = scmp.eq.s32.totalorder %s30, 2
      %p417 = por %p415, %p416
      %p418 = scmp.ne.s32.totalorder %s410, %s413
      %p419 = scmp.eq.s32.totalorder %s30, 0
      %p420 = por %p418, %p419
      %p421 = scmp.ne.s32.totalorder %s410, %s413
      %p422 = scmp.eq.s32.totalorder %s35, 2
      %p423 = por %p421, %p422
      %p424 = scmp.ne.s32.totalorder %s413, %s414
      %p425 = scmp.eq.s32.totalorder %s35, 0
      %p426 = por %p424, %p425
      %p427 = scmp.ne.s32.totalorder %s413, %s414
      %p428 = scmp.eq.s32.totalorder %s36, 2
      %p429 = por %p427, %p428
      %p431 = scmp.ne.s32.totalorder %s414, %s430
      %p432 = scmp.eq.s32.totalorder %s36, 0
      %p433 = por %p431, %p432
      %s435 = sadd.s32 %s434, 1
      %p438 = scmp.eq.s32.totalorder %s30, 2
      %p439 = scmp.ne.s32.totalorder %s434, %s436
      %p440 = scmp.eq.s32.totalorder %s30, 0
      %p441 = por %p439, %p440
      %p442 = scmp.ne.s32.totalorder %s434, %s436
      %p443 = scmp.eq.s32.totalorder %s35, 2
      %p444 = por %p442, %p443
      %p445 = scmp.ne.s32.totalorder %s436, %s437
      %p446 = scmp.eq.s32.totalorder %s35, 0
      %p447 = por %p445, %p446
      %p448 = scmp.ne.s32.totalorder %s436, %s437
      %p449 = scmp.eq.s32.totalorder %s36, 2
      %p450 = por %p448, %p449
      %p452 = scmp.ne.s32.totalorder %s437, %s451
      %p453 = scmp.eq.s32.totalorder %s36, 0
      %p454 = por %p452, %p453
      %s456 = sadd.s32 %s455, 1
      %p459 = scmp.eq.s32.totalorder %s30, 2
      %p460 = scmp.ne.s32.totalorder %s455, %s457
      %p461 = scmp.eq.s32.totalorder %s30, 0
      %p462 = por %p460, %p461
      %p463 = scmp.ne.s32.totalorder %s455, %s457
      %p464 = scmp.eq.s32.totalorder %s35, 2
      %p465 = por %p463, %p464
      %p466 = scmp.ne.s32.totalorder %s457, %s458
      %p467 = scmp.eq.s32.totalorder %s35, 0
      %p468 = por %p466, %p467
      %p469 = scmp.ne.s32.totalorder %s457, %s458
      %p470 = scmp.eq.s32.totalorder %s36, 2
      %p471 = por %p469, %p470
      %p473 = scmp.ne.s32.totalorder %s458, %s472
      %p474 = scmp.eq.s32.totalorder %s36, 0
      %p475 = por %p473, %p474
      %s477 = sadd.s32 %s476, 1
      %p480 = scmp.eq.s32.totalorder %s30, 2
      %p481 = scmp.ne.s32.totalorder %s476, %s478
      %p482 = scmp.eq.s32.totalorder %s30, 0
      %p483 = por %p481, %p482
      %p484 = scmp.ne.s32.totalorder %s476, %s478
      %p485 = scmp.eq.s32.totalorder %s35, 2
      %p486 = por %p484, %p485
      %p487 = scmp.ne.s32.totalorder %s478, %s479
      %p488 = scmp.eq.s32.totalorder %s35, 0
      %p489 = por %p487, %p488
      %p490 = scmp.ne.s32.totalorder %s478, %s479
      %p491 = scmp.eq.s32.totalorder %s36, 2
      %p492 = por %p490, %p491
      %p494 = scmp.ne.s32.totalorder %s479, %s493
      %p495 = scmp.eq.s32.totalorder %s36, 0
      %p496 = por %p494, %p495
      %s498 = sadd.s32 %s497, 1
      %p501 = scmp.eq.s32.totalorder %s30, 2
      %p502 = scmp.ne.s32.totalorder %s497, %s499
      %p503 = scmp.eq.s32.totalorder %s30, 0
      %p504 = por %p502, %p503
      %p505 = scmp.ne.s32.totalorder %s497, %s499
      %p506 = scmp.eq.s32.totalorder %s35, 2
      %p507 = por %p505, %p506
      %p508 = scmp.ne.s32.totalorder %s499, %s500
      %p509 = scmp.eq.s32.totalorder %s35, 0
      %p510 = por %p508, %p509
      %p511 = scmp.ne.s32.totalorder %s499, %s500
      %p512 = scmp.eq.s32.totalorder %s36, 2
      %p513 = por %p511, %p512
      %p515 = scmp.ne.s32.totalorder %s500, %s514
      %p516 = scmp.eq.s32.totalorder %s36, 0
      %p517 = por %p515, %p516
      %s519 = sadd.s32 %s518, 1
      %p522 = scmp.eq.s32.totalorder %s30, 2
      %p523 = scmp.ne.s32.totalorder %s518, %s520
      %p524 = scmp.eq.s32.totalorder %s30, 0
      %p525 = por %p523, %p524
      %p526 = scmp.ne.s32.totalorder %s518, %s520
      %p527 = scmp.eq.s32.totalorder %s35, 2
      %p528 = por %p526, %p527
      %p529 = scmp.ne.s32.totalorder %s520, %s521
      %p530 = scmp.eq.s32.totalorder %s35, 0
      %p531 = por %p529, %p530
      %p532 = scmp.ne.s32.totalorder %s520, %s521
      %p533 = scmp.eq.s32.totalorder %s36, 2
      %p534 = por %p532, %p533
      %p536 = scmp.ne.s32.totalorder %s521, %s535
      %p537 = scmp.eq.s32.totalorder %s36, 0
      %p538 = por %p536, %p537
      %p539 = scmp.le.s32.totalorder 1, %s30
      %p540 = scmp.lt.s32.totalorder %s30, 4
      %p541 = pnand %p539, %p540
      %p542 = pneg %p541
      // Predicated region
      $region9: #{tpu_custom_call.1} parent=5 // pred_check
        _
      $region10: #{tpu_custom_call.1} parent=5 // pred_check_branch
        %544 = sbr.rel (%p541) target = $region12
      $region11: #{tpu_custom_call.1} parent=5 // pred_region
        %s545 = ssub.s32 %s30, 1
        // Predicated region
        $region13: #{tpu_custom_call.1} parent=11 // pred_check
          %p546 = pneg %p51
        $region14: #{tpu_custom_call.1} parent=11 // pred_check_branch
          %548 = sbr.rel (%p546) target = $region16
        $region15: #{tpu_custom_call.1} parent=11 // pred_region
          %550 = vsyncadd [#allocation4], 0
          %s551 = sshll.u32 %s0, 4
          %s552 = int_to_ptr.hbm [resolvable:$true] %s551
          %s553 = sshll.u32 [#allocation3], 4
          %s554 = int_to_ptr.vmem [resolvable:$true] %s553
          %559 = dma.hbm_to_vmem [thread:$0]  %s552, 384, %s554, [#allocation4], 64, 64, 4
        $region16: #{tpu_custom_call.1} parent=11 // pred_fallthru
          _
        // Predicated region
        $region17: #{tpu_custom_call.1} parent=11 // pred_check
          %p560 = pneg %p72
        $region18: #{tpu_custom_call.1} parent=11 // pred_check_branch
          %562 = sbr.rel (%p560) target = $region20
        $region19: #{tpu_custom_call.1} parent=11 // pred_region
          %564 = vsyncadd [#allocation7], 0
          %s565 = sshll.u32 %s1, 4
          %s566 = int_to_ptr.hbm [resolvable:$true] %s565
          %s567 = sshll.u32 [#allocation6], 4
          %s568 = int_to_ptr.vmem [resolvable:$true] %s567
          %573 = dma.hbm_to_vmem [thread:$0]  %s566, 768, %s568, [#allocation7], 128, 128, 8
        $region20: #{tpu_custom_call.1} parent=11 // pred_fallthru
          _
        // Predicated region
        $region21: #{tpu_custom_call.1} parent=11 // pred_check
          %p574 = pneg %p93
        $region22: #{tpu_custom_call.1} parent=11 // pred_check_branch
          %576 = sbr.rel (%p574) target = $region24
        $region23: #{tpu_custom_call.1} parent=11 // pred_region
          %578 = vsyncadd [#allocation7], 0
          %s579 = sshll.u32 %s2, 4
          %s580 = int_to_ptr.hbm [resolvable:$true] %s579
          %s581 = sshll.u32 [#allocation8], 4
          %s582 = int_to_ptr.vmem [resolvable:$true] %s581
          %587 = dma.hbm_to_vmem [thread:$0]  %s580, 1024, %s582, [#allocation7], 64, 64, 4
        $region24: #{tpu_custom_call.1} parent=11 // pred_fallthru
          _
        // Predicated region
        $region25: #{tpu_custom_call.1} parent=11 // pred_check
          %p588 = pneg %p114
        $region26: #{tpu_custom_call.1} parent=11 // pred_check_branch
          %590 = sbr.rel (%p588) target = $region28
        $region27: #{tpu_custom_call.1} parent=11 // pred_region
          %592 = vsyncadd [#allocation10], 0
          %s593 = sshll.u32 %s3, 4
          %s594 = int_to_ptr.hbm [resolvable:$true] %s593
          %s595 = sshll.u32 [#allocation9], 4
          %s596 = int_to_ptr.vmem [resolvable:$true] %s595
          %601 = dma.hbm_to_vmem [thread:$0]  %s594, 768, %s596, [#allocation10], 128, 128, 8
        $region28: #{tpu_custom_call.1} parent=11 // pred_fallthru
          _
        // Predicated region
        $region29: #{tpu_custom_call.1} parent=11 // pred_check
          %p602 = pneg %p447
        $region30: #{tpu_custom_call.1} parent=11 // pred_check_branch
          %604 = sbr.rel (%p602) target = $region32
        $region31: #{tpu_custom_call.1} parent=11 // pred_region
          _
        $region32: #{tpu_custom_call.1} parent=11 // pred_fallthru
          _
        // Predicated region
        $region33: #{tpu_custom_call.1} parent=11 // pred_check
          %p605 = pneg %p468
        $region34: #{tpu_custom_call.1} parent=11 // pred_check_branch
          %607 = sbr.rel (%p605) target = $region36
        $region35: #{tpu_custom_call.1} parent=11 // pred_region
          _
        $region36: #{tpu_custom_call.1} parent=11 // pred_fallthru
          _
        // Predicated region
        $region37: #{tpu_custom_call.1} parent=11 // pred_check
          %p608 = pneg %p489
        $region38: #{tpu_custom_call.1} parent=11 // pred_check_branch
          %610 = sbr.rel (%p608) target = $region40
        $region39: #{tpu_custom_call.1} parent=11 // pred_region
          %612 = vsyncadd [#allocation7], 0
          %s613 = sshll.u32 %s18, 4
          %s614 = int_to_ptr.hbm [resolvable:$true] %s613
          %s615 = sshll.u32 [#allocation20], 4
          %s616 = int_to_ptr.vmem [resolvable:$true] %s615
          %621 = dma.hbm_to_vmem [thread:$0]  %s614, 1024, %s616, [#allocation7], 64, 64, 4
        $region40: #{tpu_custom_call.1} parent=11 // pred_fallthru
          _
        // Predicated region
        $region41: #{tpu_custom_call.1} parent=11 // pred_check
          %p622 = pneg %p510
        $region42: #{tpu_custom_call.1} parent=11 // pred_check_branch
          %624 = sbr.rel (%p622) target = $region44
        $region43: #{tpu_custom_call.1} parent=11 // pred_region
          _
        $region44: #{tpu_custom_call.1} parent=11 // pred_fallthru
          _
      $region12: #{tpu_custom_call.1} parent=5 // pred_fallthru
        _
      %p625 = scmp.lt.s32.totalorder %s30, 3
      // Predicated region
      $region45: #{tpu_custom_call.1} parent=5 // pred_check
        %p626 = pneg %p625
      $region46: #{tpu_custom_call.1} parent=5 // pred_check_branch
        %628 = sbr.rel (%p626) target = $region48
      $region47: #{tpu_custom_call.1} parent=5 // pred_region
        // Predicated region
        $region49: #{tpu_custom_call.1} parent=47 // pred_check
          %p629 = pneg %p134
        $region50: #{tpu_custom_call.1} parent=47 // pred_check_branch
          %631 = sbr.rel (%p629) target = $region52
        $region51: #{tpu_custom_call.1} parent=47 // pred_region
          %p632 = scmp.lt.s32.totalorder %s30, 2
          %s633 = scalar_select %p632, %s30, 2
          %s634 = scalar_lea.vmem %s4, %s633
        $region52: #{tpu_custom_call.1} parent=47 // pred_fallthru
          _
        // Predicated region
        $region53: #{tpu_custom_call.1} parent=47 // pred_check
          %p635 = pneg %p160
        $region54: #{tpu_custom_call.1} parent=47 // pred_check_branch
          %637 = sbr.rel (%p635) target = $region56
        $region55: #{tpu_custom_call.1} parent=47 // pred_region
          %s638 = sand.u32 %s30, 1
          %s639 = scalar_lea.sflag [#allocation4], %s638
          %s640 = sand.u32 %s150, 1
          %s641 = scalar_lea.vmem [#allocation11], %s640
          %643 = vsyncadd %s639, 0
          %s644 = scalar_lea.hbm %s5, %s30
          %s646 = sshll.u32 %s644, 4
          %s647 = int_to_ptr.hbm [resolvable:$true] %s646
          %s648 = sshll.u32 %s641, 4
          %s649 = int_to_ptr.vmem [resolvable:$true] %s648
          %651 = dma.hbm_to_vmem [thread:$0]  %s647, 16, %s649, %s639
        $region56: #{tpu_custom_call.1} parent=47 // pred_fallthru
          _
        // Predicated region
        $region57: #{tpu_custom_call.1} parent=47 // pred_check
          %p652 = pneg %p186
        $region58: #{tpu_custom_call.1} parent=47 // pred_check_branch
          %654 = sbr.rel (%p652) target = $region60
        $region59: #{tpu_custom_call.1} parent=47 // pred_region
          %s655 = sand.u32 %s30, 1
          %s656 = scalar_lea.sflag [#allocation4], %s655
          %s657 = sand.u32 %s176, 1
          %s658 = smul.addr %s657, 192
          %s659 = scalar_lea.vmem [#allocation12], %s658
          %661 = vsyncadd %s656, 0
          %s662 = smul.addr %s30, 48
          %s663 = smul.addr %s662, 4
          %s664 = scalar_lea.hbm %s6, %s663
          %s665 = sshll.u32 %s664, 4
          %s666 = int_to_ptr.hbm [resolvable:$true] %s665
          %s667 = sshll.u32 %s659, 4
          %s668 = int_to_ptr.vmem [resolvable:$true] %s667
          %673 = dma.hbm_to_vmem [thread:$0]  %s666, 3072, %s668, %s656, 192, 192, 12
        $region60: #{tpu_custom_call.1} parent=47 // pred_fallthru
          _
        // Predicated region
        $region61: #{tpu_custom_call.1} parent=47 // pred_check
          %p674 = pneg %p212
        $region62: #{tpu_custom_call.1} parent=47 // pred_check_branch
          %676 = sbr.rel (%p674) target = $region64
        $region63: #{tpu_custom_call.1} parent=47 // pred_region
          %s677 = sand.u32 %s30, 1
          %s678 = scalar_lea.sflag [#allocation4], %s677
          %s679 = sand.u32 %s202, 1
          %s680 = smul.addr %s679, 3
          %s681 = scalar_lea.vmem [#allocation13], %s680
          %683 = vsyncadd %s678, 0
          %s684 = smul.addr %s30, 3
          %s685 = scalar_lea.hbm %s7, %s684
          %s687 = sshll.u32 %s685, 4
          %s688 = int_to_ptr.hbm [resolvable:$true] %s687
          %s689 = sshll.u32 %s681, 4
          %s690 = int_to_ptr.vmem [resolvable:$true] %s689
          %692 = dma.hbm_to_vmem [thread:$0]  %s688, 48, %s690, %s678
        $region64: #{tpu_custom_call.1} parent=47 // pred_fallthru
          _
        // Predicated region
        $region65: #{tpu_custom_call.1} parent=47 // pred_check
          %p693 = pneg %p238
        $region66: #{tpu_custom_call.1} parent=47 // pred_check_branch
          %695 = sbr.rel (%p693) target = $region68
        $region67: #{tpu_custom_call.1} parent=47 // pred_region
          %s696 = sand.u32 %s30, 1
          %s697 = scalar_lea.sflag [#allocation4], %s696
          %s698 = sand.u32 %s228, 1
          %s699 = smul.addr %s698, 64
          %s700 = scalar_lea.vmem [#allocation14], %s699
          %702 = vsyncadd %s697, 0
          %s703 = smul.addr %s30, 16
          %s704 = smul.addr %s703, 4
          %s705 = scalar_lea.hbm %s8, %s704
          %s706 = sshll.u32 %s705, 4
          %s707 = int_to_ptr.hbm [resolvable:$true] %s706
          %s708 = sshll.u32 %s700, 4
          %s709 = int_to_ptr.vmem [resolvable:$true] %s708
          %714 = dma.hbm_to_vmem [thread:$0]  %s707, 1024, %s709, %s697, 64, 64, 4
        $region68: #{tpu_custom_call.1} parent=47 // pred_fallthru
          _
        // Predicated region
        $region69: #{tpu_custom_call.1} parent=47 // pred_check
          %p715 = pneg %p264
        $region70: #{tpu_custom_call.1} parent=47 // pred_check_branch
          %717 = sbr.rel (%p715) target = $region72
        $region71: #{tpu_custom_call.1} parent=47 // pred_region
          %s718 = sand.u32 %s30, 1
          %s719 = scalar_lea.sflag [#allocation4], %s718
          %s720 = sand.u32 %s254, 1
          %s721 = scalar_lea.vmem [#allocation15], %s720
          %723 = vsyncadd %s719, 0
          %s724 = scalar_lea.hbm %s9, %s30
          %s726 = sshll.u32 %s724, 4
          %s727 = int_to_ptr.hbm [resolvable:$true] %s726
          %s728 = sshll.u32 %s721, 4
          %s729 = int_to_ptr.vmem [resolvable:$true] %s728
          %731 = dma.hbm_to_vmem [thread:$0]  %s727, 16, %s729, %s719
        $region72: #{tpu_custom_call.1} parent=47 // pred_fallthru
          _
        // Predicated region
        $region73: #{tpu_custom_call.1} parent=47 // pred_check
          %p732 = pneg %p290
        $region74: #{tpu_custom_call.1} parent=47 // pred_check_branch
          %734 = sbr.rel (%p732) target = $region76
        $region75: #{tpu_custom_call.1} parent=47 // pred_region
          %s735 = sand.u32 %s30, 1
          %s736 = scalar_lea.sflag [#allocation4], %s735
          %s737 = sand.u32 %s280, 1
          %s738 = scalar_lea.vmem [#allocation16], %s737
          %740 = vsyncadd %s736, 0
          %s741 = scalar_lea.hbm %s10, %s30
          %s743 = sshll.u32 %s741, 4
          %s744 = int_to_ptr.hbm [resolvable:$true] %s743
          %s745 = sshll.u32 %s738, 4
          %s746 = int_to_ptr.vmem [resolvable:$true] %s745
          %748 = dma.hbm_to_vmem [thread:$0]  %s744, 16, %s746, %s736
        $region76: #{tpu_custom_call.1} parent=47 // pred_fallthru
          _
        // Predicated region
        $region77: #{tpu_custom_call.1} parent=47 // pred_check
          %p749 = pneg %p316
        $region78: #{tpu_custom_call.1} parent=47 // pred_check_branch
          %751 = sbr.rel (%p749) target = $region80
        $region79: #{tpu_custom_call.1} parent=47 // pred_region
          %s752 = sand.u32 %s30, 1
          %s753 = scalar_lea.sflag [#allocation4], %s752
          %s754 = sand.u32 %s306, 1
          %s755 = scalar_lea.vmem [#allocation17], %s754
          %757 = vsyncadd %s753, 0
          %s758 = scalar_lea.hbm %s11, %s30
          %s760 = sshll.u32 %s758, 4
          %s761 = int_to_ptr.hbm [resolvable:$true] %s760
          %s762 = sshll.u32 %s755, 4
          %s763 = int_to_ptr.vmem [resolvable:$true] %s762
          %765 = dma.hbm_to_vmem [thread:$0]  %s761, 16, %s763, %s753
        $region80: #{tpu_custom_call.1} parent=47 // pred_fallthru
          _
        // Predicated region
        $region81: #{tpu_custom_call.1} parent=47 // pred_check
          %p766 = pneg %p342
        $region82: #{tpu_custom_call.1} parent=47 // pred_check_branch
          %768 = sbr.rel (%p766) target = $region84
        $region83: #{tpu_custom_call.1} parent=47 // pred_region
          %s769 = sand.u32 %s30, 1
          %s770 = scalar_lea.sflag [#allocation4], %s769
          %s771 = sand.u32 %s332, 1
          %s772 = smul.addr %s771, 128
          %s773 = scalar_lea.vmem [#allocation18], %s772
          %775 = vsyncadd %s770, 0
          %s776 = smul.addr %s30, 32
          %s777 = smul.addr %s776, 4
          %s778 = scalar_lea.hbm %s12, %s777
          %s779 = sshll.u32 %s778, 4
          %s780 = int_to_ptr.hbm [resolvable:$true] %s779
          %s781 = sshll.u32 %s773, 4
          %s782 = int_to_ptr.vmem [resolvable:$true] %s781
          %787 = dma.hbm_to_vmem [thread:$0]  %s780, 2048, %s782, %s770, 128, 128, 8
        $region84: #{tpu_custom_call.1} parent=47 // pred_fallthru
          _
        // Predicated region
        $region85: #{tpu_custom_call.1} parent=47 // pred_check
          %p788 = pneg %p368
        $region86: #{tpu_custom_call.1} parent=47 // pred_check_branch
          %790 = sbr.rel (%p788) target = $region88
        $region87: #{tpu_custom_call.1} parent=47 // pred_region
          %p791 = scmp.lt.s32.totalorder %s30, 2
          %s792 = scalar_select %p791, %s30, 2
          %s793 = smul.addr %s792, 2
          %s794 = scalar_lea.vmem %s13, %s793
        $region88: #{tpu_custom_call.1} parent=47 // pred_fallthru
          _
        // Predicated region
        $region89: #{tpu_custom_call.1} parent=47 // pred_check
          %p795 = pneg %p394
        $region90: #{tpu_custom_call.1} parent=47 // pred_check_branch
          %797 = sbr.rel (%p795) target = $region92
        $region91: #{tpu_custom_call.1} parent=47 // pred_region
          %s798 = sand.u32 %s30, 1
          %s799 = scalar_lea.sflag [#allocation4], %s798
          %s800 = sand.u32 %s384, 1
          %s801 = smul.addr %s800, 128
          %s802 = scalar_lea.vmem [#allocation19], %s801
          %804 = vsyncadd %s799, 0
          %s805 = smul.addr %s30, 32
          %s806 = smul.addr %s805, 4
          %s807 = scalar_lea.hbm %s14, %s806
          %s808 = sshll.u32 %s807, 4
          %s809 = int_to_ptr.hbm [resolvable:$true] %s808
          %s810 = sshll.u32 %s802, 4
          %s811 = int_to_ptr.vmem [resolvable:$true] %s810
          %816 = dma.hbm_to_vmem [thread:$0]  %s809, 2048, %s811, %s799, 64, 64, 4
        $region92: #{tpu_custom_call.1} parent=47 // pred_fallthru
          _
        // Predicated region
        $region93: #{tpu_custom_call.1} parent=47 // pred_check
          %p817 = pneg %p420
        $region94: #{tpu_custom_call.1} parent=47 // pred_check_branch
          %819 = sbr.rel (%p817) target = $region96
        $region95: #{tpu_custom_call.1} parent=47 // pred_region
          %p820 = scmp.lt.s32.totalorder %s30, 2
          %s821 = scalar_select %p820, %s30, 2
          %s822 = scalar_lea.vmem %s15, %s821
        $region96: #{tpu_custom_call.1} parent=47 // pred_fallthru
          _
      $region48: #{tpu_custom_call.1} parent=5 // pred_fallthru
        _
      %p823 = scmp.le.s32.totalorder 1, %s30
      %p824 = scmp.lt.s32.totalorder %s30, 4
      %p825 = pnand %p823, %p824
      %p826 = pneg %p825
      // Predicated region
      $region97: #{tpu_custom_call.1} parent=5 // pred_check
        _
      $region98: #{tpu_custom_call.1} parent=5 // pred_check_branch
        %828 = sbr.rel (%p825) target = $region100
      $region99: #{tpu_custom_call.1} parent=5 // pred_region
        %s829 = ssub.s32 %s30, 1
        // Predicated region
        $region101: #{tpu_custom_call.1} parent=99 // pred_check
          %p830 = pneg %p51
        $region102: #{tpu_custom_call.1} parent=99 // pred_check_branch
          %832 = sbr.rel (%p830) target = $region104
        $region103: #{tpu_custom_call.1} parent=99 // pred_region
          %834 = dma.done [#allocation4], 384
        $region104: #{tpu_custom_call.1} parent=99 // pred_fallthru
          _
        // Predicated region
        $region105: #{tpu_custom_call.1} parent=99 // pred_check
          %p835 = pneg %p72
        $region106: #{tpu_custom_call.1} parent=99 // pred_check_branch
          %837 = sbr.rel (%p835) target = $region108
        $region107: #{tpu_custom_call.1} parent=99 // pred_region
          %839 = dma.done [#allocation7], 768
        $region108: #{tpu_custom_call.1} parent=99 // pred_fallthru
          _
        // Predicated region
        $region109: #{tpu_custom_call.1} parent=99 // pred_check
          %p840 = pneg %p93
        $region110: #{tpu_custom_call.1} parent=99 // pred_check_branch
          %842 = sbr.rel (%p840) target = $region112
        $region111: #{tpu_custom_call.1} parent=99 // pred_region
          %844 = dma.done [#allocation7], 1024
        $region112: #{tpu_custom_call.1} parent=99 // pred_fallthru
          _
        // Predicated region
        $region113: #{tpu_custom_call.1} parent=99 // pred_check
          %p845 = pneg %p114
        $region114: #{tpu_custom_call.1} parent=99 // pred_check_branch
          %847 = sbr.rel (%p845) target = $region116
        $region115: #{tpu_custom_call.1} parent=99 // pred_region
          %849 = dma.done [#allocation10], 768
        $region116: #{tpu_custom_call.1} parent=99 // pred_fallthru
          _
        %s850 = sand.u32 %s35, 1
        %s851 = scalar_lea.sflag [#allocation4], %s850
        %s852 = sand.u32 %s153, 1
        %s853 = scalar_lea.vmem [#allocation11], %s852
        // Predicated region
        $region117: #{tpu_custom_call.1} parent=99 // pred_check
          %p854 = pneg %p166
        $region118: #{tpu_custom_call.1} parent=99 // pred_check_branch
          %856 = sbr.rel (%p854) target = $region120
        $region119: #{tpu_custom_call.1} parent=99 // pred_region
          %858 = dma.done %s851, 16
        $region120: #{tpu_custom_call.1} parent=99 // pred_fallthru
          _
        %s859 = sand.u32 %s35, 1
        %s860 = scalar_lea.sflag [#allocation4], %s859
        %s861 = sand.u32 %s179, 1
        %s862 = smul.addr %s861, 192
        %s863 = scalar_lea.vmem [#allocation12], %s862
        // Predicated region
        $region121: #{tpu_custom_call.1} parent=99 // pred_check
          %p864 = pneg %p192
        $region122: #{tpu_custom_call.1} parent=99 // pred_check_branch
          %866 = sbr.rel (%p864) target = $region124
        $region123: #{tpu_custom_call.1} parent=99 // pred_region
          %868 = dma.done %s860, 3072
        $region124: #{tpu_custom_call.1} parent=99 // pred_fallthru
          _
        %s869 = sand.u32 %s35, 1
        %s870 = scalar_lea.sflag [#allocation4], %s869
        %s871 = sand.u32 %s205, 1
        %s872 = smul.addr %s871, 3
        %s873 = scalar_lea.vmem [#allocation13], %s872
        // Predicated region
        $region125: #{tpu_custom_call.1} parent=99 // pred_check
          %p874 = pneg %p218
        $region126: #{tpu_custom_call.1} parent=99 // pred_check_branch
          %876 = sbr.rel (%p874) target = $region128
        $region127: #{tpu_custom_call.1} parent=99 // pred_region
          %878 = dma.done %s870, 48
        $region128: #{tpu_custom_call.1} parent=99 // pred_fallthru
          _
        %s879 = sand.u32 %s35, 1
        %s880 = scalar_lea.sflag [#allocation4], %s879
        %s881 = sand.u32 %s231, 1
        %s882 = smul.addr %s881, 64
        %s883 = scalar_lea.vmem [#allocation14], %s882
        // Predicated region
        $region129: #{tpu_custom_call.1} parent=99 // pred_check
          %p884 = pneg %p244
        $region130: #{tpu_custom_call.1} parent=99 // pred_check_branch
          %886 = sbr.rel (%p884) target = $region132
        $region131: #{tpu_custom_call.1} parent=99 // pred_region
          %888 = dma.done %s880, 1024
        $region132: #{tpu_custom_call.1} parent=99 // pred_fallthru
          _
        %s889 = sand.u32 %s35, 1
        %s890 = scalar_lea.sflag [#allocation4], %s889
        %s891 = sand.u32 %s257, 1
        %s892 = scalar_lea.vmem [#allocation15], %s891
        // Predicated region
        $region133: #{tpu_custom_call.1} parent=99 // pred_check
          %p893 = pneg %p270
        $region134: #{tpu_custom_call.1} parent=99 // pred_check_branch
          %895 = sbr.rel (%p893) target = $region136
        $region135: #{tpu_custom_call.1} parent=99 // pred_region
          %897 = dma.done %s890, 16
        $region136: #{tpu_custom_call.1} parent=99 // pred_fallthru
          _
        %s898 = sand.u32 %s35, 1
        %s899 = scalar_lea.sflag [#allocation4], %s898
        %s900 = sand.u32 %s283, 1
        %s901 = scalar_lea.vmem [#allocation16], %s900
        // Predicated region
        $region137: #{tpu_custom_call.1} parent=99 // pred_check
          %p902 = pneg %p296
        $region138: #{tpu_custom_call.1} parent=99 // pred_check_branch
          %904 = sbr.rel (%p902) target = $region140
        $region139: #{tpu_custom_call.1} parent=99 // pred_region
          %906 = dma.done %s899, 16
        $region140: #{tpu_custom_call.1} parent=99 // pred_fallthru
          _
        %s907 = sand.u32 %s35, 1
        %s908 = scalar_lea.sflag [#allocation4], %s907
        %s909 = sand.u32 %s309, 1
        %s910 = scalar_lea.vmem [#allocation17], %s909
        // Predicated region
        $region141: #{tpu_custom_call.1} parent=99 // pred_check
          %p911 = pneg %p322
        $region142: #{tpu_custom_call.1} parent=99 // pred_check_branch
          %913 = sbr.rel (%p911) target = $region144
        $region143: #{tpu_custom_call.1} parent=99 // pred_region
          %915 = dma.done %s908, 16
        $region144: #{tpu_custom_call.1} parent=99 // pred_fallthru
          _
        %s916 = sand.u32 %s35, 1
        %s917 = scalar_lea.sflag [#allocation4], %s916
        %s918 = sand.u32 %s335, 1
        %s919 = smul.addr %s918, 128
        %s920 = scalar_lea.vmem [#allocation18], %s919
        // Predicated region
        $region145: #{tpu_custom_call.1} parent=99 // pred_check
          %p921 = pneg %p348
        $region146: #{tpu_custom_call.1} parent=99 // pred_check_branch
          %923 = sbr.rel (%p921) target = $region148
        $region147: #{tpu_custom_call.1} parent=99 // pred_region
          %925 = dma.done %s917, 2048
        $region148: #{tpu_custom_call.1} parent=99 // pred_fallthru
          _
        %s926 = sand.u32 %s35, 1
        %s927 = scalar_lea.sflag [#allocation4], %s926
        %s928 = sand.u32 %s387, 1
        %s929 = smul.addr %s928, 128
        %s930 = scalar_lea.vmem [#allocation19], %s929
        // Predicated region
        $region149: #{tpu_custom_call.1} parent=99 // pred_check
          %p931 = pneg %p400
        $region150: #{tpu_custom_call.1} parent=99 // pred_check_branch
          %933 = sbr.rel (%p931) target = $region152
        $region151: #{tpu_custom_call.1} parent=99 // pred_region
          %935 = dma.done %s927, 2048
        $region152: #{tpu_custom_call.1} parent=99 // pred_fallthru
          _
        // Predicated region
        $region153: #{tpu_custom_call.1} parent=99 // pred_check
          %p936 = pneg %p489
        $region154: #{tpu_custom_call.1} parent=99 // pred_check_branch
          %938 = sbr.rel (%p936) target = $region156
        $region155: #{tpu_custom_call.1} parent=99 // pred_region
          %940 = dma.done [#allocation7], 1024
        $region156: #{tpu_custom_call.1} parent=99 // pred_fallthru
          _
        %p941 = pneg %p51
        %p942 = pneg %p48
        %p943 = pneg %p72
        %p944 = pneg %p69
        %p945 = pneg %p93
        %p946 = pneg %p90
        %p947 = pneg %p114
        %p948 = pneg %p111
        %p949 = scmp.lt.s32.totalorder %s35, 2
        %s950 = scalar_select %p949, %s35, 2
        %s951 = scalar_lea.vmem %s4, %s950
        %p952 = pneg %p140
        %p953 = pneg %p137
        %s954 = sand.u32 %s35, 1
        %s955 = scalar_lea.sflag [#allocation4], %s954
        %s956 = sand.u32 %s153, 1
        %s957 = scalar_lea.vmem [#allocation11], %s956
        %p958 = pneg %p166
        %p959 = pneg %p163
        %s960 = sand.u32 %s35, 1
        %s961 = scalar_lea.sflag [#allocation4], %s960
        %s962 = sand.u32 %s179, 1
        %s963 = smul.addr %s962, 192
        %s964 = scalar_lea.vmem [#allocation12], %s963
        %p965 = pneg %p192
        %p966 = pneg %p189
        %s967 = sand.u32 %s35, 1
        %s968 = scalar_lea.sflag [#allocation4], %s967
        %s969 = sand.u32 %s205, 1
        %s970 = smul.addr %s969, 3
        %s971 = scalar_lea.vmem [#allocation13], %s970
        %p972 = pneg %p218
        %p973 = pneg %p215
        %s974 = sand.u32 %s35, 1
        %s975 = scalar_lea.sflag [#allocation4], %s974
        %s976 = sand.u32 %s231, 1
        %s977 = smul.addr %s976, 64
        %s978 = scalar_lea.vmem [#allocation14], %s977
        %p979 = pneg %p244
        %p980 = pneg %p241
        %s981 = sand.u32 %s35, 1
        %s982 = scalar_lea.sflag [#allocation4], %s981
        %s983 = sand.u32 %s257, 1
        %s984 = scalar_lea.vmem [#allocation15], %s983
        %p985 = pneg %p270
        %p986 = pneg %p267
        %s987 = sand.u32 %s35, 1
        %s988 = scalar_lea.sflag [#allocation4], %s987
        %s989 = sand.u32 %s283, 1
        %s990 = scalar_lea.vmem [#allocation16], %s989
        %p991 = pneg %p296
        %p992 = pneg %p293
        %s993 = sand.u32 %s35, 1
        %s994 = scalar_lea.sflag [#allocation4], %s993
        %s995 = sand.u32 %s309, 1
        %s996 = scalar_lea.vmem [#allocation17], %s995
        %p997 = pneg %p322
        %p998 = pneg %p319
        %s999 = sand.u32 %s35, 1
        %s1000 = scalar_lea.sflag [#allocation4], %s999
        %s1001 = sand.u32 %s335, 1
        %s1002 = smul.addr %s1001, 128
        %s1003 = scalar_lea.vmem [#allocation18], %s1002
        %p1004 = pneg %p348
        %p1005 = pneg %p345
        %p1006 = scmp.lt.s32.totalorder %s35, 2
        %s1007 = scalar_select %p1006, %s35, 2
        %s1008 = smul.addr %s1007, 2
        %s1009 = scalar_lea.vmem %s13, %s1008
        %p1010 = pneg %p374
        %p1011 = pneg %p371
        %s1012 = sand.u32 %s35, 1
        %s1013 = scalar_lea.sflag [#allocation4], %s1012
        %s1014 = sand.u32 %s387, 1
        %s1015 = smul.addr %s1014, 128
        %s1016 = scalar_lea.vmem [#allocation19], %s1015
        %p1017 = pneg %p400
        %p1018 = pneg %p397
        %p1019 = scmp.lt.s32.totalorder %s35, 2
        %s1020 = scalar_select %p1019, %s35, 2
        %s1021 = scalar_lea.vmem %s15, %s1020
        %p1022 = pneg %p426
        %p1023 = pneg %p423
        %p1024 = pneg %p447
        %p1025 = pneg %p444
        %p1026 = pneg %p468
        %p1027 = pneg %p465
        %p1028 = pneg %p489
        %p1029 = pneg %p486
        %p1030 = pneg %p510
        %p1031 = pneg %p507
        %p1032 = pneg %p531
        %p1033 = pneg %p528
        %p1034 = scmp.lt.s32.totalorder %s35, 2
        %s1035 = scalar_select %p1034, %s35, 2
        %s1036 = scalar_lea.vmem %s4, %s1035
        %p1037 = scmp.lt.s32.totalorder %s35, 2
        %s1038 = scalar_select %p1037, %s35, 2
        %s1039 = smul.addr %s1038, 2
        %s1040 = scalar_lea.vmem %s13, %s1039
        %p1041 = scmp.lt.s32.totalorder %s35, 2
        %s1042 = scalar_select %p1041, %s35, 2
        %s1043 = scalar_lea.vmem %s15, %s1042
        %p1045 = scmp.eq.s32.totalorder %s35, 0
        // Predicated region
        $region157: #{tpu_custom_call.1} parent=99 // pred_check
          %p1046 = pneg %p1045
        $region158: #{tpu_custom_call.1} parent=99 // pred_check_branch
          %1048 = sbr.rel (%p1046) target = $region160
        $region159: #{tpu_custom_call.1} parent=99 // pred_region
          %v1049 = vld [vmem:[#allocation3] sm:$0xf]
          %v1050 = vld [vmem:[#allocation3 + $0x4] sm:$0xf]
          %v1051 = vld [vmem:[#allocation3 + $0x8] sm:$0xf]
          %v1052 = vld [vmem:[#allocation3 + $0xc] sm:$0xf]
          %v1053 = vld [vmem:[#allocation3 + $0x10] sm:$0xf]
          %v1054 = vld [vmem:[#allocation3 + $0x14] sm:$0xf]
          %v1055 = vld [vmem:[#allocation8] sm:$0xf]
          %v1056 = vld [vmem:[#allocation8 + $0x4] sm:$0xf]
          %v1057 = vld [vmem:[#allocation8 + $0x8] sm:$0xf]
          %v1058 = vld [vmem:[#allocation8 + $0xc] sm:$0xf]
          %v1059 = vld [vmem:[#allocation8 + $0x10] sm:$0xf]
          %v1060 = vld [vmem:[#allocation8 + $0x14] sm:$0xf]
          %v1061 = vld [vmem:[#allocation8 + $0x18] sm:$0xf]
          %v1062 = vld [vmem:[#allocation8 + $0x1c] sm:$0xf]
          %v1063 = vld [vmem:[#allocation8 + $0x20] sm:$0xf]
          %v1064 = vld [vmem:[#allocation8 + $0x24] sm:$0xf]
          %v1065 = vld [vmem:[#allocation8 + $0x28] sm:$0xf]
          %v1066 = vld [vmem:[#allocation8 + $0x2c] sm:$0xf]
          %v1067 = vld [vmem:[#allocation8 + $0x30] sm:$0xf]
          %v1068 = vld [vmem:[#allocation8 + $0x34] sm:$0xf]
          %v1069 = vld [vmem:[#allocation8 + $0x38] sm:$0xf]
          %v1070 = vld [vmem:[#allocation8 + $0x3c] sm:$0xf]
          %v1071 = vld [vmem:[#allocation6] sm:$0xff]
          %v1072 = vld [vmem:[#allocation6 + $0x8] sm:$0xff]
          %v1073 = vld [vmem:[#allocation6 + $0x10] sm:$0xff]
          %v1074 = vld [vmem:[#allocation6 + $0x18] sm:$0xff]
          %v1075 = vld [vmem:[#allocation6 + $0x20] sm:$0xff]
          %v1076 = vld [vmem:[#allocation6 + $0x28] sm:$0xff]
          %v1083 = vunpack.c.l.b16 %v1049
          %v1084 = vunpack.c.l.b16 %v1050
          %v1085 = vunpack.c.l.b16 %v1051
          %v1086 = vunpack.c.l.b16 %v1052
          %v1087 = vunpack.c.l.b16 %v1053
          %v1088 = vunpack.c.l.b16 %v1054
          %v1089 = vpack.c.b16 %v1084, %v1083
          %v1090 = vpack.c.b16 %v1086, %v1085
          %v1091 = vpack.c.b16 %v1088, %v1087
          %v1111 = vunpack.c.l.b16 %v1055
          %v1112 = vunpack.c.l.b16 %v1056
          %v1113 = vunpack.c.l.b16 %v1057
          %v1114 = vunpack.c.l.b16 %v1058
          %v1115 = vunpack.c.l.b16 %v1059
          %v1116 = vunpack.c.l.b16 %v1060
          %v1117 = vunpack.c.l.b16 %v1061
          %v1118 = vunpack.c.l.b16 %v1062
          %v1119 = vunpack.c.l.b16 %v1063
          %v1120 = vunpack.c.l.b16 %v1064
          %v1121 = vunpack.c.l.b16 %v1065
          %v1122 = vunpack.c.l.b16 %v1066
          %v1123 = vunpack.c.l.b16 %v1067
          %v1124 = vunpack.c.l.b16 %v1068
          %v1125 = vunpack.c.l.b16 %v1069
          %v1126 = vunpack.c.l.b16 %v1070
          %v1127 = vpack.c.b16 %v1112, %v1111
          %v1128 = vpack.c.b16 %v1114, %v1113
          %v1129 = vpack.c.b16 %v1116, %v1115
          %v1130 = vpack.c.b16 %v1118, %v1117
          %v1131 = vpack.c.b16 %v1120, %v1119
          %v1132 = vpack.c.b16 %v1122, %v1121
          %v1133 = vpack.c.b16 %v1124, %v1123
          %v1134 = vpack.c.b16 %v1126, %v1125
          %1143 = vmatpush.bf16.msra.mxu0 %v1134
          %1144 = vmatpush.bf16.msra.mxu0 %v1133
          %1145 = vmatpush.bf16.msra.mxu0 %v1132
          %1146 = vmatpush.bf16.msra.mxu0 %v1131
          %1147 = vmatpush.bf16.msra.mxu0 %v1130
          %1148 = vmatpush.bf16.msra.mxu0 %v1129
          %1149 = vmatpush.bf16.msra.mxu0 %v1128
          %1150 = vmatpush.bf16.msra.mxu0 %v1127
          %1151 = vmatmul.bf16.gmra.mxu0 %v1089
          %v1152 = vpop.f32.mrf.mxu0
          %v1153 = vadd.f32 %v1071, %v1152
          %v1154 = vpop.f32.mrf.mxu0
          %v1155 = vadd.f32 %v1072, %v1154
          %1156 = vmatmul.bf16.gmra.mxu0 %v1090
          %v1157 = vpop.f32.mrf.mxu0
          %v1158 = vadd.f32 %v1073, %v1157
          %v1159 = vpop.f32.mrf.mxu0
          %v1160 = vadd.f32 %v1074, %v1159
          %1161 = vmatmul.bf16.gmra.mxu0 %v1091
          %v1162 = vpop.f32.mrf.mxu0
          %v1163 = vadd.f32 %v1075, %v1162
          %v1164 = vpop.f32.mrf.mxu0
          %v1165 = vadd.f32 %v1076, %v1164
          %1166 = vdwg.mxu0
          %1167 = vst [vmem:[#allocation2] sm:$0xff] %v1153
          %1168 = vst [vmem:[#allocation2 + $0x8] sm:$0xff] %v1155
          %1169 = vst [vmem:[#allocation2 + $0x10] sm:$0xff] %v1158
          %1170 = vst [vmem:[#allocation2 + $0x18] sm:$0xff] %v1160
          %1171 = vst [vmem:[#allocation2 + $0x20] sm:$0xff] %v1163
          %1172 = vst [vmem:[#allocation2 + $0x28] sm:$0xff] %v1165
        $region160: #{tpu_custom_call.1} parent=99 // pred_fallthru
          _
        %v1173 = vld [vmem:[#allocation2] sm:$0xff]
        %v1174 = vld [vmem:[#allocation2 + $0x8] sm:$0xff]
        %v1175 = vld [vmem:[#allocation2 + $0x10] sm:$0xff]
        %v1176 = vld [vmem:[#allocation2 + $0x18] sm:$0xff]
        %v1177 = vld [vmem:[#allocation2 + $0x20] sm:$0xff]
        %v1178 = vld [vmem:[#allocation2 + $0x28] sm:$0xff]
        %v1179 = vld [vmem:[%s1036] sm:$0x1]
        %v1180 = vld [vmem:[%s853] sm:$0x1]
        %1181 = vadd.xlane.f32.xlu0 %v1173
        %v1182 = vpop.xlane.xlu0 %1181
        %1183 = vadd.xlane.f32.xlu0 %v1174
        %v1184 = vpop.xlane.xlu0 %1183
        %1185 = vadd.xlane.f32.xlu0 %v1175
        %v1186 = vpop.xlane.xlu0 %1185
        %1187 = vadd.xlane.f32.xlu0 %v1176
        %v1188 = vpop.xlane.xlu0 %1187
        %1189 = vadd.xlane.f32.xlu0 %v1177
        %v1190 = vpop.xlane.xlu0 %1189
        %1191 = vadd.xlane.f32.xlu0 %v1178
        %v1192 = vpop.xlane.xlu0 %1191
        %v1193 = vrcp.pop 128.0
        %v1194 = vmul.f32 128.0, %v1193
        %v1195 = vsub.f32 1.0, %v1194
        %v1196 = vmul.f32 %v1193, %v1195
        %v1197 = vadd.f32 %v1193, %v1196
        %vm1198 = vweird.f32 %v1193
        %v1199 = vsel %vm1198, %v1193, %v1197
        %v1200 = vmul.f32 %v1182, %v1199
        %v1201 = vmul.f32 %v1184, %v1199
        %v1202 = vmul.f32 %v1186, %v1199
        %v1203 = vmul.f32 %v1188, %v1199
        %v1204 = vmul.f32 %v1190, %v1199
        %v1205 = vmul.f32 %v1192, %v1199
        %v1206 = vsub.f32 %v1173, %v1200
        %v1207 = vsub.f32 %v1174, %v1201
        %v1208 = vsub.f32 %v1175, %v1202
        %v1209 = vsub.f32 %v1176, %v1203
        %v1210 = vsub.f32 %v1177, %v1204
        %v1211 = vsub.f32 %v1178, %v1205
        %v1212 = vmul.f32 %v1206, %v1206
        %v1213 = vmul.f32 %v1207, %v1207
        %v1214 = vmul.f32 %v1208, %v1208
        %v1215 = vmul.f32 %v1209, %v1209
        %v1216 = vmul.f32 %v1210, %v1210
        %v1217 = vmul.f32 %v1211, %v1211
        %1218 = vadd.xlane.f32.xlu0 %v1212
        %v1219 = vpop.xlane.xlu0 %1218
        %1220 = vadd.xlane.f32.xlu0 %v1213
        %v1221 = vpop.xlane.xlu0 %1220
        %1222 = vadd.xlane.f32.xlu0 %v1214
        %v1223 = vpop.xlane.xlu0 %1222
        %1224 = vadd.xlane.f32.xlu0 %v1215
        %v1225 = vpop.xlane.xlu0 %1224
        %1226 = vadd.xlane.f32.xlu0 %v1216
        %v1227 = vpop.xlane.xlu0 %1226
        %1228 = vadd.xlane.f32.xlu0 %v1217
        %v1229 = vpop.xlane.xlu0 %1228
        %v1230 = vmul.f32 %v1219, %v1199
        %v1231 = vmul.f32 %v1221, %v1199
        %v1232 = vmul.f32 %v1223, %v1199
        %v1233 = vmul.f32 %v1225, %v1199
        %v1234 = vmul.f32 %v1227, %v1199
        %v1235 = vmul.f32 %v1229, %v1199
        %v1236 = vadd.f32 %v1230, 1e-05
        %v1237 = vadd.f32 %v1231, 1e-05
        %v1238 = vadd.f32 %v1232, 1e-05
        %v1239 = vadd.f32 %v1233, 1e-05
        %v1240 = vadd.f32 %v1234, 1e-05
        %v1241 = vadd.f32 %v1235, 1e-05
        %v1242 = vrsqrt.pop %v1236
        %v1243 = vmul.f32 %v1242, %v1236
        %v1244 = vmul.f32 %v1243, %v1242
        %v1245 = vmul.f32 0.5, %v1244
        %v1246 = vsub.f32 1.5, %v1245
        %v1247 = vmul.f32 %v1242, %v1246
        %vm1248 = vweird.f32 %v1236
        %vm1249 = vweird.f32 %v1242
        %vm1250 = vmor %vm1248, %vm1249
        %v1251 = vsel %vm1250, %v1242, %v1247
        %v1252 = vrsqrt.pop %v1237
        %v1253 = vmul.f32 %v1252, %v1237
        %v1254 = vmul.f32 %v1253, %v1252
        %v1255 = vmul.f32 0.5, %v1254
        %v1256 = vsub.f32 1.5, %v1255
        %v1257 = vmul.f32 %v1252, %v1256
        %vm1258 = vweird.f32 %v1237
        %vm1259 = vweird.f32 %v1252
        %vm1260 = vmor %vm1258, %vm1259
        %v1261 = vsel %vm1260, %v1252, %v1257
        %v1262 = vrsqrt.pop %v1238
        %v1263 = vmul.f32 %v1262, %v1238
        %v1264 = vmul.f32 %v1263, %v1262
        %v1265 = vmul.f32 0.5, %v1264
        %v1266 = vsub.f32 1.5, %v1265
        %v1267 = vmul.f32 %v1262, %v1266
        %vm1268 = vweird.f32 %v1238
        %vm1269 = vweird.f32 %v1262
        %vm1270 = vmor %vm1268, %vm1269
        %v1271 = vsel %vm1270, %v1262, %v1267
        %v1272 = vrsqrt.pop %v1239
        %v1273 = vmul.f32 %v1272, %v1239
        %v1274 = vmul.f32 %v1273, %v1272
        %v1275 = vmul.f32 0.5, %v1274
        %v1276 = vsub.f32 1.5, %v1275
        %v1277 = vmul.f32 %v1272, %v1276
        %vm1278 = vweird.f32 %v1239
        %vm1279 = vweird.f32 %v1272
        %vm1280 = vmor %vm1278, %vm1279
        %v1281 = vsel %vm1280, %v1272, %v1277
        %v1282 = vrsqrt.pop %v1240
        %v1283 = vmul.f32 %v1282, %v1240
        %v1284 = vmul.f32 %v1283, %v1282
        %v1285 = vmul.f32 0.5, %v1284
        %v1286 = vsub.f32 1.5, %v1285
        %v1287 = vmul.f32 %v1282, %v1286
        %vm1288 = vweird.f32 %v1240
        %vm1289 = vweird.f32 %v1282
        %vm1290 = vmor %vm1288, %vm1289
        %v1291 = vsel %vm1290, %v1282, %v1287
        %v1292 = vrsqrt.pop %v1241
        %v1293 = vmul.f32 %v1292, %v1241
        %v1294 = vmul.f32 %v1293, %v1292
        %v1295 = vmul.f32 0.5, %v1294
        %v1296 = vsub.f32 1.5, %v1295
        %v1297 = vmul.f32 %v1292, %v1296
        %vm1298 = vweird.f32 %v1241
        %vm1299 = vweird.f32 %v1292
        %vm1300 = vmor %vm1298, %vm1299
        %v1301 = vsel %vm1300, %v1292, %v1297
        %v1302 = vmul.f32 %v1206, %v1251
        %v1303 = vmul.f32 %v1207, %v1261
        %v1304 = vmul.f32 %v1208, %v1271
        %v1305 = vmul.f32 %v1209, %v1281
        %v1306 = vmul.f32 %v1210, %v1291
        %v1307 = vmul.f32 %v1211, %v1301
        %v1309 = vperm.slane %v1179, 0
        %v1311 = vmul.f32 %v1302, %v1309
        %v1312 = vmul.f32 %v1303, %v1309
        %v1313 = vmul.f32 %v1304, %v1309
        %v1314 = vmul.f32 %v1305, %v1309
        %v1315 = vmul.f32 %v1306, %v1309
        %v1316 = vmul.f32 %v1307, %v1309
        %v1318 = vperm.slane %v1180, 0
        %v1320 = vadd.f32 %v1311, %v1318
        %v1321 = vadd.f32 %v1312, %v1318
        %v1322 = vadd.f32 %v1313, %v1318
        %v1323 = vadd.f32 %v1314, %v1318
        %v1324 = vadd.f32 %v1315, %v1318
        %v1325 = vadd.f32 %v1316, %v1318
        %v1326 = vpack.c.bf16 %v1321, %v1320
        %v1327 = vpack.c.bf16 %v1323, %v1322
        %v1328 = vpack.c.bf16 %v1325, %v1324
        %v1329 = vld [vmem:[%s863] sm:$0xff]
        %v1330 = vld [vmem:[%s863 + $0x8] sm:$0xf]
        %v1331 = vld [vmem:[%s863 + $0xc] sm:$0xff]
        %v1332 = vld [vmem:[%s863 + $0x14] sm:$0xf]
        %v1333 = vld [vmem:[%s863 + $0x18] sm:$0xff]
        %v1334 = vld [vmem:[%s863 + $0x20] sm:$0xf]
        %v1335 = vld [vmem:[%s863 + $0x24] sm:$0xff]
        %v1336 = vld [vmem:[%s863 + $0x2c] sm:$0xf]
        %v1337 = vld [vmem:[%s863 + $0x30] sm:$0xff]
        %v1338 = vld [vmem:[%s863 + $0x38] sm:$0xf]
        %v1339 = vld [vmem:[%s863 + $0x3c] sm:$0xff]
        %v1340 = vld [vmem:[%s863 + $0x44] sm:$0xf]
        %v1341 = vld [vmem:[%s863 + $0x48] sm:$0xff]
        %v1342 = vld [vmem:[%s863 + $0x50] sm:$0xf]
        %v1343 = vld [vmem:[%s863 + $0x54] sm:$0xff]
        %v1344 = vld [vmem:[%s863 + $0x5c] sm:$0xf]
        %v1345 = vld [vmem:[%s863 + $0x60] sm:$0xff]
        %v1346 = vld [vmem:[%s863 + $0x68] sm:$0xf]
        %v1347 = vld [vmem:[%s863 + $0x6c] sm:$0xff]
        %v1348 = vld [vmem:[%s863 + $0x74] sm:$0xf]
        %v1349 = vld [vmem:[%s863 + $0x78] sm:$0xff]
        %v1350 = vld [vmem:[%s863 + $0x80] sm:$0xf]
        %v1351 = vld [vmem:[%s863 + $0x84] sm:$0xff]
        %v1352 = vld [vmem:[%s863 + $0x8c] sm:$0xf]
        %v1353 = vld [vmem:[%s863 + $0x90] sm:$0xff]
        %v1354 = vld [vmem:[%s863 + $0x98] sm:$0xf]
        %v1355 = vld [vmem:[%s863 + $0x9c] sm:$0xff]
        %v1356 = vld [vmem:[%s863 + $0xa4] sm:$0xf]
        %v1357 = vld [vmem:[%s863 + $0xa8] sm:$0xff]
        %v1358 = vld [vmem:[%s863 + $0xb0] sm:$0xf]
        %v1359 = vld [vmem:[%s863 + $0xb4] sm:$0xff]
        %v1360 = vld [vmem:[%s863 + $0xbc] sm:$0xf]
        %v1361 = vld [vmem:[%s873] sm:$0x7]
        %v1363 = vperm.slane %v1361, 0
        %v1364 = vperm.slane %v1361, 1
        %v1365 = vperm.slane %v1361, 2
        %v1401 = vunpack.c.l.b16 %v1329
        %v1402 = vunpack.c.h.b16 %v1329
        %v1403 = vunpack.c.l.b16 %v1330
        %v1404 = vunpack.c.l.b16 %v1331
        %v1405 = vunpack.c.h.b16 %v1331
        %v1406 = vunpack.c.l.b16 %v1332
        %v1407 = vunpack.c.l.b16 %v1333
        %v1408 = vunpack.c.h.b16 %v1333
        %v1409 = vunpack.c.l.b16 %v1334
        %v1410 = vunpack.c.l.b16 %v1335
        %v1411 = vunpack.c.h.b16 %v1335
        %v1412 = vunpack.c.l.b16 %v1336
        %v1413 = vunpack.c.l.b16 %v1337
        %v1414 = vunpack.c.h.b16 %v1337
        %v1415 = vunpack.c.l.b16 %v1338
        %v1416 = vunpack.c.l.b16 %v1339
        %v1417 = vunpack.c.h.b16 %v1339
        %v1418 = vunpack.c.l.b16 %v1340
        %v1419 = vunpack.c.l.b16 %v1341
        %v1420 = vunpack.c.h.b16 %v1341
        %v1421 = vunpack.c.l.b16 %v1342
        %v1422 = vunpack.c.l.b16 %v1343
        %v1423 = vunpack.c.h.b16 %v1343
        %v1424 = vunpack.c.l.b16 %v1344
        %v1425 = vunpack.c.l.b16 %v1345
        %v1426 = vunpack.c.h.b16 %v1345
        %v1427 = vunpack.c.l.b16 %v1346
        %v1428 = vunpack.c.l.b16 %v1347
        %v1429 = vunpack.c.h.b16 %v1347
        %v1430 = vunpack.c.l.b16 %v1348
        %v1431 = vunpack.c.l.b16 %v1349
        %v1432 = vunpack.c.h.b16 %v1349
        %v1433 = vunpack.c.l.b16 %v1350
        %v1434 = vunpack.c.l.b16 %v1351
        %v1435 = vunpack.c.h.b16 %v1351
        %v1436 = vunpack.c.l.b16 %v1352
        %v1437 = vunpack.c.l.b16 %v1353
        %v1438 = vunpack.c.h.b16 %v1353
        %v1439 = vunpack.c.l.b16 %v1354
        %v1440 = vunpack.c.l.b16 %v1355
        %v1441 = vunpack.c.h.b16 %v1355
        %v1442 = vunpack.c.l.b16 %v1356
        %v1443 = vunpack.c.l.b16 %v1357
        %v1444 = vunpack.c.h.b16 %v1357
        %v1445 = vunpack.c.l.b16 %v1358
        %v1446 = vunpack.c.l.b16 %v1359
        %v1447 = vunpack.c.h.b16 %v1359
        %v1448 = vunpack.c.l.b16 %v1360
        %v1449 = vpack.c.b16 %v1404, %v1401
        %v1450 = vpack.c.b16 %v1405, %v1402
        %v1451 = vpack.c.b16 %v1406, %v1403
        %v1452 = vpack.c.b16 %v1410, %v1407
        %v1453 = vpack.c.b16 %v1411, %v1408
        %v1454 = vpack.c.b16 %v1412, %v1409
        %v1455 = vpack.c.b16 %v1416, %v1413
        %v1456 = vpack.c.b16 %v1417, %v1414
        %v1457 = vpack.c.b16 %v1418, %v1415
        %v1458 = vpack.c.b16 %v1422, %v1419
        %v1459 = vpack.c.b16 %v1423, %v1420
        %v1460 = vpack.c.b16 %v1424, %v1421
        %v1461 = vpack.c.b16 %v1428, %v1425
        %v1462 = vpack.c.b16 %v1429, %v1426
        %v1463 = vpack.c.b16 %v1430, %v1427
        %v1464 = vpack.c.b16 %v1434, %v1431
        %v1465 = vpack.c.b16 %v1435, %v1432
        %v1466 = vpack.c.b16 %v1436, %v1433
        %v1467 = vpack.c.b16 %v1440, %v1437
        %v1468 = vpack.c.b16 %v1441, %v1438
        %v1469 = vpack.c.b16 %v1442, %v1439
        %v1470 = vpack.c.b16 %v1446, %v1443
        %v1471 = vpack.c.b16 %v1447, %v1444
        %v1472 = vpack.c.b16 %v1448, %v1445
        %1497 = vmatpush.bf16.msra.mxu0 %v1470
        %1498 = vmatpush.bf16.msra.mxu0 %v1467
        %1499 = vmatpush.bf16.msra.mxu0 %v1464
        %1500 = vmatpush.bf16.msra.mxu0 %v1461
        %1501 = vmatpush.bf16.msra.mxu0 %v1458
        %1502 = vmatpush.bf16.msra.mxu0 %v1455
        %1503 = vmatpush.bf16.msra.mxu0 %v1452
        %1504 = vmatpush.bf16.msra.mxu0 %v1449
        %1505 = vmatmul.bf16.gmra.mxu0 %v1326
        %v1506 = vpop.f32.mrf.mxu0
        %v1507 = vadd.f32 %v1363, %v1506
        %v1508 = vpop.f32.mrf.mxu0
        %v1509 = vadd.f32 %v1363, %v1508
        %1510 = vmatmul.bf16.gmra.mxu0 %v1327
        %v1511 = vpop.f32.mrf.mxu0
        %v1512 = vadd.f32 %v1363, %v1511
        %v1513 = vpop.f32.mrf.mxu0
        %v1514 = vadd.f32 %v1363, %v1513
        %1515 = vmatmul.bf16.gmra.mxu0 %v1328
        %v1516 = vpop.f32.mrf.mxu0
        %v1517 = vadd.f32 %v1363, %v1516
        %v1518 = vpop.f32.mrf.mxu0
        %v1519 = vadd.f32 %v1363, %v1518
        %1520 = vdwg.mxu0
        %1521 = vmatpush.bf16.msra.mxu0 %v1471
        %1522 = vmatpush.bf16.msra.mxu0 %v1468
        %1523 = vmatpush.bf16.msra.mxu0 %v1465
        %1524 = vmatpush.bf16.msra.mxu0 %v1462
        %1525 = vmatpush.bf16.msra.mxu0 %v1459
        %1526 = vmatpush.bf16.msra.mxu0 %v1456
        %1527 = vmatpush.bf16.msra.mxu0 %v1453
        %1528 = vmatpush.bf16.msra.mxu0 %v1450
        %1529 = vmatmul.bf16.gmra.mxu0 %v1326
        %v1530 = vpop.f32.mrf.mxu0
        %v1531 = vadd.f32 %v1364, %v1530
        %v1532 = vpop.f32.mrf.mxu0
        %v1533 = vadd.f32 %v1364, %v1532
        %1534 = vmatmul.bf16.gmra.mxu0 %v1327
        %v1535 = vpop.f32.mrf.mxu0
        %v1536 = vadd.f32 %v1364, %v1535
        %v1537 = vpop.f32.mrf.mxu0
        %v1538 = vadd.f32 %v1364, %v1537
        %1539 = vmatmul.bf16.gmra.mxu0 %v1328
        %v1540 = vpop.f32.mrf.mxu0
        %v1541 = vadd.f32 %v1364, %v1540
        %v1542 = vpop.f32.mrf.mxu0
        %v1543 = vadd.f32 %v1364, %v1542
        %1544 = vdwg.mxu0
        %1545 = vmatpush.bf16.msra.mxu0 %v1472
        %1546 = vmatpush.bf16.msra.mxu0 %v1469
        %1547 = vmatpush.bf16.msra.mxu0 %v1466
        %1548 = vmatpush.bf16.msra.mxu0 %v1463
        %1549 = vmatpush.bf16.msra.mxu0 %v1460
        %1550 = vmatpush.bf16.msra.mxu0 %v1457
        %1551 = vmatpush.bf16.msra.mxu0 %v1454
        %1552 = vmatpush.bf16.msra.mxu0 %v1451
        %1553 = vmatmul.bf16.gmra.mxu0 %v1326
        %v1554 = vpop.f32.mrf.mxu0
        %v1555 = vadd.f32 %v1365, %v1554
        %v1556 = vpop.f32.mrf.mxu0
        %v1557 = vadd.f32 %v1365, %v1556
        %1558 = vmatmul.bf16.gmra.mxu0 %v1327
        %v1559 = vpop.f32.mrf.mxu0
        %v1560 = vadd.f32 %v1365, %v1559
        %v1561 = vpop.f32.mrf.mxu0
        %v1562 = vadd.f32 %v1365, %v1561
        %1563 = vmatmul.bf16.gmra.mxu0 %v1328
        %v1564 = vpop.f32.mrf.mxu0
        %v1565 = vadd.f32 %v1365, %v1564
        %v1566 = vpop.f32.mrf.mxu0
        %v1567 = vadd.f32 %v1365, %v1566
        %1568 = vdwg.mxu0
        %1575 = vrot.lane.b32.xlu0 %v1507, 96
        %v1576 = vpop.permute.xlu0 %1575
        %1577 = vrot.lane.b32.xlu0 %v1509, 96
        %v1578 = vpop.permute.xlu0 %1577
        %1579 = vrot.lane.b32.xlu0 %v1512, 96
        %v1580 = vpop.permute.xlu0 %1579
        %1581 = vrot.lane.b32.xlu0 %v1514, 96
        %v1582 = vpop.permute.xlu0 %1581
        %1583 = vrot.lane.b32.xlu0 %v1517, 96
        %v1584 = vpop.permute.xlu0 %1583
        %1585 = vrot.lane.b32.xlu0 %v1519, 96
        %v1586 = vpop.permute.xlu0 %1585
        %1593 = vrot.lane.b32.xlu0 %v1507, 64
        %v1594 = vpop.permute.xlu0 %1593
        %1595 = vrot.lane.b32.xlu0 %v1509, 64
        %v1596 = vpop.permute.xlu0 %1595
        %1597 = vrot.lane.b32.xlu0 %v1512, 64
        %v1598 = vpop.permute.xlu0 %1597
        %1599 = vrot.lane.b32.xlu0 %v1514, 64
        %v1600 = vpop.permute.xlu0 %1599
        %1601 = vrot.lane.b32.xlu0 %v1517, 64
        %v1602 = vpop.permute.xlu0 %1601
        %1603 = vrot.lane.b32.xlu0 %v1519, 64
        %v1604 = vpop.permute.xlu0 %1603
        %1611 = vrot.lane.b32.xlu0 %v1507, 32
        %v1612 = vpop.permute.xlu0 %1611
        %1613 = vrot.lane.b32.xlu0 %v1509, 32
        %v1614 = vpop.permute.xlu0 %1613
        %1615 = vrot.lane.b32.xlu0 %v1512, 32
        %v1616 = vpop.permute.xlu0 %1615
        %1617 = vrot.lane.b32.xlu0 %v1514, 32
        %v1618 = vpop.permute.xlu0 %1617
        %1619 = vrot.lane.b32.xlu0 %v1517, 32
        %v1620 = vpop.permute.xlu0 %1619
        %1621 = vrot.lane.b32.xlu0 %v1519, 32
        %v1622 = vpop.permute.xlu0 %1621
        %v1629 = vrot.slane %v1594, 4
        %vm1630 = vcmask 1047556
        %v1631 = vsel %vm1630, %v1629, %v1507
        %v1632 = vrot.slane %v1507, 4
        %v1633 = vsel %vm1630, %v1594, %v1632
        %v1635 = vunpack.c.l.s4 1983009808
        %v1636 = vunpack.c.0.s8 %v1635
        %v1637 = vperm.slane %v1631, %v1636
        %v1639 = vunpack.c.l.s4 1983009808
        %v1640 = vunpack.c.0.s8 %v1639
        %v1641 = vperm.slane %v1633, %v1640
        %v1642 = vrot.slane %v1612, 4
        %v1643 = vsel %vm1630, %v1642, %v1576
        %v1644 = vrot.slane %v1576, 4
        %v1645 = vsel %vm1630, %v1612, %v1644
        %v1647 = vunpack.c.l.s4 1983009808
        %v1648 = vunpack.c.0.s8 %v1647
        %v1649 = vperm.slane %v1643, %v1648
        %v1651 = vunpack.c.l.s4 1983009808
        %v1652 = vunpack.c.0.s8 %v1651
        %v1653 = vperm.slane %v1645, %v1652
        %v1654 = vrot.slane %v1649, 4
        %v1655 = vsel %vm1630, %v1654, %v1637
        %v1656 = vrot.slane %v1637, 4
        %v1657 = vsel %vm1630, %v1649, %v1656
        %v1659 = vunpack.c.l.s4 1934713408
        %v1660 = vunpack.c.0.s8 %v1659
        %v1661 = vperm.slane %v1655, %v1660
        %v1663 = vunpack.c.l.s4 1934713408
        %v1664 = vunpack.c.0.s8 %v1663
        %v1665 = vperm.slane %v1657, %v1664
        %v1666 = vrot.slane %v1653, 4
        %v1667 = vsel %vm1630, %v1666, %v1641
        %v1668 = vrot.slane %v1641, 4
        %v1669 = vsel %vm1630, %v1653, %v1668
        %v1671 = vunpack.c.l.s4 1934713408
        %v1672 = vunpack.c.0.s8 %v1671
        %v1673 = vperm.slane %v1667, %v1672
        %v1675 = vunpack.c.l.s4 1934713408
        %v1676 = vunpack.c.0.s8 %v1675
        %v1677 = vperm.slane %v1669, %v1676
        %v1678 = vrot.slane %v1661, 4
        %v1679 = vsel %vm1630, 0.0, %v1678
        %v1680 = vrot.slane %v1665, 4
        %v1681 = vsel %vm1630, 0.0, %v1680
        %v1682 = vrot.slane %v1673, 4
        %v1683 = vsel %vm1630, 0.0, %v1682
        %v1684 = vrot.slane %v1677, 4
        %v1685 = vsel %vm1630, 0.0, %v1684
        %v1686 = vrot.slane %v1596, 4
        %v1687 = vsel %vm1630, %v1686, %v1509
        %v1688 = vrot.slane %v1509, 4
        %v1689 = vsel %vm1630, %v1596, %v1688
        %v1691 = vunpack.c.l.s4 1983009808
        %v1692 = vunpack.c.0.s8 %v1691
        %v1693 = vperm.slane %v1687, %v1692
        %v1695 = vunpack.c.l.s4 1983009808
        %v1696 = vunpack.c.0.s8 %v1695
        %v1697 = vperm.slane %v1689, %v1696
        %v1698 = vrot.slane %v1614, 4
        %v1699 = vsel %vm1630, %v1698, %v1578
        %v1700 = vrot.slane %v1578, 4
        %v1701 = vsel %vm1630, %v1614, %v1700
        %v1703 = vunpack.c.l.s4 1983009808
        %v1704 = vunpack.c.0.s8 %v1703
        %v1705 = vperm.slane %v1699, %v1704
        %v1707 = vunpack.c.l.s4 1983009808
        %v1708 = vunpack.c.0.s8 %v1707
        %v1709 = vperm.slane %v1701, %v1708
        %v1710 = vrot.slane %v1705, 4
        %v1711 = vsel %vm1630, %v1710, %v1693
        %v1712 = vrot.slane %v1693, 4
        %v1713 = vsel %vm1630, %v1705, %v1712
        %v1715 = vunpack.c.l.s4 1934713408
        %v1716 = vunpack.c.0.s8 %v1715
        %v1717 = vperm.slane %v1711, %v1716
        %v1719 = vunpack.c.l.s4 1934713408
        %v1720 = vunpack.c.0.s8 %v1719
        %v1721 = vperm.slane %v1713, %v1720
        %v1722 = vrot.slane %v1709, 4
        %v1723 = vsel %vm1630, %v1722, %v1697
        %v1724 = vrot.slane %v1697, 4
        %v1725 = vsel %vm1630, %v1709, %v1724
        %v1727 = vunpack.c.l.s4 1934713408
        %v1728 = vunpack.c.0.s8 %v1727
        %v1729 = vperm.slane %v1723, %v1728
        %v1731 = vunpack.c.l.s4 1934713408
        %v1732 = vunpack.c.0.s8 %v1731
        %v1733 = vperm.slane %v1725, %v1732
        %v1734 = vrot.slane %v1717, 4
        %v1735 = vsel %vm1630, 0.0, %v1734
        %v1736 = vrot.slane %v1721, 4
        %v1737 = vsel %vm1630, 0.0, %v1736
        %v1738 = vrot.slane %v1729, 4
        %v1739 = vsel %vm1630, 0.0, %v1738
        %v1740 = vrot.slane %v1733, 4
        %v1741 = vsel %vm1630, 0.0, %v1740
        %v1742 = vrot.slane %v1598, 4
        %v1743 = vsel %vm1630, %v1742, %v1512
        %v1744 = vrot.slane %v1512, 4
        %v1745 = vsel %vm1630, %v1598, %v1744
        %v1747 = vunpack.c.l.s4 1983009808
        %v1748 = vunpack.c.0.s8 %v1747
        %v1749 = vperm.slane %v1743, %v1748
        %v1751 = vunpack.c.l.s4 1983009808
        %v1752 = vunpack.c.0.s8 %v1751
        %v1753 = vperm.slane %v1745, %v1752
        %v1754 = vrot.slane %v1616, 4
        %v1755 = vsel %vm1630, %v1754, %v1580
        %v1756 = vrot.slane %v1580, 4
        %v1757 = vsel %vm1630, %v1616, %v1756
        %v1759 = vunpack.c.l.s4 1983009808
        %v1760 = vunpack.c.0.s8 %v1759
        %v1761 = vperm.slane %v1755, %v1760
        %v1763 = vunpack.c.l.s4 1983009808
        %v1764 = vunpack.c.0.s8 %v1763
        %v1765 = vperm.slane %v1757, %v1764
        %v1766 = vrot.slane %v1761, 4
        %v1767 = vsel %vm1630, %v1766, %v1749
        %v1768 = vrot.slane %v1749, 4
        %v1769 = vsel %vm1630, %v1761, %v1768
        %v1771 = vunpack.c.l.s4 1934713408
        %v1772 = vunpack.c.0.s8 %v1771
        %v1773 = vperm.slane %v1767, %v1772
        %v1775 = vunpack.c.l.s4 1934713408
        %v1776 = vunpack.c.0.s8 %v1775
        %v1777 = vperm.slane %v1769, %v1776
        %v1778 = vrot.slane %v1765, 4
        %v1779 = vsel %vm1630, %v1778, %v1753
        %v1780 = vrot.slane %v1753, 4
        %v1781 = vsel %vm1630, %v1765, %v1780
        %v1783 = vunpack.c.l.s4 1934713408
        %v1784 = vunpack.c.0.s8 %v1783
        %v1785 = vperm.slane %v1779, %v1784
        %v1787 = vunpack.c.l.s4 1934713408
        %v1788 = vunpack.c.0.s8 %v1787
        %v1789 = vperm.slane %v1781, %v1788
        %v1790 = vrot.slane %v1773, 4
        %v1791 = vsel %vm1630, 0.0, %v1790
        %v1792 = vrot.slane %v1777, 4
        %v1793 = vsel %vm1630, 0.0, %v1792
        %v1794 = vrot.slane %v1785, 4
        %v1795 = vsel %vm1630, 0.0, %v1794
        %v1796 = vrot.slane %v1789, 4
        %v1797 = vsel %vm1630, 0.0, %v1796
        %v1798 = vrot.slane %v1600, 4
        %v1799 = vsel %vm1630, %v1798, %v1514
        %v1800 = vrot.slane %v1514, 4
        %v1801 = vsel %vm1630, %v1600, %v1800
        %v1803 = vunpack.c.l.s4 1983009808
        %v1804 = vunpack.c.0.s8 %v1803
        %v1805 = vperm.slane %v1799, %v1804
        %v1807 = vunpack.c.l.s4 1983009808
        %v1808 = vunpack.c.0.s8 %v1807
        %v1809 = vperm.slane %v1801, %v1808
        %v1810 = vrot.slane %v1618, 4
        %v1811 = vsel %vm1630, %v1810, %v1582
        %v1812 = vrot.slane %v1582, 4
        %v1813 = vsel %vm1630, %v1618, %v1812
        %v1815 = vunpack.c.l.s4 1983009808
        %v1816 = vunpack.c.0.s8 %v1815
        %v1817 = vperm.slane %v1811, %v1816
        %v1819 = vunpack.c.l.s4 1983009808
        %v1820 = vunpack.c.0.s8 %v1819
        %v1821 = vperm.slane %v1813, %v1820
        %v1822 = vrot.slane %v1817, 4
        %v1823 = vsel %vm1630, %v1822, %v1805
        %v1824 = vrot.slane %v1805, 4
        %v1825 = vsel %vm1630, %v1817, %v1824
        %v1827 = vunpack.c.l.s4 1934713408
        %v1828 = vunpack.c.0.s8 %v1827
        %v1829 = vperm.slane %v1823, %v1828
        %v1831 = vunpack.c.l.s4 1934713408
        %v1832 = vunpack.c.0.s8 %v1831
        %v1833 = vperm.slane %v1825, %v1832
        %v1834 = vrot.slane %v1821, 4
        %v1835 = vsel %vm1630, %v1834, %v1809
        %v1836 = vrot.slane %v1809, 4
        %v1837 = vsel %vm1630, %v1821, %v1836
        %v1839 = vunpack.c.l.s4 1934713408
        %v1840 = vunpack.c.0.s8 %v1839
        %v1841 = vperm.slane %v1835, %v1840
        %v1843 = vunpack.c.l.s4 1934713408
        %v1844 = vunpack.c.0.s8 %v1843
        %v1845 = vperm.slane %v1837, %v1844
        %v1846 = vrot.slane %v1829, 4
        %v1847 = vsel %vm1630, 0.0, %v1846
        %v1848 = vrot.slane %v1833, 4
        %v1849 = vsel %vm1630, 0.0, %v1848
        %v1850 = vrot.slane %v1841, 4
        %v1851 = vsel %vm1630, 0.0, %v1850
        %v1852 = vrot.slane %v1845, 4
        %v1853 = vsel %vm1630, 0.0, %v1852
        %v1854 = vrot.slane %v1602, 4
        %v1855 = vsel %vm1630, %v1854, %v1517
        %v1856 = vrot.slane %v1517, 4
        %v1857 = vsel %vm1630, %v1602, %v1856
        %v1859 = vunpack.c.l.s4 1983009808
        %v1860 = vunpack.c.0.s8 %v1859
        %v1861 = vperm.slane %v1855, %v1860
        %v1863 = vunpack.c.l.s4 1983009808
        %v1864 = vunpack.c.0.s8 %v1863
        %v1865 = vperm.slane %v1857, %v1864
        %v1866 = vrot.slane %v1620, 4
        %v1867 = vsel %vm1630, %v1866, %v1584
        %v1868 = vrot.slane %v1584, 4
        %v1869 = vsel %vm1630, %v1620, %v1868
        %v1871 = vunpack.c.l.s4 1983009808
        %v1872 = vunpack.c.0.s8 %v1871
        %v1873 = vperm.slane %v1867, %v1872
        %v1875 = vunpack.c.l.s4 1983009808
        %v1876 = vunpack.c.0.s8 %v1875
        %v1877 = vperm.slane %v1869, %v1876
        %v1878 = vrot.slane %v1873, 4
        %v1879 = vsel %vm1630, %v1878, %v1861
        %v1880 = vrot.slane %v1861, 4
        %v1881 = vsel %vm1630, %v1873, %v1880
        %v1883 = vunpack.c.l.s4 1934713408
        %v1884 = vunpack.c.0.s8 %v1883
        %v1885 = vperm.slane %v1879, %v1884
        %v1887 = vunpack.c.l.s4 1934713408
        %v1888 = vunpack.c.0.s8 %v1887
        %v1889 = vperm.slane %v1881, %v1888
        %v1890 = vrot.slane %v1877, 4
        %v1891 = vsel %vm1630, %v1890, %v1865
        %v1892 = vrot.slane %v1865, 4
        %v1893 = vsel %vm1630, %v1877, %v1892
        %v1895 = vunpack.c.l.s4 1934713408
        %v1896 = vunpack.c.0.s8 %v1895
        %v1897 = vperm.slane %v1891, %v1896
        %v1899 = vunpack.c.l.s4 1934713408
        %v1900 = vunpack.c.0.s8 %v1899
        %v1901 = vperm.slane %v1893, %v1900
        %v1902 = vrot.slane %v1885, 4
        %v1903 = vsel %vm1630, 0.0, %v1902
        %v1904 = vrot.slane %v1889, 4
        %v1905 = vsel %vm1630, 0.0, %v1904
        %v1906 = vrot.slane %v1897, 4
        %v1907 = vsel %vm1630, 0.0, %v1906
        %v1908 = vrot.slane %v1901, 4
        %v1909 = vsel %vm1630, 0.0, %v1908
        %v1910 = vrot.slane %v1604, 4
        %v1911 = vsel %vm1630, %v1910, %v1519
        %v1912 = vrot.slane %v1519, 4
        %v1913 = vsel %vm1630, %v1604, %v1912
        %v1915 = vunpack.c.l.s4 1983009808
        %v1916 = vunpack.c.0.s8 %v1915
        %v1917 = vperm.slane %v1911, %v1916
        %v1919 = vunpack.c.l.s4 1983009808
        %v1920 = vunpack.c.0.s8 %v1919
        %v1921 = vperm.slane %v1913, %v1920
        %v1922 = vrot.slane %v1622, 4
        %v1923 = vsel %vm1630, %v1922, %v1586
        %v1924 = vrot.slane %v1586, 4
        %v1925 = vsel %vm1630, %v1622, %v1924
        %v1927 = vunpack.c.l.s4 1983009808
        %v1928 = vunpack.c.0.s8 %v1927
        %v1929 = vperm.slane %v1923, %v1928
        %v1931 = vunpack.c.l.s4 1983009808
        %v1932 = vunpack.c.0.s8 %v1931
        %v1933 = vperm.slane %v1925, %v1932
        %v1934 = vrot.slane %v1929, 4
        %v1935 = vsel %vm1630, %v1934, %v1917
        %v1936 = vrot.slane %v1917, 4
        %v1937 = vsel %vm1630, %v1929, %v1936
        %v1939 = vunpack.c.l.s4 1934713408
        %v1940 = vunpack.c.0.s8 %v1939
        %v1941 = vperm.slane %v1935, %v1940
        %v1943 = vunpack.c.l.s4 1934713408
        %v1944 = vunpack.c.0.s8 %v1943
        %v1945 = vperm.slane %v1937, %v1944
        %v1946 = vrot.slane %v1933, 4
        %v1947 = vsel %vm1630, %v1946, %v1921
        %v1948 = vrot.slane %v1921, 4
        %v1949 = vsel %vm1630, %v1933, %v1948
        %v1951 = vunpack.c.l.s4 1934713408
        %v1952 = vunpack.c.0.s8 %v1951
        %v1953 = vperm.slane %v1947, %v1952
        %v1955 = vunpack.c.l.s4 1934713408
        %v1956 = vunpack.c.0.s8 %v1955
        %v1957 = vperm.slane %v1949, %v1956
        %v1958 = vrot.slane %v1941, 4
        %v1959 = vsel %vm1630, 0.0, %v1958
        %v1960 = vrot.slane %v1945, 4
        %v1961 = vsel %vm1630, 0.0, %v1960
        %v1962 = vrot.slane %v1953, 4
        %v1963 = vsel %vm1630, 0.0, %v1962
        %v1964 = vrot.slane %v1957, 4
        %v1965 = vsel %vm1630, 0.0, %v1964
        %v1966 = vsel %vm1630, %v1680, %v1661
        %v1968 = vunpack.c.l.s4 1983009808
        %v1969 = vunpack.c.0.s8 %v1968
        %v1970 = vperm.slane %v1966, %v1969
        %v1971 = vrot.slane %v1681, 4
        %v1972 = vsel %vm1630, %v1971, %v1679
        %v1974 = vunpack.c.l.s4 1983009808
        %v1975 = vunpack.c.0.s8 %v1974
        %v1976 = vperm.slane %v1972, %v1975
        %v1977 = vsel %vm1630, %v1684, %v1673
        %v1979 = vunpack.c.l.s4 1983009808
        %v1980 = vunpack.c.0.s8 %v1979
        %v1981 = vperm.slane %v1977, %v1980
        %v1982 = vrot.slane %v1685, 4
        %v1983 = vsel %vm1630, %v1982, %v1683
        %v1985 = vunpack.c.l.s4 1983009808
        %v1986 = vunpack.c.0.s8 %v1985
        %v1987 = vperm.slane %v1983, %v1986
        %v1988 = vrot.slane %v1976, 4
        %v1989 = vsel %vm1630, %v1988, %v1970
        %v1990 = vrot.slane %v1970, 4
        %v1991 = vsel %vm1630, %v1976, %v1990
        %v1993 = vunpack.c.l.s4 1934713408
        %v1994 = vunpack.c.0.s8 %v1993
        %v1995 = vperm.slane %v1989, %v1994
        %v1997 = vunpack.c.l.s4 1934713408
        %v1998 = vunpack.c.0.s8 %v1997
        %v1999 = vperm.slane %v1991, %v1998
        %v2000 = vrot.slane %v1987, 4
        %v2001 = vsel %vm1630, %v2000, %v1981
        %v2002 = vrot.slane %v1981, 4
        %v2003 = vsel %vm1630, %v1987, %v2002
        %v2005 = vunpack.c.l.s4 1934713408
        %v2006 = vunpack.c.0.s8 %v2005
        %v2007 = vperm.slane %v2001, %v2006
        %v2009 = vunpack.c.l.s4 1934713408
        %v2010 = vunpack.c.0.s8 %v2009
        %v2011 = vperm.slane %v2003, %v2010
        %v2012 = vrot.slane %v2007, 4
        %v2013 = vsel %vm1630, %v2012, %v1995
        %v2014 = vrot.slane %v1995, 4
        %v2015 = vsel %vm1630, %v2007, %v2014
        %v2016 = vrot.slane %v2011, 4
        %v2017 = vsel %vm1630, %v2016, %v1999
        %v2018 = vrot.slane %v1999, 4
        %v2019 = vsel %vm1630, %v2011, %v2018
        %v2020 = vsel %vm1630, %v1736, %v1717
        %v2022 = vunpack.c.l.s4 1983009808
        %v2023 = vunpack.c.0.s8 %v2022
        %v2024 = vperm.slane %v2020, %v2023
        %v2025 = vrot.slane %v1737, 4
        %v2026 = vsel %vm1630, %v2025, %v1735
        %v2028 = vunpack.c.l.s4 1983009808
        %v2029 = vunpack.c.0.s8 %v2028
        %v2030 = vperm.slane %v2026, %v2029
        %v2031 = vsel %vm1630, %v1740, %v1729
        %v2033 = vunpack.c.l.s4 1983009808
        %v2034 = vunpack.c.0.s8 %v2033
        %v2035 = vperm.slane %v2031, %v2034
        %v2036 = vrot.slane %v1741, 4
        %v2037 = vsel %vm1630, %v2036, %v1739
        %v2039 = vunpack.c.l.s4 1983009808
        %v2040 = vunpack.c.0.s8 %v2039
        %v2041 = vperm.slane %v2037, %v2040
        %v2042 = vrot.slane %v2030, 4
        %v2043 = vsel %vm1630, %v2042, %v2024
        %v2044 = vrot.slane %v2024, 4
        %v2045 = vsel %vm1630, %v2030, %v2044
        %v2047 = vunpack.c.l.s4 1934713408
        %v2048 = vunpack.c.0.s8 %v2047
        %v2049 = vperm.slane %v2043, %v2048
        %v2051 = vunpack.c.l.s4 1934713408
        %v2052 = vunpack.c.0.s8 %v2051
        %v2053 = vperm.slane %v2045, %v2052
        %v2054 = vrot.slane %v2041, 4
        %v2055 = vsel %vm1630, %v2054, %v2035
        %v2056 = vrot.slane %v2035, 4
        %v2057 = vsel %vm1630, %v2041, %v2056
        %v2059 = vunpack.c.l.s4 1934713408
        %v2060 = vunpack.c.0.s8 %v2059
        %v2061 = vperm.slane %v2055, %v2060
        %v2063 = vunpack.c.l.s4 1934713408
        %v2064 = vunpack.c.0.s8 %v2063
        %v2065 = vperm.slane %v2057, %v2064
        %v2066 = vrot.slane %v2061, 4
        %v2067 = vsel %vm1630, %v2066, %v2049
        %v2068 = vrot.slane %v2049, 4
        %v2069 = vsel %vm1630, %v2061, %v2068
        %v2070 = vrot.slane %v2065, 4
        %v2071 = vsel %vm1630, %v2070, %v2053
        %v2072 = vrot.slane %v2053, 4
        %v2073 = vsel %vm1630, %v2065, %v2072
        %v2074 = vsel %vm1630, %v1792, %v1773
        %v2076 = vunpack.c.l.s4 1983009808
        %v2077 = vunpack.c.0.s8 %v2076
        %v2078 = vperm.slane %v2074, %v2077
        %v2079 = vrot.slane %v1793, 4
        %v2080 = vsel %vm1630, %v2079, %v1791
        %v2082 = vunpack.c.l.s4 1983009808
        %v2083 = vunpack.c.0.s8 %v2082
        %v2084 = vperm.slane %v2080, %v2083
        %v2085 = vsel %vm1630, %v1796, %v1785
        %v2087 = vunpack.c.l.s4 1983009808
        %v2088 = vunpack.c.0.s8 %v2087
        %v2089 = vperm.slane %v2085, %v2088
        %v2090 = vrot.slane %v1797, 4
        %v2091 = vsel %vm1630, %v2090, %v1795
        %v2093 = vunpack.c.l.s4 1983009808
        %v2094 = vunpack.c.0.s8 %v2093
        %v2095 = vperm.slane %v2091, %v2094
        %v2096 = vrot.slane %v2084, 4
        %v2097 = vsel %vm1630, %v2096, %v2078
        %v2098 = vrot.slane %v2078, 4
        %v2099 = vsel %vm1630, %v2084, %v2098
        %v2101 = vunpack.c.l.s4 1934713408
        %v2102 = vunpack.c.0.s8 %v2101
        %v2103 = vperm.slane %v2097, %v2102
        %v2105 = vunpack.c.l.s4 1934713408
        %v2106 = vunpack.c.0.s8 %v2105
        %v2107 = vperm.slane %v2099, %v2106
        %v2108 = vrot.slane %v2095, 4
        %v2109 = vsel %vm1630, %v2108, %v2089
        %v2110 = vrot.slane %v2089, 4
        %v2111 = vsel %vm1630, %v2095, %v2110
        %v2113 = vunpack.c.l.s4 1934713408
        %v2114 = vunpack.c.0.s8 %v2113
        %v2115 = vperm.slane %v2109, %v2114
        %v2117 = vunpack.c.l.s4 1934713408
        %v2118 = vunpack.c.0.s8 %v2117
        %v2119 = vperm.slane %v2111, %v2118
        %v2120 = vrot.slane %v2115, 4
        %v2121 = vsel %vm1630, %v2120, %v2103
        %v2122 = vrot.slane %v2103, 4
        %v2123 = vsel %vm1630, %v2115, %v2122
        %v2124 = vrot.slane %v2119, 4
        %v2125 = vsel %vm1630, %v2124, %v2107
        %v2126 = vrot.slane %v2107, 4
        %v2127 = vsel %vm1630, %v2119, %v2126
        %v2128 = vsel %vm1630, %v1848, %v1829
        %v2130 = vunpack.c.l.s4 1983009808
        %v2131 = vunpack.c.0.s8 %v2130
        %v2132 = vperm.slane %v2128, %v2131
        %v2133 = vrot.slane %v1849, 4
        %v2134 = vsel %vm1630, %v2133, %v1847
        %v2136 = vunpack.c.l.s4 1983009808
        %v2137 = vunpack.c.0.s8 %v2136
        %v2138 = vperm.slane %v2134, %v2137
        %v2139 = vsel %vm1630, %v1852, %v1841
        %v2141 = vunpack.c.l.s4 1983009808
        %v2142 = vunpack.c.0.s8 %v2141
        %v2143 = vperm.slane %v2139, %v2142
        %v2144 = vrot.slane %v1853, 4
        %v2145 = vsel %vm1630, %v2144, %v1851
        %v2147 = vunpack.c.l.s4 1983009808
        %v2148 = vunpack.c.0.s8 %v2147
        %v2149 = vperm.slane %v2145, %v2148
        %v2150 = vrot.slane %v2138, 4
        %v2151 = vsel %vm1630, %v2150, %v2132
        %v2152 = vrot.slane %v2132, 4
        %v2153 = vsel %vm1630, %v2138, %v2152
        %v2155 = vunpack.c.l.s4 1934713408
        %v2156 = vunpack.c.0.s8 %v2155
        %v2157 = vperm.slane %v2151, %v2156
        %v2159 = vunpack.c.l.s4 1934713408
        %v2160 = vunpack.c.0.s8 %v2159
        %v2161 = vperm.slane %v2153, %v2160
        %v2162 = vrot.slane %v2149, 4
        %v2163 = vsel %vm1630, %v2162, %v2143
        %v2164 = vrot.slane %v2143, 4
        %v2165 = vsel %vm1630, %v2149, %v2164
        %v2167 = vunpack.c.l.s4 1934713408
        %v2168 = vunpack.c.0.s8 %v2167
        %v2169 = vperm.slane %v2163, %v2168
        %v2171 = vunpack.c.l.s4 1934713408
        %v2172 = vunpack.c.0.s8 %v2171
        %v2173 = vperm.slane %v2165, %v2172
        %v2174 = vrot.slane %v2169, 4
        %v2175 = vsel %vm1630, %v2174, %v2157
        %v2176 = vrot.slane %v2157, 4
        %v2177 = vsel %vm1630, %v2169, %v2176
        %v2178 = vrot.slane %v2173, 4
        %v2179 = vsel %vm1630, %v2178, %v2161
        %v2180 = vrot.slane %v2161, 4
        %v2181 = vsel %vm1630, %v2173, %v2180
        %v2182 = vsel %vm1630, %v1904, %v1885
        %v2184 = vunpack.c.l.s4 1983009808
        %v2185 = vunpack.c.0.s8 %v2184
        %v2186 = vperm.slane %v2182, %v2185
        %v2187 = vrot.slane %v1905, 4
        %v2188 = vsel %vm1630, %v2187, %v1903
        %v2190 = vunpack.c.l.s4 1983009808
        %v2191 = vunpack.c.0.s8 %v2190
        %v2192 = vperm.slane %v2188, %v2191
        %v2193 = vsel %vm1630, %v1908, %v1897
        %v2195 = vunpack.c.l.s4 1983009808
        %v2196 = vunpack.c.0.s8 %v2195
        %v2197 = vperm.slane %v2193, %v2196
        %v2198 = vrot.slane %v1909, 4
        %v2199 = vsel %vm1630, %v2198, %v1907
        %v2201 = vunpack.c.l.s4 1983009808
        %v2202 = vunpack.c.0.s8 %v2201
        %v2203 = vperm.slane %v2199, %v2202
        %v2204 = vrot.slane %v2192, 4
        %v2205 = vsel %vm1630, %v2204, %v2186
        %v2206 = vrot.slane %v2186, 4
        %v2207 = vsel %vm1630, %v2192, %v2206
        %v2209 = vunpack.c.l.s4 1934713408
        %v2210 = vunpack.c.0.s8 %v2209
        %v2211 = vperm.slane %v2205, %v2210
        %v2213 = vunpack.c.l.s4 1934713408
        %v2214 = vunpack.c.0.s8 %v2213
        %v2215 = vperm.slane %v2207, %v2214
        %v2216 = vrot.slane %v2203, 4
        %v2217 = vsel %vm1630, %v2216, %v2197
        %v2218 = vrot.slane %v2197, 4
        %v2219 = vsel %vm1630, %v2203, %v2218
        %v2221 = vunpack.c.l.s4 1934713408
        %v2222 = vunpack.c.0.s8 %v2221
        %v2223 = vperm.slane %v2217, %v2222
        %v2225 = vunpack.c.l.s4 1934713408
        %v2226 = vunpack.c.0.s8 %v2225
        %v2227 = vperm.slane %v2219, %v2226
        %v2228 = vrot.slane %v2223, 4
        %v2229 = vsel %vm1630, %v2228, %v2211
        %v2230 = vrot.slane %v2211, 4
        %v2231 = vsel %vm1630, %v2223, %v2230
        %v2232 = vrot.slane %v2227, 4
        %v2233 = vsel %vm1630, %v2232, %v2215
        %v2234 = vrot.slane %v2215, 4
        %v2235 = vsel %vm1630, %v2227, %v2234
        %v2236 = vsel %vm1630, %v1960, %v1941
        %v2238 = vunpack.c.l.s4 1983009808
        %v2239 = vunpack.c.0.s8 %v2238
        %v2240 = vperm.slane %v2236, %v2239
        %v2241 = vrot.slane %v1961, 4
        %v2242 = vsel %vm1630, %v2241, %v1959
        %v2244 = vunpack.c.l.s4 1983009808
        %v2245 = vunpack.c.0.s8 %v2244
        %v2246 = vperm.slane %v2242, %v2245
        %v2247 = vsel %vm1630, %v1964, %v1953
        %v2249 = vunpack.c.l.s4 1983009808
        %v2250 = vunpack.c.0.s8 %v2249
        %v2251 = vperm.slane %v2247, %v2250
        %v2252 = vrot.slane %v1965, 4
        %v2253 = vsel %vm1630, %v2252, %v1963
        %v2255 = vunpack.c.l.s4 1983009808
        %v2256 = vunpack.c.0.s8 %v2255
        %v2257 = vperm.slane %v2253, %v2256
        %v2258 = vrot.slane %v2246, 4
        %v2259 = vsel %vm1630, %v2258, %v2240
        %v2260 = vrot.slane %v2240, 4
        %v2261 = vsel %vm1630, %v2246, %v2260
        %v2263 = vunpack.c.l.s4 1934713408
        %v2264 = vunpack.c.0.s8 %v2263
        %v2265 = vperm.slane %v2259, %v2264
        %v2267 = vunpack.c.l.s4 1934713408
        %v2268 = vunpack.c.0.s8 %v2267
        %v2269 = vperm.slane %v2261, %v2268
        %v2270 = vrot.slane %v2257, 4
        %v2271 = vsel %vm1630, %v2270, %v2251
        %v2272 = vrot.slane %v2251, 4
        %v2273 = vsel %vm1630, %v2257, %v2272
        %v2275 = vunpack.c.l.s4 1934713408
        %v2276 = vunpack.c.0.s8 %v2275
        %v2277 = vperm.slane %v2271, %v2276
        %v2279 = vunpack.c.l.s4 1934713408
        %v2280 = vunpack.c.0.s8 %v2279
        %v2281 = vperm.slane %v2273, %v2280
        %v2282 = vrot.slane %v2277, 4
        %v2283 = vsel %vm1630, %v2282, %v2265
        %v2284 = vrot.slane %v2265, 4
        %v2285 = vsel %vm1630, %v2277, %v2284
        %v2286 = vrot.slane %v2281, 4
        %v2287 = vsel %vm1630, %v2286, %v2269
        %v2288 = vrot.slane %v2269, 4
        %v2289 = vsel %vm1630, %v2281, %v2288
        %v2290 = vpack.c.bf16 %v2013, %v2013
        %v2291 = vpack.c.bf16 %v2067, %v2067
        %v2292 = vpack.c.bf16 %v2121, %v2121
        %v2293 = vpack.c.bf16 %v2175, %v2175
        %v2294 = vpack.c.bf16 %v2229, %v2229
        %v2295 = vpack.c.bf16 %v2283, %v2283
        %v2296 = vpack.c.bf16 %v2015, %v2015
        %v2297 = vpack.c.bf16 %v2069, %v2069
        %v2298 = vpack.c.bf16 %v2123, %v2123
        %v2299 = vpack.c.bf16 %v2177, %v2177
        %v2300 = vpack.c.bf16 %v2231, %v2231
        %v2301 = vpack.c.bf16 %v2285, %v2285
        %v2302 = vpack.c.bf16 %v2017, %v2017
        %v2303 = vpack.c.bf16 %v2071, %v2071
        %v2304 = vpack.c.bf16 %v2125, %v2125
        %v2305 = vpack.c.bf16 %v2179, %v2179
        %v2306 = vpack.c.bf16 %v2233, %v2233
        %v2307 = vpack.c.bf16 %v2287, %v2287
        %v2308 = vpack.c.bf16 %v2019, %v2019
        %v2309 = vpack.c.bf16 %v2073, %v2073
        %v2310 = vpack.c.bf16 %v2127, %v2127
        %v2311 = vpack.c.bf16 %v2181, %v2181
        %v2312 = vpack.c.bf16 %v2235, %v2235
        %v2313 = vpack.c.bf16 %v2289, %v2289
        %2320 = vrot.lane.b32.xlu0 %v1531, 96
        %v2321 = vpop.permute.xlu0 %2320
        %2322 = vrot.lane.b32.xlu0 %v1533, 96
        %v2323 = vpop.permute.xlu0 %2322
        %2324 = vrot.lane.b32.xlu0 %v1536, 96
        %v2325 = vpop.permute.xlu0 %2324
        %2326 = vrot.lane.b32.xlu0 %v1538, 96
        %v2327 = vpop.permute.xlu0 %2326
        %2328 = vrot.lane.b32.xlu0 %v1541, 96
        %v2329 = vpop.permute.xlu0 %2328
        %2330 = vrot.lane.b32.xlu0 %v1543, 96
        %v2331 = vpop.permute.xlu0 %2330
        %2338 = vrot.lane.b32.xlu0 %v1531, 64
        %v2339 = vpop.permute.xlu0 %2338
        %2340 = vrot.lane.b32.xlu0 %v1533, 64
        %v2341 = vpop.permute.xlu0 %2340
        %2342 = vrot.lane.b32.xlu0 %v1536, 64
        %v2343 = vpop.permute.xlu0 %2342
        %2344 = vrot.lane.b32.xlu0 %v1538, 64
        %v2345 = vpop.permute.xlu0 %2344
        %2346 = vrot.lane.b32.xlu0 %v1541, 64
        %v2347 = vpop.permute.xlu0 %2346
        %2348 = vrot.lane.b32.xlu0 %v1543, 64
        %v2349 = vpop.permute.xlu0 %2348
        %2356 = vrot.lane.b32.xlu0 %v1531, 32
        %v2357 = vpop.permute.xlu0 %2356
        %2358 = vrot.lane.b32.xlu0 %v1533, 32
        %v2359 = vpop.permute.xlu0 %2358
        %2360 = vrot.lane.b32.xlu0 %v1536, 32
        %v2361 = vpop.permute.xlu0 %2360
        %2362 = vrot.lane.b32.xlu0 %v1538, 32
        %v2363 = vpop.permute.xlu0 %2362
        %2364 = vrot.lane.b32.xlu0 %v1541, 32
        %v2365 = vpop.permute.xlu0 %2364
        %2366 = vrot.lane.b32.xlu0 %v1543, 32
        %v2367 = vpop.permute.xlu0 %2366
        %v2374 = vrot.slane %v2339, 4
        %v2375 = vsel %vm1630, %v2374, %v1531
        %v2376 = vrot.slane %v1531, 4
        %v2377 = vsel %vm1630, %v2339, %v2376
        %v2379 = vunpack.c.l.s4 1983009808
        %v2380 = vunpack.c.0.s8 %v2379
        %v2381 = vperm.slane %v2375, %v2380
        %v2383 = vunpack.c.l.s4 1983009808
        %v2384 = vunpack.c.0.s8 %v2383
        %v2385 = vperm.slane %v2377, %v2384
        %v2386 = vrot.slane %v2357, 4
        %v2387 = vsel %vm1630, %v2386, %v2321
        %v2388 = vrot.slane %v2321, 4
        %v2389 = vsel %vm1630, %v2357, %v2388
        %v2391 = vunpack.c.l.s4 1983009808
        %v2392 = vunpack.c.0.s8 %v2391
        %v2393 = vperm.slane %v2387, %v2392
        %v2395 = vunpack.c.l.s4 1983009808
        %v2396 = vunpack.c.0.s8 %v2395
        %v2397 = vperm.slane %v2389, %v2396
        %v2398 = vrot.slane %v2393, 4
        %v2399 = vsel %vm1630, %v2398, %v2381
        %v2400 = vrot.slane %v2381, 4
        %v2401 = vsel %vm1630, %v2393, %v2400
        %v2403 = vunpack.c.l.s4 1934713408
        %v2404 = vunpack.c.0.s8 %v2403
        %v2405 = vperm.slane %v2399, %v2404
        %v2407 = vunpack.c.l.s4 1934713408
        %v2408 = vunpack.c.0.s8 %v2407
        %v2409 = vperm.slane %v2401, %v2408
        %v2410 = vrot.slane %v2397, 4
        %v2411 = vsel %vm1630, %v2410, %v2385
        %v2412 = vrot.slane %v2385, 4
        %v2413 = vsel %vm1630, %v2397, %v2412
        %v2415 = vunpack.c.l.s4 1934713408
        %v2416 = vunpack.c.0.s8 %v2415
        %v2417 = vperm.slane %v2411, %v2416
        %v2419 = vunpack.c.l.s4 1934713408
        %v2420 = vunpack.c.0.s8 %v2419
        %v2421 = vperm.slane %v2413, %v2420
        %v2422 = vrot.slane %v2405, 4
        %v2423 = vsel %vm1630, 0.0, %v2422
        %v2424 = vrot.slane %v2409, 4
        %v2425 = vsel %vm1630, 0.0, %v2424
        %v2426 = vrot.slane %v2417, 4
        %v2427 = vsel %vm1630, 0.0, %v2426
        %v2428 = vrot.slane %v2421, 4
        %v2429 = vsel %vm1630, 0.0, %v2428
        %v2430 = vrot.slane %v2341, 4
        %v2431 = vsel %vm1630, %v2430, %v1533
        %v2432 = vrot.slane %v1533, 4
        %v2433 = vsel %vm1630, %v2341, %v2432
        %v2435 = vunpack.c.l.s4 1983009808
        %v2436 = vunpack.c.0.s8 %v2435
        %v2437 = vperm.slane %v2431, %v2436
        %v2439 = vunpack.c.l.s4 1983009808
        %v2440 = vunpack.c.0.s8 %v2439
        %v2441 = vperm.slane %v2433, %v2440
        %v2442 = vrot.slane %v2359, 4
        %v2443 = vsel %vm1630, %v2442, %v2323
        %v2444 = vrot.slane %v2323, 4
        %v2445 = vsel %vm1630, %v2359, %v2444
        %v2447 = vunpack.c.l.s4 1983009808
        %v2448 = vunpack.c.0.s8 %v2447
        %v2449 = vperm.slane %v2443, %v2448
        %v2451 = vunpack.c.l.s4 1983009808
        %v2452 = vunpack.c.0.s8 %v2451
        %v2453 = vperm.slane %v2445, %v2452
        %v2454 = vrot.slane %v2449, 4
        %v2455 = vsel %vm1630, %v2454, %v2437
        %v2456 = vrot.slane %v2437, 4
        %v2457 = vsel %vm1630, %v2449, %v2456
        %v2459 = vunpack.c.l.s4 1934713408
        %v2460 = vunpack.c.0.s8 %v2459
        %v2461 = vperm.slane %v2455, %v2460
        %v2463 = vunpack.c.l.s4 1934713408
        %v2464 = vunpack.c.0.s8 %v2463
        %v2465 = vperm.slane %v2457, %v2464
        %v2466 = vrot.slane %v2453, 4
        %v2467 = vsel %vm1630, %v2466, %v2441
        %v2468 = vrot.slane %v2441, 4
        %v2469 = vsel %vm1630, %v2453, %v2468
        %v2471 = vunpack.c.l.s4 1934713408
        %v2472 = vunpack.c.0.s8 %v2471
        %v2473 = vperm.slane %v2467, %v2472
        %v2475 = vunpack.c.l.s4 1934713408
        %v2476 = vunpack.c.0.s8 %v2475
        %v2477 = vperm.slane %v2469, %v2476
        %v2478 = vrot.slane %v2461, 4
        %v2479 = vsel %vm1630, 0.0, %v2478
        %v2480 = vrot.slane %v2465, 4
        %v2481 = vsel %vm1630, 0.0, %v2480
        %v2482 = vrot.slane %v2473, 4
        %v2483 = vsel %vm1630, 0.0, %v2482
        %v2484 = vrot.slane %v2477, 4
        %v2485 = vsel %vm1630, 0.0, %v2484
        %v2486 = vrot.slane %v2343, 4
        %v2487 = vsel %vm1630, %v2486, %v1536
        %v2488 = vrot.slane %v1536, 4
        %v2489 = vsel %vm1630, %v2343, %v2488
        %v2491 = vunpack.c.l.s4 1983009808
        %v2492 = vunpack.c.0.s8 %v2491
        %v2493 = vperm.slane %v2487, %v2492
        %v2495 = vunpack.c.l.s4 1983009808
        %v2496 = vunpack.c.0.s8 %v2495
        %v2497 = vperm.slane %v2489, %v2496
        %v2498 = vrot.slane %v2361, 4
        %v2499 = vsel %vm1630, %v2498, %v2325
        %v2500 = vrot.slane %v2325, 4
        %v2501 = vsel %vm1630, %v2361, %v2500
        %v2503 = vunpack.c.l.s4 1983009808
        %v2504 = vunpack.c.0.s8 %v2503
        %v2505 = vperm.slane %v2499, %v2504
        %v2507 = vunpack.c.l.s4 1983009808
        %v2508 = vunpack.c.0.s8 %v2507
        %v2509 = vperm.slane %v2501, %v2508
        %v2510 = vrot.slane %v2505, 4
        %v2511 = vsel %vm1630, %v2510, %v2493
        %v2512 = vrot.slane %v2493, 4
        %v2513 = vsel %vm1630, %v2505, %v2512
        %v2515 = vunpack.c.l.s4 1934713408
        %v2516 = vunpack.c.0.s8 %v2515
        %v2517 = vperm.slane %v2511, %v2516
        %v2519 = vunpack.c.l.s4 1934713408
        %v2520 = vunpack.c.0.s8 %v2519
        %v2521 = vperm.slane %v2513, %v2520
        %v2522 = vrot.slane %v2509, 4
        %v2523 = vsel %vm1630, %v2522, %v2497
        %v2524 = vrot.slane %v2497, 4
        %v2525 = vsel %vm1630, %v2509, %v2524
        %v2527 = vunpack.c.l.s4 1934713408
        %v2528 = vunpack.c.0.s8 %v2527
        %v2529 = vperm.slane %v2523, %v2528
        %v2531 = vunpack.c.l.s4 1934713408
        %v2532 = vunpack.c.0.s8 %v2531
        %v2533 = vperm.slane %v2525, %v2532
        %v2534 = vrot.slane %v2517, 4
        %v2535 = vsel %vm1630, 0.0, %v2534
        %v2536 = vrot.slane %v2521, 4
        %v2537 = vsel %vm1630, 0.0, %v2536
        %v2538 = vrot.slane %v2529, 4
        %v2539 = vsel %vm1630, 0.0, %v2538
        %v2540 = vrot.slane %v2533, 4
        %v2541 = vsel %vm1630, 0.0, %v2540
        %v2542 = vrot.slane %v2345, 4
        %v2543 = vsel %vm1630, %v2542, %v1538
        %v2544 = vrot.slane %v1538, 4
        %v2545 = vsel %vm1630, %v2345, %v2544
        %v2547 = vunpack.c.l.s4 1983009808
        %v2548 = vunpack.c.0.s8 %v2547
        %v2549 = vperm.slane %v2543, %v2548
        %v2551 = vunpack.c.l.s4 1983009808
        %v2552 = vunpack.c.0.s8 %v2551
        %v2553 = vperm.slane %v2545, %v2552
        %v2554 = vrot.slane %v2363, 4
        %v2555 = vsel %vm1630, %v2554, %v2327
        %v2556 = vrot.slane %v2327, 4
        %v2557 = vsel %vm1630, %v2363, %v2556
        %v2559 = vunpack.c.l.s4 1983009808
        %v2560 = vunpack.c.0.s8 %v2559
        %v2561 = vperm.slane %v2555, %v2560
        %v2563 = vunpack.c.l.s4 1983009808
        %v2564 = vunpack.c.0.s8 %v2563
        %v2565 = vperm.slane %v2557, %v2564
        %v2566 = vrot.slane %v2561, 4
        %v2567 = vsel %vm1630, %v2566, %v2549
        %v2568 = vrot.slane %v2549, 4
        %v2569 = vsel %vm1630, %v2561, %v2568
        %v2571 = vunpack.c.l.s4 1934713408
        %v2572 = vunpack.c.0.s8 %v2571
        %v2573 = vperm.slane %v2567, %v2572
        %v2575 = vunpack.c.l.s4 1934713408
        %v2576 = vunpack.c.0.s8 %v2575
        %v2577 = vperm.slane %v2569, %v2576
        %v2578 = vrot.slane %v2565, 4
        %v2579 = vsel %vm1630, %v2578, %v2553
        %v2580 = vrot.slane %v2553, 4
        %v2581 = vsel %vm1630, %v2565, %v2580
        %v2583 = vunpack.c.l.s4 1934713408
        %v2584 = vunpack.c.0.s8 %v2583
        %v2585 = vperm.slane %v2579, %v2584
        %v2587 = vunpack.c.l.s4 1934713408
        %v2588 = vunpack.c.0.s8 %v2587
        %v2589 = vperm.slane %v2581, %v2588
        %v2590 = vrot.slane %v2573, 4
        %v2591 = vsel %vm1630, 0.0, %v2590
        %v2592 = vrot.slane %v2577, 4
        %v2593 = vsel %vm1630, 0.0, %v2592
        %v2594 = vrot.slane %v2585, 4
        %v2595 = vsel %vm1630, 0.0, %v2594
        %v2596 = vrot.slane %v2589, 4
        %v2597 = vsel %vm1630, 0.0, %v2596
        %v2598 = vrot.slane %v2347, 4
        %v2599 = vsel %vm1630, %v2598, %v1541
        %v2600 = vrot.slane %v1541, 4
        %v2601 = vsel %vm1630, %v2347, %v2600
        %v2603 = vunpack.c.l.s4 1983009808
        %v2604 = vunpack.c.0.s8 %v2603
        %v2605 = vperm.slane %v2599, %v2604
        %v2607 = vunpack.c.l.s4 1983009808
        %v2608 = vunpack.c.0.s8 %v2607
        %v2609 = vperm.slane %v2601, %v2608
        %v2610 = vrot.slane %v2365, 4
        %v2611 = vsel %vm1630, %v2610, %v2329
        %v2612 = vrot.slane %v2329, 4
        %v2613 = vsel %vm1630, %v2365, %v2612
        %v2615 = vunpack.c.l.s4 1983009808
        %v2616 = vunpack.c.0.s8 %v2615
        %v2617 = vperm.slane %v2611, %v2616
        %v2619 = vunpack.c.l.s4 1983009808
        %v2620 = vunpack.c.0.s8 %v2619
        %v2621 = vperm.slane %v2613, %v2620
        %v2622 = vrot.slane %v2617, 4
        %v2623 = vsel %vm1630, %v2622, %v2605
        %v2624 = vrot.slane %v2605, 4
        %v2625 = vsel %vm1630, %v2617, %v2624
        %v2627 = vunpack.c.l.s4 1934713408
        %v2628 = vunpack.c.0.s8 %v2627
        %v2629 = vperm.slane %v2623, %v2628
        %v2631 = vunpack.c.l.s4 1934713408
        %v2632 = vunpack.c.0.s8 %v2631
        %v2633 = vperm.slane %v2625, %v2632
        %v2634 = vrot.slane %v2621, 4
        %v2635 = vsel %vm1630, %v2634, %v2609
        %v2636 = vrot.slane %v2609, 4
        %v2637 = vsel %vm1630, %v2621, %v2636
        %v2639 = vunpack.c.l.s4 1934713408
        %v2640 = vunpack.c.0.s8 %v2639
        %v2641 = vperm.slane %v2635, %v2640
        %v2643 = vunpack.c.l.s4 1934713408
        %v2644 = vunpack.c.0.s8 %v2643
        %v2645 = vperm.slane %v2637, %v2644
        %v2646 = vrot.slane %v2629, 4
        %v2647 = vsel %vm1630, 0.0, %v2646
        %v2648 = vrot.slane %v2633, 4
        %v2649 = vsel %vm1630, 0.0, %v2648
        %v2650 = vrot.slane %v2641, 4
        %v2651 = vsel %vm1630, 0.0, %v2650
        %v2652 = vrot.slane %v2645, 4
        %v2653 = vsel %vm1630, 0.0, %v2652
        %v2654 = vrot.slane %v2349, 4
        %v2655 = vsel %vm1630, %v2654, %v1543
        %v2656 = vrot.slane %v1543, 4
        %v2657 = vsel %vm1630, %v2349, %v2656
        %v2659 = vunpack.c.l.s4 1983009808
        %v2660 = vunpack.c.0.s8 %v2659
        %v2661 = vperm.slane %v2655, %v2660
        %v2663 = vunpack.c.l.s4 1983009808
        %v2664 = vunpack.c.0.s8 %v2663
        %v2665 = vperm.slane %v2657, %v2664
        %v2666 = vrot.slane %v2367, 4
        %v2667 = vsel %vm1630, %v2666, %v2331
        %v2668 = vrot.slane %v2331, 4
        %v2669 = vsel %vm1630, %v2367, %v2668
        %v2671 = vunpack.c.l.s4 1983009808
        %v2672 = vunpack.c.0.s8 %v2671
        %v2673 = vperm.slane %v2667, %v2672
        %v2675 = vunpack.c.l.s4 1983009808
        %v2676 = vunpack.c.0.s8 %v2675
        %v2677 = vperm.slane %v2669, %v2676
        %v2678 = vrot.slane %v2673, 4
        %v2679 = vsel %vm1630, %v2678, %v2661
        %v2680 = vrot.slane %v2661, 4
        %v2681 = vsel %vm1630, %v2673, %v2680
        %v2683 = vunpack.c.l.s4 1934713408
        %v2684 = vunpack.c.0.s8 %v2683
        %v2685 = vperm.slane %v2679, %v2684
        %v2687 = vunpack.c.l.s4 1934713408
        %v2688 = vunpack.c.0.s8 %v2687
        %v2689 = vperm.slane %v2681, %v2688
        %v2690 = vrot.slane %v2677, 4
        %v2691 = vsel %vm1630, %v2690, %v2665
        %v2692 = vrot.slane %v2665, 4
        %v2693 = vsel %vm1630, %v2677, %v2692
        %v2695 = vunpack.c.l.s4 1934713408
        %v2696 = vunpack.c.0.s8 %v2695
        %v2697 = vperm.slane %v2691, %v2696
        %v2699 = vunpack.c.l.s4 1934713408
        %v2700 = vunpack.c.0.s8 %v2699
        %v2701 = vperm.slane %v2693, %v2700
        %v2702 = vrot.slane %v2685, 4
        %v2703 = vsel %vm1630, 0.0, %v2702
        %v2704 = vrot.slane %v2689, 4
        %v2705 = vsel %vm1630, 0.0, %v2704
        %v2706 = vrot.slane %v2697, 4
        %v2707 = vsel %vm1630, 0.0, %v2706
        %v2708 = vrot.slane %v2701, 4
        %v2709 = vsel %vm1630, 0.0, %v2708
        %v2710 = vsel %vm1630, %v2424, %v2405
        %v2712 = vunpack.c.l.s4 1983009808
        %v2713 = vunpack.c.0.s8 %v2712
        %v2714 = vperm.slane %v2710, %v2713
        %v2715 = vrot.slane %v2425, 4
        %v2716 = vsel %vm1630, %v2715, %v2423
        %v2718 = vunpack.c.l.s4 1983009808
        %v2719 = vunpack.c.0.s8 %v2718
        %v2720 = vperm.slane %v2716, %v2719
        %v2721 = vsel %vm1630, %v2428, %v2417
        %v2723 = vunpack.c.l.s4 1983009808
        %v2724 = vunpack.c.0.s8 %v2723
        %v2725 = vperm.slane %v2721, %v2724
        %v2726 = vrot.slane %v2429, 4
        %v2727 = vsel %vm1630, %v2726, %v2427
        %v2729 = vunpack.c.l.s4 1983009808
        %v2730 = vunpack.c.0.s8 %v2729
        %v2731 = vperm.slane %v2727, %v2730
        %v2732 = vrot.slane %v2720, 4
        %v2733 = vsel %vm1630, %v2732, %v2714
        %v2734 = vrot.slane %v2714, 4
        %v2735 = vsel %vm1630, %v2720, %v2734
        %v2737 = vunpack.c.l.s4 1934713408
        %v2738 = vunpack.c.0.s8 %v2737
        %v2739 = vperm.slane %v2733, %v2738
        %v2741 = vunpack.c.l.s4 1934713408
        %v2742 = vunpack.c.0.s8 %v2741
        %v2743 = vperm.slane %v2735, %v2742
        %v2744 = vrot.slane %v2731, 4
        %v2745 = vsel %vm1630, %v2744, %v2725
        %v2746 = vrot.slane %v2725, 4
        %v2747 = vsel %vm1630, %v2731, %v2746
        %v2749 = vunpack.c.l.s4 1934713408
        %v2750 = vunpack.c.0.s8 %v2749
        %v2751 = vperm.slane %v2745, %v2750
        %v2753 = vunpack.c.l.s4 1934713408
        %v2754 = vunpack.c.0.s8 %v2753
        %v2755 = vperm.slane %v2747, %v2754
        %v2756 = vrot.slane %v2751, 4
        %v2757 = vsel %vm1630, %v2756, %v2739
        %v2758 = vrot.slane %v2739, 4
        %v2759 = vsel %vm1630, %v2751, %v2758
        %v2760 = vrot.slane %v2755, 4
        %v2761 = vsel %vm1630, %v2760, %v2743
        %v2762 = vrot.slane %v2743, 4
        %v2763 = vsel %vm1630, %v2755, %v2762
        %v2764 = vsel %vm1630, %v2480, %v2461
        %v2766 = vunpack.c.l.s4 1983009808
        %v2767 = vunpack.c.0.s8 %v2766
        %v2768 = vperm.slane %v2764, %v2767
        %v2769 = vrot.slane %v2481, 4
        %v2770 = vsel %vm1630, %v2769, %v2479
        %v2772 = vunpack.c.l.s4 1983009808
        %v2773 = vunpack.c.0.s8 %v2772
        %v2774 = vperm.slane %v2770, %v2773
        %v2775 = vsel %vm1630, %v2484, %v2473
        %v2777 = vunpack.c.l.s4 1983009808
        %v2778 = vunpack.c.0.s8 %v2777
        %v2779 = vperm.slane %v2775, %v2778
        %v2780 = vrot.slane %v2485, 4
        %v2781 = vsel %vm1630, %v2780, %v2483
        %v2783 = vunpack.c.l.s4 1983009808
        %v2784 = vunpack.c.0.s8 %v2783
        %v2785 = vperm.slane %v2781, %v2784
        %v2786 = vrot.slane %v2774, 4
        %v2787 = vsel %vm1630, %v2786, %v2768
        %v2788 = vrot.slane %v2768, 4
        %v2789 = vsel %vm1630, %v2774, %v2788
        %v2791 = vunpack.c.l.s4 1934713408
        %v2792 = vunpack.c.0.s8 %v2791
        %v2793 = vperm.slane %v2787, %v2792
        %v2795 = vunpack.c.l.s4 1934713408
        %v2796 = vunpack.c.0.s8 %v2795
        %v2797 = vperm.slane %v2789, %v2796
        %v2798 = vrot.slane %v2785, 4
        %v2799 = vsel %vm1630, %v2798, %v2779
        %v2800 = vrot.slane %v2779, 4
        %v2801 = vsel %vm1630, %v2785, %v2800
        %v2803 = vunpack.c.l.s4 1934713408
        %v2804 = vunpack.c.0.s8 %v2803
        %v2805 = vperm.slane %v2799, %v2804
        %v2807 = vunpack.c.l.s4 1934713408
        %v2808 = vunpack.c.0.s8 %v2807
        %v2809 = vperm.slane %v2801, %v2808
        %v2810 = vrot.slane %v2805, 4
        %v2811 = vsel %vm1630, %v2810, %v2793
        %v2812 = vrot.slane %v2793, 4
        %v2813 = vsel %vm1630, %v2805, %v2812
        %v2814 = vrot.slane %v2809, 4
        %v2815 = vsel %vm1630, %v2814, %v2797
        %v2816 = vrot.slane %v2797, 4
        %v2817 = vsel %vm1630, %v2809, %v2816
        %v2818 = vsel %vm1630, %v2536, %v2517
        %v2820 = vunpack.c.l.s4 1983009808
        %v2821 = vunpack.c.0.s8 %v2820
        %v2822 = vperm.slane %v2818, %v2821
        %v2823 = vrot.slane %v2537, 4
        %v2824 = vsel %vm1630, %v2823, %v2535
        %v2826 = vunpack.c.l.s4 1983009808
        %v2827 = vunpack.c.0.s8 %v2826
        %v2828 = vperm.slane %v2824, %v2827
        %v2829 = vsel %vm1630, %v2540, %v2529
        %v2831 = vunpack.c.l.s4 1983009808
        %v2832 = vunpack.c.0.s8 %v2831
        %v2833 = vperm.slane %v2829, %v2832
        %v2834 = vrot.slane %v2541, 4
        %v2835 = vsel %vm1630, %v2834, %v2539
        %v2837 = vunpack.c.l.s4 1983009808
        %v2838 = vunpack.c.0.s8 %v2837
        %v2839 = vperm.slane %v2835, %v2838
        %v2840 = vrot.slane %v2828, 4
        %v2841 = vsel %vm1630, %v2840, %v2822
        %v2842 = vrot.slane %v2822, 4
        %v2843 = vsel %vm1630, %v2828, %v2842
        %v2845 = vunpack.c.l.s4 1934713408
        %v2846 = vunpack.c.0.s8 %v2845
        %v2847 = vperm.slane %v2841, %v2846
        %v2849 = vunpack.c.l.s4 1934713408
        %v2850 = vunpack.c.0.s8 %v2849
        %v2851 = vperm.slane %v2843, %v2850
        %v2852 = vrot.slane %v2839, 4
        %v2853 = vsel %vm1630, %v2852, %v2833
        %v2854 = vrot.slane %v2833, 4
        %v2855 = vsel %vm1630, %v2839, %v2854
        %v2857 = vunpack.c.l.s4 1934713408
        %v2858 = vunpack.c.0.s8 %v2857
        %v2859 = vperm.slane %v2853, %v2858
        %v2861 = vunpack.c.l.s4 1934713408
        %v2862 = vunpack.c.0.s8 %v2861
        %v2863 = vperm.slane %v2855, %v2862
        %v2864 = vrot.slane %v2859, 4
        %v2865 = vsel %vm1630, %v2864, %v2847
        %v2866 = vrot.slane %v2847, 4
        %v2867 = vsel %vm1630, %v2859, %v2866
        %v2868 = vrot.slane %v2863, 4
        %v2869 = vsel %vm1630, %v2868, %v2851
        %v2870 = vrot.slane %v2851, 4
        %v2871 = vsel %vm1630, %v2863, %v2870
        %v2872 = vsel %vm1630, %v2592, %v2573
        %v2874 = vunpack.c.l.s4 1983009808
        %v2875 = vunpack.c.0.s8 %v2874
        %v2876 = vperm.slane %v2872, %v2875
        %v2877 = vrot.slane %v2593, 4
        %v2878 = vsel %vm1630, %v2877, %v2591
        %v2880 = vunpack.c.l.s4 1983009808
        %v2881 = vunpack.c.0.s8 %v2880
        %v2882 = vperm.slane %v2878, %v2881
        %v2883 = vsel %vm1630, %v2596, %v2585
        %v2885 = vunpack.c.l.s4 1983009808
        %v2886 = vunpack.c.0.s8 %v2885
        %v2887 = vperm.slane %v2883, %v2886
        %v2888 = vrot.slane %v2597, 4
        %v2889 = vsel %vm1630, %v2888, %v2595
        %v2891 = vunpack.c.l.s4 1983009808
        %v2892 = vunpack.c.0.s8 %v2891
        %v2893 = vperm.slane %v2889, %v2892
        %v2894 = vrot.slane %v2882, 4
        %v2895 = vsel %vm1630, %v2894, %v2876
        %v2896 = vrot.slane %v2876, 4
        %v2897 = vsel %vm1630, %v2882, %v2896
        %v2899 = vunpack.c.l.s4 1934713408
        %v2900 = vunpack.c.0.s8 %v2899
        %v2901 = vperm.slane %v2895, %v2900
        %v2903 = vunpack.c.l.s4 1934713408
        %v2904 = vunpack.c.0.s8 %v2903
        %v2905 = vperm.slane %v2897, %v2904
        %v2906 = vrot.slane %v2893, 4
        %v2907 = vsel %vm1630, %v2906, %v2887
        %v2908 = vrot.slane %v2887, 4
        %v2909 = vsel %vm1630, %v2893, %v2908
        %v2911 = vunpack.c.l.s4 1934713408
        %v2912 = vunpack.c.0.s8 %v2911
        %v2913 = vperm.slane %v2907, %v2912
        %v2915 = vunpack.c.l.s4 1934713408
        %v2916 = vunpack.c.0.s8 %v2915
        %v2917 = vperm.slane %v2909, %v2916
        %v2918 = vrot.slane %v2913, 4
        %v2919 = vsel %vm1630, %v2918, %v2901
        %v2920 = vrot.slane %v2901, 4
        %v2921 = vsel %vm1630, %v2913, %v2920
        %v2922 = vrot.slane %v2917, 4
        %v2923 = vsel %vm1630, %v2922, %v2905
        %v2924 = vrot.slane %v2905, 4
        %v2925 = vsel %vm1630, %v2917, %v2924
        %v2926 = vsel %vm1630, %v2648, %v2629
        %v2928 = vunpack.c.l.s4 1983009808
        %v2929 = vunpack.c.0.s8 %v2928
        %v2930 = vperm.slane %v2926, %v2929
        %v2931 = vrot.slane %v2649, 4
        %v2932 = vsel %vm1630, %v2931, %v2647
        %v2934 = vunpack.c.l.s4 1983009808
        %v2935 = vunpack.c.0.s8 %v2934
        %v2936 = vperm.slane %v2932, %v2935
        %v2937 = vsel %vm1630, %v2652, %v2641
        %v2939 = vunpack.c.l.s4 1983009808
        %v2940 = vunpack.c.0.s8 %v2939
        %v2941 = vperm.slane %v2937, %v2940
        %v2942 = vrot.slane %v2653, 4
        %v2943 = vsel %vm1630, %v2942, %v2651
        %v2945 = vunpack.c.l.s4 1983009808
        %v2946 = vunpack.c.0.s8 %v2945
        %v2947 = vperm.slane %v2943, %v2946
        %v2948 = vrot.slane %v2936, 4
        %v2949 = vsel %vm1630, %v2948, %v2930
        %v2950 = vrot.slane %v2930, 4
        %v2951 = vsel %vm1630, %v2936, %v2950
        %v2953 = vunpack.c.l.s4 1934713408
        %v2954 = vunpack.c.0.s8 %v2953
        %v2955 = vperm.slane %v2949, %v2954
        %v2957 = vunpack.c.l.s4 1934713408
        %v2958 = vunpack.c.0.s8 %v2957
        %v2959 = vperm.slane %v2951, %v2958
        %v2960 = vrot.slane %v2947, 4
        %v2961 = vsel %vm1630, %v2960, %v2941
        %v2962 = vrot.slane %v2941, 4
        %v2963 = vsel %vm1630, %v2947, %v2962
        %v2965 = vunpack.c.l.s4 1934713408
        %v2966 = vunpack.c.0.s8 %v2965
        %v2967 = vperm.slane %v2961, %v2966
        %v2969 = vunpack.c.l.s4 1934713408
        %v2970 = vunpack.c.0.s8 %v2969
        %v2971 = vperm.slane %v2963, %v2970
        %v2972 = vrot.slane %v2967, 4
        %v2973 = vsel %vm1630, %v2972, %v2955
        %v2974 = vrot.slane %v2955, 4
        %v2975 = vsel %vm1630, %v2967, %v2974
        %v2976 = vrot.slane %v2971, 4
        %v2977 = vsel %vm1630, %v2976, %v2959
        %v2978 = vrot.slane %v2959, 4
        %v2979 = vsel %vm1630, %v2971, %v2978
        %v2980 = vsel %vm1630, %v2704, %v2685
        %v2982 = vunpack.c.l.s4 1983009808
        %v2983 = vunpack.c.0.s8 %v2982
        %v2984 = vperm.slane %v2980, %v2983
        %v2985 = vrot.slane %v2705, 4
        %v2986 = vsel %vm1630, %v2985, %v2703
        %v2988 = vunpack.c.l.s4 1983009808
        %v2989 = vunpack.c.0.s8 %v2988
        %v2990 = vperm.slane %v2986, %v2989
        %v2991 = vsel %vm1630, %v2708, %v2697
        %v2993 = vunpack.c.l.s4 1983009808
        %v2994 = vunpack.c.0.s8 %v2993
        %v2995 = vperm.slane %v2991, %v2994
        %v2996 = vrot.slane %v2709, 4
        %v2997 = vsel %vm1630, %v2996, %v2707
        %v2999 = vunpack.c.l.s4 1983009808
        %v3000 = vunpack.c.0.s8 %v2999
        %v3001 = vperm.slane %v2997, %v3000
        %v3002 = vrot.slane %v2990, 4
        %v3003 = vsel %vm1630, %v3002, %v2984
        %v3004 = vrot.slane %v2984, 4
        %v3005 = vsel %vm1630, %v2990, %v3004
        %v3007 = vunpack.c.l.s4 1934713408
        %v3008 = vunpack.c.0.s8 %v3007
        %v3009 = vperm.slane %v3003, %v3008
        %v3011 = vunpack.c.l.s4 1934713408
        %v3012 = vunpack.c.0.s8 %v3011
        %v3013 = vperm.slane %v3005, %v3012
        %v3014 = vrot.slane %v3001, 4
        %v3015 = vsel %vm1630, %v3014, %v2995
        %v3016 = vrot.slane %v2995, 4
        %v3017 = vsel %vm1630, %v3001, %v3016
        %v3019 = vunpack.c.l.s4 1934713408
        %v3020 = vunpack.c.0.s8 %v3019
        %v3021 = vperm.slane %v3015, %v3020
        %v3023 = vunpack.c.l.s4 1934713408
        %v3024 = vunpack.c.0.s8 %v3023
        %v3025 = vperm.slane %v3017, %v3024
        %v3026 = vrot.slane %v3021, 4
        %v3027 = vsel %vm1630, %v3026, %v3009
        %v3028 = vrot.slane %v3009, 4
        %v3029 = vsel %vm1630, %v3021, %v3028
        %v3030 = vrot.slane %v3025, 4
        %v3031 = vsel %vm1630, %v3030, %v3013
        %v3032 = vrot.slane %v3013, 4
        %v3033 = vsel %vm1630, %v3025, %v3032
        %v3034 = vpack.c.bf16 %v2757, %v2757
        %v3035 = vpack.c.bf16 %v2811, %v2811
        %v3036 = vpack.c.bf16 %v2865, %v2865
        %v3037 = vpack.c.bf16 %v2919, %v2919
        %v3038 = vpack.c.bf16 %v2973, %v2973
        %v3039 = vpack.c.bf16 %v3027, %v3027
        %v3040 = vpack.c.bf16 %v2759, %v2759
        %v3041 = vpack.c.bf16 %v2813, %v2813
        %v3042 = vpack.c.bf16 %v2867, %v2867
        %v3043 = vpack.c.bf16 %v2921, %v2921
        %v3044 = vpack.c.bf16 %v2975, %v2975
        %v3045 = vpack.c.bf16 %v3029, %v3029
        %v3046 = vpack.c.bf16 %v2761, %v2761
        %v3047 = vpack.c.bf16 %v2815, %v2815
        %v3048 = vpack.c.bf16 %v2869, %v2869
        %v3049 = vpack.c.bf16 %v2923, %v2923
        %v3050 = vpack.c.bf16 %v2977, %v2977
        %v3051 = vpack.c.bf16 %v3031, %v3031
        %v3052 = vpack.c.bf16 %v2763, %v2763
        %v3053 = vpack.c.bf16 %v2817, %v2817
        %v3054 = vpack.c.bf16 %v2871, %v2871
        %v3055 = vpack.c.bf16 %v2925, %v2925
        %v3056 = vpack.c.bf16 %v2979, %v2979
        %v3057 = vpack.c.bf16 %v3033, %v3033
        %3064 = vrot.lane.b32.xlu0 %v1555, 96
        %v3065 = vpop.permute.xlu0 %3064
        %3066 = vrot.lane.b32.xlu0 %v1557, 96
        %v3067 = vpop.permute.xlu0 %3066
        %3068 = vrot.lane.b32.xlu0 %v1560, 96
        %v3069 = vpop.permute.xlu0 %3068
        %3070 = vrot.lane.b32.xlu0 %v1562, 96
        %v3071 = vpop.permute.xlu0 %3070
        %3072 = vrot.lane.b32.xlu0 %v1565, 96
        %v3073 = vpop.permute.xlu0 %3072
        %3074 = vrot.lane.b32.xlu0 %v1567, 96
        %v3075 = vpop.permute.xlu0 %3074
        %3082 = vrot.lane.b32.xlu0 %v1555, 64
        %v3083 = vpop.permute.xlu0 %3082
        %3084 = vrot.lane.b32.xlu0 %v1557, 64
        %v3085 = vpop.permute.xlu0 %3084
        %3086 = vrot.lane.b32.xlu0 %v1560, 64
        %v3087 = vpop.permute.xlu0 %3086
        %3088 = vrot.lane.b32.xlu0 %v1562, 64
        %v3089 = vpop.permute.xlu0 %3088
        %3090 = vrot.lane.b32.xlu0 %v1565, 64
        %v3091 = vpop.permute.xlu0 %3090
        %3092 = vrot.lane.b32.xlu0 %v1567, 64
        %v3093 = vpop.permute.xlu0 %3092
        %3100 = vrot.lane.b32.xlu0 %v1555, 32
        %v3101 = vpop.permute.xlu0 %3100
        %3102 = vrot.lane.b32.xlu0 %v1557, 32
        %v3103 = vpop.permute.xlu0 %3102
        %3104 = vrot.lane.b32.xlu0 %v1560, 32
        %v3105 = vpop.permute.xlu0 %3104
        %3106 = vrot.lane.b32.xlu0 %v1562, 32
        %v3107 = vpop.permute.xlu0 %3106
        %3108 = vrot.lane.b32.xlu0 %v1565, 32
        %v3109 = vpop.permute.xlu0 %3108
        %3110 = vrot.lane.b32.xlu0 %v1567, 32
        %v3111 = vpop.permute.xlu0 %3110
        %v3118 = vrot.slane %v3083, 4
        %v3119 = vsel %vm1630, %v3118, %v1555
        %v3120 = vrot.slane %v1555, 4
        %v3121 = vsel %vm1630, %v3083, %v3120
        %v3123 = vunpack.c.l.s4 1983009808
        %v3124 = vunpack.c.0.s8 %v3123
        %v3125 = vperm.slane %v3119, %v3124
        %v3127 = vunpack.c.l.s4 1983009808
        %v3128 = vunpack.c.0.s8 %v3127
        %v3129 = vperm.slane %v3121, %v3128
        %v3130 = vrot.slane %v3101, 4
        %v3131 = vsel %vm1630, %v3130, %v3065
        %v3132 = vrot.slane %v3065, 4
        %v3133 = vsel %vm1630, %v3101, %v3132
        %v3135 = vunpack.c.l.s4 1983009808
        %v3136 = vunpack.c.0.s8 %v3135
        %v3137 = vperm.slane %v3131, %v3136
        %v3139 = vunpack.c.l.s4 1983009808
        %v3140 = vunpack.c.0.s8 %v3139
        %v3141 = vperm.slane %v3133, %v3140
        %v3142 = vrot.slane %v3137, 4
        %v3143 = vsel %vm1630, %v3142, %v3125
        %v3144 = vrot.slane %v3125, 4
        %v3145 = vsel %vm1630, %v3137, %v3144
        %v3147 = vunpack.c.l.s4 1934713408
        %v3148 = vunpack.c.0.s8 %v3147
        %v3149 = vperm.slane %v3143, %v3148
        %v3151 = vunpack.c.l.s4 1934713408
        %v3152 = vunpack.c.0.s8 %v3151
        %v3153 = vperm.slane %v3145, %v3152
        %v3154 = vrot.slane %v3141, 4
        %v3155 = vsel %vm1630, %v3154, %v3129
        %v3156 = vrot.slane %v3129, 4
        %v3157 = vsel %vm1630, %v3141, %v3156
        %v3159 = vunpack.c.l.s4 1934713408
        %v3160 = vunpack.c.0.s8 %v3159
        %v3161 = vperm.slane %v3155, %v3160
        %v3163 = vunpack.c.l.s4 1934713408
        %v3164 = vunpack.c.0.s8 %v3163
        %v3165 = vperm.slane %v3157, %v3164
        %v3166 = vrot.slane %v3149, 4
        %v3167 = vsel %vm1630, 0.0, %v3166
        %v3168 = vrot.slane %v3153, 4
        %v3169 = vsel %vm1630, 0.0, %v3168
        %v3170 = vrot.slane %v3161, 4
        %v3171 = vsel %vm1630, 0.0, %v3170
        %v3172 = vrot.slane %v3165, 4
        %v3173 = vsel %vm1630, 0.0, %v3172
        %v3174 = vrot.slane %v3085, 4
        %v3175 = vsel %vm1630, %v3174, %v1557
        %v3176 = vrot.slane %v1557, 4
        %v3177 = vsel %vm1630, %v3085, %v3176
        %v3179 = vunpack.c.l.s4 1983009808
        %v3180 = vunpack.c.0.s8 %v3179
        %v3181 = vperm.slane %v3175, %v3180
        %v3183 = vunpack.c.l.s4 1983009808
        %v3184 = vunpack.c.0.s8 %v3183
        %v3185 = vperm.slane %v3177, %v3184
        %v3186 = vrot.slane %v3103, 4
        %v3187 = vsel %vm1630, %v3186, %v3067
        %v3188 = vrot.slane %v3067, 4
        %v3189 = vsel %vm1630, %v3103, %v3188
        %v3191 = vunpack.c.l.s4 1983009808
        %v3192 = vunpack.c.0.s8 %v3191
        %v3193 = vperm.slane %v3187, %v3192
        %v3195 = vunpack.c.l.s4 1983009808
        %v3196 = vunpack.c.0.s8 %v3195
        %v3197 = vperm.slane %v3189, %v3196
        %v3198 = vrot.slane %v3193, 4
        %v3199 = vsel %vm1630, %v3198, %v3181
        %v3200 = vrot.slane %v3181, 4
        %v3201 = vsel %vm1630, %v3193, %v3200
        %v3203 = vunpack.c.l.s4 1934713408
        %v3204 = vunpack.c.0.s8 %v3203
        %v3205 = vperm.slane %v3199, %v3204
        %v3207 = vunpack.c.l.s4 1934713408
        %v3208 = vunpack.c.0.s8 %v3207
        %v3209 = vperm.slane %v3201, %v3208
        %v3210 = vrot.slane %v3197, 4
        %v3211 = vsel %vm1630, %v3210, %v3185
        %v3212 = vrot.slane %v3185, 4
        %v3213 = vsel %vm1630, %v3197, %v3212
        %v3215 = vunpack.c.l.s4 1934713408
        %v3216 = vunpack.c.0.s8 %v3215
        %v3217 = vperm.slane %v3211, %v3216
        %v3219 = vunpack.c.l.s4 1934713408
        %v3220 = vunpack.c.0.s8 %v3219
        %v3221 = vperm.slane %v3213, %v3220
        %v3222 = vrot.slane %v3205, 4
        %v3223 = vsel %vm1630, 0.0, %v3222
        %v3224 = vrot.slane %v3209, 4
        %v3225 = vsel %vm1630, 0.0, %v3224
        %v3226 = vrot.slane %v3217, 4
        %v3227 = vsel %vm1630, 0.0, %v3226
        %v3228 = vrot.slane %v3221, 4
        %v3229 = vsel %vm1630, 0.0, %v3228
        %v3230 = vrot.slane %v3087, 4
        %v3231 = vsel %vm1630, %v3230, %v1560
        %v3232 = vrot.slane %v1560, 4
        %v3233 = vsel %vm1630, %v3087, %v3232
        %v3235 = vunpack.c.l.s4 1983009808
        %v3236 = vunpack.c.0.s8 %v3235
        %v3237 = vperm.slane %v3231, %v3236
        %v3239 = vunpack.c.l.s4 1983009808
        %v3240 = vunpack.c.0.s8 %v3239
        %v3241 = vperm.slane %v3233, %v3240
        %v3242 = vrot.slane %v3105, 4
        %v3243 = vsel %vm1630, %v3242, %v3069
        %v3244 = vrot.slane %v3069, 4
        %v3245 = vsel %vm1630, %v3105, %v3244
        %v3247 = vunpack.c.l.s4 1983009808
        %v3248 = vunpack.c.0.s8 %v3247
        %v3249 = vperm.slane %v3243, %v3248
        %v3251 = vunpack.c.l.s4 1983009808
        %v3252 = vunpack.c.0.s8 %v3251
        %v3253 = vperm.slane %v3245, %v3252
        %v3254 = vrot.slane %v3249, 4
        %v3255 = vsel %vm1630, %v3254, %v3237
        %v3256 = vrot.slane %v3237, 4
        %v3257 = vsel %vm1630, %v3249, %v3256
        %v3259 = vunpack.c.l.s4 1934713408
        %v3260 = vunpack.c.0.s8 %v3259
        %v3261 = vperm.slane %v3255, %v3260
        %v3263 = vunpack.c.l.s4 1934713408
        %v3264 = vunpack.c.0.s8 %v3263
        %v3265 = vperm.slane %v3257, %v3264
        %v3266 = vrot.slane %v3253, 4
        %v3267 = vsel %vm1630, %v3266, %v3241
        %v3268 = vrot.slane %v3241, 4
        %v3269 = vsel %vm1630, %v3253, %v3268
        %v3271 = vunpack.c.l.s4 1934713408
        %v3272 = vunpack.c.0.s8 %v3271
        %v3273 = vperm.slane %v3267, %v3272
        %v3275 = vunpack.c.l.s4 1934713408
        %v3276 = vunpack.c.0.s8 %v3275
        %v3277 = vperm.slane %v3269, %v3276
        %v3278 = vrot.slane %v3261, 4
        %v3279 = vsel %vm1630, 0.0, %v3278
        %v3280 = vrot.slane %v3265, 4
        %v3281 = vsel %vm1630, 0.0, %v3280
        %v3282 = vrot.slane %v3273, 4
        %v3283 = vsel %vm1630, 0.0, %v3282
        %v3284 = vrot.slane %v3277, 4
        %v3285 = vsel %vm1630, 0.0, %v3284
        %v3286 = vrot.slane %v3089, 4
        %v3287 = vsel %vm1630, %v3286, %v1562
        %v3288 = vrot.slane %v1562, 4
        %v3289 = vsel %vm1630, %v3089, %v3288
        %v3291 = vunpack.c.l.s4 1983009808
        %v3292 = vunpack.c.0.s8 %v3291
        %v3293 = vperm.slane %v3287, %v3292
        %v3295 = vunpack.c.l.s4 1983009808
        %v3296 = vunpack.c.0.s8 %v3295
        %v3297 = vperm.slane %v3289, %v3296
        %v3298 = vrot.slane %v3107, 4
        %v3299 = vsel %vm1630, %v3298, %v3071
        %v3300 = vrot.slane %v3071, 4
        %v3301 = vsel %vm1630, %v3107, %v3300
        %v3303 = vunpack.c.l.s4 1983009808
        %v3304 = vunpack.c.0.s8 %v3303
        %v3305 = vperm.slane %v3299, %v3304
        %v3307 = vunpack.c.l.s4 1983009808
        %v3308 = vunpack.c.0.s8 %v3307
        %v3309 = vperm.slane %v3301, %v3308
        %v3310 = vrot.slane %v3305, 4
        %v3311 = vsel %vm1630, %v3310, %v3293
        %v3312 = vrot.slane %v3293, 4
        %v3313 = vsel %vm1630, %v3305, %v3312
        %v3315 = vunpack.c.l.s4 1934713408
        %v3316 = vunpack.c.0.s8 %v3315
        %v3317 = vperm.slane %v3311, %v3316
        %v3319 = vunpack.c.l.s4 1934713408
        %v3320 = vunpack.c.0.s8 %v3319
        %v3321 = vperm.slane %v3313, %v3320
        %v3322 = vrot.slane %v3309, 4
        %v3323 = vsel %vm1630, %v3322, %v3297
        %v3324 = vrot.slane %v3297, 4
        %v3325 = vsel %vm1630, %v3309, %v3324
        %v3327 = vunpack.c.l.s4 1934713408
        %v3328 = vunpack.c.0.s8 %v3327
        %v3329 = vperm.slane %v3323, %v3328
        %v3331 = vunpack.c.l.s4 1934713408
        %v3332 = vunpack.c.0.s8 %v3331
        %v3333 = vperm.slane %v3325, %v3332
        %v3334 = vrot.slane %v3317, 4
        %v3335 = vsel %vm1630, 0.0, %v3334
        %v3336 = vrot.slane %v3321, 4
        %v3337 = vsel %vm1630, 0.0, %v3336
        %v3338 = vrot.slane %v3329, 4
        %v3339 = vsel %vm1630, 0.0, %v3338
        %v3340 = vrot.slane %v3333, 4
        %v3341 = vsel %vm1630, 0.0, %v3340
        %v3342 = vrot.slane %v3091, 4
        %v3343 = vsel %vm1630, %v3342, %v1565
        %v3344 = vrot.slane %v1565, 4
        %v3345 = vsel %vm1630, %v3091, %v3344
        %v3347 = vunpack.c.l.s4 1983009808
        %v3348 = vunpack.c.0.s8 %v3347
        %v3349 = vperm.slane %v3343, %v3348
        %v3351 = vunpack.c.l.s4 1983009808
        %v3352 = vunpack.c.0.s8 %v3351
        %v3353 = vperm.slane %v3345, %v3352
        %v3354 = vrot.slane %v3109, 4
        %v3355 = vsel %vm1630, %v3354, %v3073
        %v3356 = vrot.slane %v3073, 4
        %v3357 = vsel %vm1630, %v3109, %v3356
        %v3359 = vunpack.c.l.s4 1983009808
        %v3360 = vunpack.c.0.s8 %v3359
        %v3361 = vperm.slane %v3355, %v3360
        %v3363 = vunpack.c.l.s4 1983009808
        %v3364 = vunpack.c.0.s8 %v3363
        %v3365 = vperm.slane %v3357, %v3364
        %v3366 = vrot.slane %v3361, 4
        %v3367 = vsel %vm1630, %v3366, %v3349
        %v3368 = vrot.slane %v3349, 4
        %v3369 = vsel %vm1630, %v3361, %v3368
        %v3371 = vunpack.c.l.s4 1934713408
        %v3372 = vunpack.c.0.s8 %v3371
        %v3373 = vperm.slane %v3367, %v3372
        %v3375 = vunpack.c.l.s4 1934713408
        %v3376 = vunpack.c.0.s8 %v3375
        %v3377 = vperm.slane %v3369, %v3376
        %v3378 = vrot.slane %v3365, 4
        %v3379 = vsel %vm1630, %v3378, %v3353
        %v3380 = vrot.slane %v3353, 4
        %v3381 = vsel %vm1630, %v3365, %v3380
        %v3383 = vunpack.c.l.s4 1934713408
        %v3384 = vunpack.c.0.s8 %v3383
        %v3385 = vperm.slane %v3379, %v3384
        %v3387 = vunpack.c.l.s4 1934713408
        %v3388 = vunpack.c.0.s8 %v3387
        %v3389 = vperm.slane %v3381, %v3388
        %v3390 = vrot.slane %v3373, 4
        %v3391 = vsel %vm1630, 0.0, %v3390
        %v3392 = vrot.slane %v3377, 4
        %v3393 = vsel %vm1630, 0.0, %v3392
        %v3394 = vrot.slane %v3385, 4
        %v3395 = vsel %vm1630, 0.0, %v3394
        %v3396 = vrot.slane %v3389, 4
        %v3397 = vsel %vm1630, 0.0, %v3396
        %v3398 = vrot.slane %v3093, 4
        %v3399 = vsel %vm1630, %v3398, %v1567
        %v3400 = vrot.slane %v1567, 4
        %v3401 = vsel %vm1630, %v3093, %v3400
        %v3403 = vunpack.c.l.s4 1983009808
        %v3404 = vunpack.c.0.s8 %v3403
        %v3405 = vperm.slane %v3399, %v3404
        %v3407 = vunpack.c.l.s4 1983009808
        %v3408 = vunpack.c.0.s8 %v3407
        %v3409 = vperm.slane %v3401, %v3408
        %v3410 = vrot.slane %v3111, 4
        %v3411 = vsel %vm1630, %v3410, %v3075
        %v3412 = vrot.slane %v3075, 4
        %v3413 = vsel %vm1630, %v3111, %v3412
        %v3415 = vunpack.c.l.s4 1983009808
        %v3416 = vunpack.c.0.s8 %v3415
        %v3417 = vperm.slane %v3411, %v3416
        %v3419 = vunpack.c.l.s4 1983009808
        %v3420 = vunpack.c.0.s8 %v3419
        %v3421 = vperm.slane %v3413, %v3420
        %v3422 = vrot.slane %v3417, 4
        %v3423 = vsel %vm1630, %v3422, %v3405
        %v3424 = vrot.slane %v3405, 4
        %v3425 = vsel %vm1630, %v3417, %v3424
        %v3427 = vunpack.c.l.s4 1934713408
        %v3428 = vunpack.c.0.s8 %v3427
        %v3429 = vperm.slane %v3423, %v3428
        %v3431 = vunpack.c.l.s4 1934713408
        %v3432 = vunpack.c.0.s8 %v3431
        %v3433 = vperm.slane %v3425, %v3432
        %v3434 = vrot.slane %v3421, 4
        %v3435 = vsel %vm1630, %v3434, %v3409
        %v3436 = vrot.slane %v3409, 4
        %v3437 = vsel %vm1630, %v3421, %v3436
        %v3439 = vunpack.c.l.s4 1934713408
        %v3440 = vunpack.c.0.s8 %v3439
        %v3441 = vperm.slane %v3435, %v3440
        %v3443 = vunpack.c.l.s4 1934713408
        %v3444 = vunpack.c.0.s8 %v3443
        %v3445 = vperm.slane %v3437, %v3444
        %v3446 = vrot.slane %v3429, 4
        %v3447 = vsel %vm1630, 0.0, %v3446
        %v3448 = vrot.slane %v3433, 4
        %v3449 = vsel %vm1630, 0.0, %v3448
        %v3450 = vrot.slane %v3441, 4
        %v3451 = vsel %vm1630, 0.0, %v3450
        %v3452 = vrot.slane %v3445, 4
        %v3453 = vsel %vm1630, 0.0, %v3452
        %v3454 = vsel %vm1630, %v3168, %v3149
        %v3456 = vunpack.c.l.s4 1983009808
        %v3457 = vunpack.c.0.s8 %v3456
        %v3458 = vperm.slane %v3454, %v3457
        %v3459 = vrot.slane %v3169, 4
        %v3460 = vsel %vm1630, %v3459, %v3167
        %v3462 = vunpack.c.l.s4 1983009808
        %v3463 = vunpack.c.0.s8 %v3462
        %v3464 = vperm.slane %v3460, %v3463
        %v3465 = vsel %vm1630, %v3172, %v3161
        %v3467 = vunpack.c.l.s4 1983009808
        %v3468 = vunpack.c.0.s8 %v3467
        %v3469 = vperm.slane %v3465, %v3468
        %v3470 = vrot.slane %v3173, 4
        %v3471 = vsel %vm1630, %v3470, %v3171
        %v3473 = vunpack.c.l.s4 1983009808
        %v3474 = vunpack.c.0.s8 %v3473
        %v3475 = vperm.slane %v3471, %v3474
        %v3476 = vrot.slane %v3464, 4
        %v3477 = vsel %vm1630, %v3476, %v3458
        %v3478 = vrot.slane %v3458, 4
        %v3479 = vsel %vm1630, %v3464, %v3478
        %v3481 = vunpack.c.l.s4 1934713408
        %v3482 = vunpack.c.0.s8 %v3481
        %v3483 = vperm.slane %v3477, %v3482
        %v3485 = vunpack.c.l.s4 1934713408
        %v3486 = vunpack.c.0.s8 %v3485
        %v3487 = vperm.slane %v3479, %v3486
        %v3488 = vrot.slane %v3475, 4
        %v3489 = vsel %vm1630, %v3488, %v3469
        %v3490 = vrot.slane %v3469, 4
        %v3491 = vsel %vm1630, %v3475, %v3490
        %v3493 = vunpack.c.l.s4 1934713408
        %v3494 = vunpack.c.0.s8 %v3493
        %v3495 = vperm.slane %v3489, %v3494
        %v3497 = vunpack.c.l.s4 1934713408
        %v3498 = vunpack.c.0.s8 %v3497
        %v3499 = vperm.slane %v3491, %v3498
        %v3500 = vrot.slane %v3495, 4
        %v3501 = vsel %vm1630, %v3500, %v3483
        %v3502 = vrot.slane %v3483, 4
        %v3503 = vsel %vm1630, %v3495, %v3502
        %v3504 = vrot.slane %v3499, 4
        %v3505 = vsel %vm1630, %v3504, %v3487
        %v3506 = vrot.slane %v3487, 4
        %v3507 = vsel %vm1630, %v3499, %v3506
        %v3508 = vsel %vm1630, %v3224, %v3205
        %v3510 = vunpack.c.l.s4 1983009808
        %v3511 = vunpack.c.0.s8 %v3510
        %v3512 = vperm.slane %v3508, %v3511
        %v3513 = vrot.slane %v3225, 4
        %v3514 = vsel %vm1630, %v3513, %v3223
        %v3516 = vunpack.c.l.s4 1983009808
        %v3517 = vunpack.c.0.s8 %v3516
        %v3518 = vperm.slane %v3514, %v3517
        %v3519 = vsel %vm1630, %v3228, %v3217
        %v3521 = vunpack.c.l.s4 1983009808
        %v3522 = vunpack.c.0.s8 %v3521
        %v3523 = vperm.slane %v3519, %v3522
        %v3524 = vrot.slane %v3229, 4
        %v3525 = vsel %vm1630, %v3524, %v3227
        %v3527 = vunpack.c.l.s4 1983009808
        %v3528 = vunpack.c.0.s8 %v3527
        %v3529 = vperm.slane %v3525, %v3528
        %v3530 = vrot.slane %v3518, 4
        %v3531 = vsel %vm1630, %v3530, %v3512
        %v3532 = vrot.slane %v3512, 4
        %v3533 = vsel %vm1630, %v3518, %v3532
        %v3535 = vunpack.c.l.s4 1934713408
        %v3536 = vunpack.c.0.s8 %v3535
        %v3537 = vperm.slane %v3531, %v3536
        %v3539 = vunpack.c.l.s4 1934713408
        %v3540 = vunpack.c.0.s8 %v3539
        %v3541 = vperm.slane %v3533, %v3540
        %v3542 = vrot.slane %v3529, 4
        %v3543 = vsel %vm1630, %v3542, %v3523
        %v3544 = vrot.slane %v3523, 4
        %v3545 = vsel %vm1630, %v3529, %v3544
        %v3547 = vunpack.c.l.s4 1934713408
        %v3548 = vunpack.c.0.s8 %v3547
        %v3549 = vperm.slane %v3543, %v3548
        %v3551 = vunpack.c.l.s4 1934713408
        %v3552 = vunpack.c.0.s8 %v3551
        %v3553 = vperm.slane %v3545, %v3552
        %v3554 = vrot.slane %v3549, 4
        %v3555 = vsel %vm1630, %v3554, %v3537
        %v3556 = vrot.slane %v3537, 4
        %v3557 = vsel %vm1630, %v3549, %v3556
        %v3558 = vrot.slane %v3553, 4
        %v3559 = vsel %vm1630, %v3558, %v3541
        %v3560 = vrot.slane %v3541, 4
        %v3561 = vsel %vm1630, %v3553, %v3560
        %v3562 = vsel %vm1630, %v3280, %v3261
        %v3564 = vunpack.c.l.s4 1983009808
        %v3565 = vunpack.c.0.s8 %v3564
        %v3566 = vperm.slane %v3562, %v3565
        %v3567 = vrot.slane %v3281, 4
        %v3568 = vsel %vm1630, %v3567, %v3279
        %v3570 = vunpack.c.l.s4 1983009808
        %v3571 = vunpack.c.0.s8 %v3570
        %v3572 = vperm.slane %v3568, %v3571
        %v3573 = vsel %vm1630, %v3284, %v3273
        %v3575 = vunpack.c.l.s4 1983009808
        %v3576 = vunpack.c.0.s8 %v3575
        %v3577 = vperm.slane %v3573, %v3576
        %v3578 = vrot.slane %v3285, 4
        %v3579 = vsel %vm1630, %v3578, %v3283
        %v3581 = vunpack.c.l.s4 1983009808
        %v3582 = vunpack.c.0.s8 %v3581
        %v3583 = vperm.slane %v3579, %v3582
        %v3584 = vrot.slane %v3572, 4
        %v3585 = vsel %vm1630, %v3584, %v3566
        %v3586 = vrot.slane %v3566, 4
        %v3587 = vsel %vm1630, %v3572, %v3586
        %v3589 = vunpack.c.l.s4 1934713408
        %v3590 = vunpack.c.0.s8 %v3589
        %v3591 = vperm.slane %v3585, %v3590
        %v3593 = vunpack.c.l.s4 1934713408
        %v3594 = vunpack.c.0.s8 %v3593
        %v3595 = vperm.slane %v3587, %v3594
        %v3596 = vrot.slane %v3583, 4
        %v3597 = vsel %vm1630, %v3596, %v3577
        %v3598 = vrot.slane %v3577, 4
        %v3599 = vsel %vm1630, %v3583, %v3598
        %v3601 = vunpack.c.l.s4 1934713408
        %v3602 = vunpack.c.0.s8 %v3601
        %v3603 = vperm.slane %v3597, %v3602
        %v3605 = vunpack.c.l.s4 1934713408
        %v3606 = vunpack.c.0.s8 %v3605
        %v3607 = vperm.slane %v3599, %v3606
        %v3608 = vrot.slane %v3603, 4
        %v3609 = vsel %vm1630, %v3608, %v3591
        %v3610 = vrot.slane %v3591, 4
        %v3611 = vsel %vm1630, %v3603, %v3610
        %v3612 = vrot.slane %v3607, 4
        %v3613 = vsel %vm1630, %v3612, %v3595
        %v3614 = vrot.slane %v3595, 4
        %v3615 = vsel %vm1630, %v3607, %v3614
        %v3616 = vsel %vm1630, %v3336, %v3317
        %v3618 = vunpack.c.l.s4 1983009808
        %v3619 = vunpack.c.0.s8 %v3618
        %v3620 = vperm.slane %v3616, %v3619
        %v3621 = vrot.slane %v3337, 4
        %v3622 = vsel %vm1630, %v3621, %v3335
        %v3624 = vunpack.c.l.s4 1983009808
        %v3625 = vunpack.c.0.s8 %v3624
        %v3626 = vperm.slane %v3622, %v3625
        %v3627 = vsel %vm1630, %v3340, %v3329
        %v3629 = vunpack.c.l.s4 1983009808
        %v3630 = vunpack.c.0.s8 %v3629
        %v3631 = vperm.slane %v3627, %v3630
        %v3632 = vrot.slane %v3341, 4
        %v3633 = vsel %vm1630, %v3632, %v3339
        %v3635 = vunpack.c.l.s4 1983009808
        %v3636 = vunpack.c.0.s8 %v3635
        %v3637 = vperm.slane %v3633, %v3636
        %v3638 = vrot.slane %v3626, 4
        %v3639 = vsel %vm1630, %v3638, %v3620
        %v3640 = vrot.slane %v3620, 4
        %v3641 = vsel %vm1630, %v3626, %v3640
        %v3643 = vunpack.c.l.s4 1934713408
        %v3644 = vunpack.c.0.s8 %v3643
        %v3645 = vperm.slane %v3639, %v3644
        %v3647 = vunpack.c.l.s4 1934713408
        %v3648 = vunpack.c.0.s8 %v3647
        %v3649 = vperm.slane %v3641, %v3648
        %v3650 = vrot.slane %v3637, 4
        %v3651 = vsel %vm1630, %v3650, %v3631
        %v3652 = vrot.slane %v3631, 4
        %v3653 = vsel %vm1630, %v3637, %v3652
        %v3655 = vunpack.c.l.s4 1934713408
        %v3656 = vunpack.c.0.s8 %v3655
        %v3657 = vperm.slane %v3651, %v3656
        %v3659 = vunpack.c.l.s4 1934713408
        %v3660 = vunpack.c.0.s8 %v3659
        %v3661 = vperm.slane %v3653, %v3660
        %v3662 = vrot.slane %v3657, 4
        %v3663 = vsel %vm1630, %v3662, %v3645
        %v3664 = vrot.slane %v3645, 4
        %v3665 = vsel %vm1630, %v3657, %v3664
        %v3666 = vrot.slane %v3661, 4
        %v3667 = vsel %vm1630, %v3666, %v3649
        %v3668 = vrot.slane %v3649, 4
        %v3669 = vsel %vm1630, %v3661, %v3668
        %v3670 = vsel %vm1630, %v3392, %v3373
        %v3672 = vunpack.c.l.s4 1983009808
        %v3673 = vunpack.c.0.s8 %v3672
        %v3674 = vperm.slane %v3670, %v3673
        %v3675 = vrot.slane %v3393, 4
        %v3676 = vsel %vm1630, %v3675, %v3391
        %v3678 = vunpack.c.l.s4 1983009808
        %v3679 = vunpack.c.0.s8 %v3678
        %v3680 = vperm.slane %v3676, %v3679
        %v3681 = vsel %vm1630, %v3396, %v3385
        %v3683 = vunpack.c.l.s4 1983009808
        %v3684 = vunpack.c.0.s8 %v3683
        %v3685 = vperm.slane %v3681, %v3684
        %v3686 = vrot.slane %v3397, 4
        %v3687 = vsel %vm1630, %v3686, %v3395
        %v3689 = vunpack.c.l.s4 1983009808
        %v3690 = vunpack.c.0.s8 %v3689
        %v3691 = vperm.slane %v3687, %v3690
        %v3692 = vrot.slane %v3680, 4
        %v3693 = vsel %vm1630, %v3692, %v3674
        %v3694 = vrot.slane %v3674, 4
        %v3695 = vsel %vm1630, %v3680, %v3694
        %v3697 = vunpack.c.l.s4 1934713408
        %v3698 = vunpack.c.0.s8 %v3697
        %v3699 = vperm.slane %v3693, %v3698
        %v3701 = vunpack.c.l.s4 1934713408
        %v3702 = vunpack.c.0.s8 %v3701
        %v3703 = vperm.slane %v3695, %v3702
        %v3704 = vrot.slane %v3691, 4
        %v3705 = vsel %vm1630, %v3704, %v3685
        %v3706 = vrot.slane %v3685, 4
        %v3707 = vsel %vm1630, %v3691, %v3706
        %v3709 = vunpack.c.l.s4 1934713408
        %v3710 = vunpack.c.0.s8 %v3709
        %v3711 = vperm.slane %v3705, %v3710
        %v3713 = vunpack.c.l.s4 1934713408
        %v3714 = vunpack.c.0.s8 %v3713
        %v3715 = vperm.slane %v3707, %v3714
        %v3716 = vrot.slane %v3711, 4
        %v3717 = vsel %vm1630, %v3716, %v3699
        %v3718 = vrot.slane %v3699, 4
        %v3719 = vsel %vm1630, %v3711, %v3718
        %v3720 = vrot.slane %v3715, 4
        %v3721 = vsel %vm1630, %v3720, %v3703
        %v3722 = vrot.slane %v3703, 4
        %v3723 = vsel %vm1630, %v3715, %v3722
        %v3724 = vsel %vm1630, %v3448, %v3429
        %v3726 = vunpack.c.l.s4 1983009808
        %v3727 = vunpack.c.0.s8 %v3726
        %v3728 = vperm.slane %v3724, %v3727
        %v3729 = vrot.slane %v3449, 4
        %v3730 = vsel %vm1630, %v3729, %v3447
        %v3732 = vunpack.c.l.s4 1983009808
        %v3733 = vunpack.c.0.s8 %v3732
        %v3734 = vperm.slane %v3730, %v3733
        %v3735 = vsel %vm1630, %v3452, %v3441
        %v3737 = vunpack.c.l.s4 1983009808
        %v3738 = vunpack.c.0.s8 %v3737
        %v3739 = vperm.slane %v3735, %v3738
        %v3740 = vrot.slane %v3453, 4
        %v3741 = vsel %vm1630, %v3740, %v3451
        %v3743 = vunpack.c.l.s4 1983009808
        %v3744 = vunpack.c.0.s8 %v3743
        %v3745 = vperm.slane %v3741, %v3744
        %v3746 = vrot.slane %v3734, 4
        %v3747 = vsel %vm1630, %v3746, %v3728
        %v3748 = vrot.slane %v3728, 4
        %v3749 = vsel %vm1630, %v3734, %v3748
        %v3751 = vunpack.c.l.s4 1934713408
        %v3752 = vunpack.c.0.s8 %v3751
        %v3753 = vperm.slane %v3747, %v3752
        %v3755 = vunpack.c.l.s4 1934713408
        %v3756 = vunpack.c.0.s8 %v3755
        %v3757 = vperm.slane %v3749, %v3756
        %v3758 = vrot.slane %v3745, 4
        %v3759 = vsel %vm1630, %v3758, %v3739
        %v3760 = vrot.slane %v3739, 4
        %v3761 = vsel %vm1630, %v3745, %v3760
        %v3763 = vunpack.c.l.s4 1934713408
        %v3764 = vunpack.c.0.s8 %v3763
        %v3765 = vperm.slane %v3759, %v3764
        %v3767 = vunpack.c.l.s4 1934713408
        %v3768 = vunpack.c.0.s8 %v3767
        %v3769 = vperm.slane %v3761, %v3768
        %v3770 = vrot.slane %v3765, 4
        %v3771 = vsel %vm1630, %v3770, %v3753
        %v3772 = vrot.slane %v3753, 4
        %v3773 = vsel %vm1630, %v3765, %v3772
        %v3774 = vrot.slane %v3769, 4
        %v3775 = vsel %vm1630, %v3774, %v3757
        %v3776 = vrot.slane %v3757, 4
        %v3777 = vsel %vm1630, %v3769, %v3776
        %v3778 = vpack.c.bf16 %v3501, %v3501
        %v3779 = vpack.c.bf16 %v3555, %v3555
        %v3780 = vpack.c.bf16 %v3609, %v3609
        %v3781 = vpack.c.bf16 %v3663, %v3663
        %v3782 = vpack.c.bf16 %v3717, %v3717
        %v3783 = vpack.c.bf16 %v3771, %v3771
        %v3784 = vpack.c.bf16 %v3503, %v3503
        %v3785 = vpack.c.bf16 %v3557, %v3557
        %v3786 = vpack.c.bf16 %v3611, %v3611
        %v3787 = vpack.c.bf16 %v3665, %v3665
        %v3788 = vpack.c.bf16 %v3719, %v3719
        %v3789 = vpack.c.bf16 %v3773, %v3773
        %v3790 = vpack.c.bf16 %v3505, %v3505
        %v3791 = vpack.c.bf16 %v3559, %v3559
        %v3792 = vpack.c.bf16 %v3613, %v3613
        %v3793 = vpack.c.bf16 %v3667, %v3667
        %v3794 = vpack.c.bf16 %v3721, %v3721
        %v3795 = vpack.c.bf16 %v3775, %v3775
        %v3796 = vpack.c.bf16 %v3507, %v3507
        %v3797 = vpack.c.bf16 %v3561, %v3561
        %v3798 = vpack.c.bf16 %v3615, %v3615
        %v3799 = vpack.c.bf16 %v3669, %v3669
        %v3800 = vpack.c.bf16 %v3723, %v3723
        %v3801 = vpack.c.bf16 %v3777, %v3777
        %v3802 = vld [vmem:[#allocation9] sm:$0xff]
        %v3803 = vld [vmem:[#allocation9 + $0x8] sm:$0xff]
        %v3804 = vld [vmem:[#allocation9 + $0x10] sm:$0xff]
        %v3805 = vld [vmem:[#allocation9 + $0x18] sm:$0xff]
        %v3806 = vld [vmem:[#allocation9 + $0x20] sm:$0xff]
        %v3807 = vld [vmem:[#allocation9 + $0x28] sm:$0xff]
        %v3814 = vunpack.c.l.b16 %v2290
        %v3815 = vunpack.c.l.b16 %v2291
        %v3816 = vunpack.c.l.b16 %v2292
        %v3817 = vunpack.c.l.b16 %v2293
        %v3818 = vunpack.c.l.b16 %v2294
        %v3819 = vunpack.c.l.b16 %v2295
        %v3820 = vpack.c.b16 %v3815, %v3814
        %v3821 = vpack.c.b16 %v3817, %v3816
        %v3822 = vpack.c.b16 %v3819, %v3818
        %v3829 = vunpack.c.l.b16 %v3034
        %v3830 = vunpack.c.l.b16 %v3035
        %v3831 = vunpack.c.l.b16 %v3036
        %v3832 = vunpack.c.l.b16 %v3037
        %v3833 = vunpack.c.l.b16 %v3038
        %v3834 = vunpack.c.l.b16 %v3039
        %v3835 = vpack.c.b16 %v3830, %v3829
        %v3836 = vpack.c.b16 %v3832, %v3831
        %v3837 = vpack.c.b16 %v3834, %v3833
        %vm3838 = vcmask 261120
        %v3840 = vsel %vm3838, %v3820, 0
        %v3843 = vsel %vm3838, %v3821, 0
        %v3846 = vsel %vm3838, %v3822, 0
        %v3849 = vsel %vm3838, %v3835, 0
        %v3852 = vsel %vm3838, %v3836, 0
        %v3855 = vsel %vm3838, %v3837, 0
        %3857 = vmatpush.bf16.xpose.msra.mxu0 0
        %3858 = vmatpush.bf16.xpose.msra.mxu0 0
        %3859 = vmatpush.bf16.xpose.msra.mxu0 0
        %3860 = vmatpush.bf16.xpose.msra.mxu0 0
        %3861 = vmatpush.bf16.xpose.msra.mxu0 0
        %3862 = vmatpush.bf16.xpose.msra.mxu0 %v3855
        %3863 = vmatpush.bf16.xpose.msra.mxu0 %v3852
        %3864 = vmatpush.bf16.xpose.msra.mxu0 %v3849
        %3865 = vmatmul.bf16.gmra.mxu0 %v3840
        %v3866 = vpop.f32.mrf.mxu0
        %v3867 = vadd.f32 %v3802, %v3866
        %v3868 = vpop.f32.mrf.mxu0
        %v3869 = vadd.f32 %v3803, %v3868
        %3870 = vmatmul.bf16.gmra.mxu0 %v3843
        %v3871 = vpop.f32.mrf.mxu0
        %v3872 = vadd.f32 %v3804, %v3871
        %v3873 = vpop.f32.mrf.mxu0
        %v3874 = vadd.f32 %v3805, %v3873
        %3875 = vmatmul.bf16.gmra.mxu0 %v3846
        %v3876 = vpop.f32.mrf.mxu0
        %v3877 = vadd.f32 %v3806, %v3876
        %v3878 = vpop.f32.mrf.mxu0
        %v3879 = vadd.f32 %v3807, %v3878
        %3880 = vdwg.mxu0
        %v3887 = vunpack.c.l.b16 %v2296
        %v3888 = vunpack.c.l.b16 %v2297
        %v3889 = vunpack.c.l.b16 %v2298
        %v3890 = vunpack.c.l.b16 %v2299
        %v3891 = vunpack.c.l.b16 %v2300
        %v3892 = vunpack.c.l.b16 %v2301
        %v3893 = vpack.c.b16 %v3888, %v3887
        %v3894 = vpack.c.b16 %v3890, %v3889
        %v3895 = vpack.c.b16 %v3892, %v3891
        %v3902 = vunpack.c.l.b16 %v3040
        %v3903 = vunpack.c.l.b16 %v3041
        %v3904 = vunpack.c.l.b16 %v3042
        %v3905 = vunpack.c.l.b16 %v3043
        %v3906 = vunpack.c.l.b16 %v3044
        %v3907 = vunpack.c.l.b16 %v3045
        %v3908 = vpack.c.b16 %v3903, %v3902
        %v3909 = vpack.c.b16 %v3905, %v3904
        %v3910 = vpack.c.b16 %v3907, %v3906
        %v3912 = vsel %vm3838, %v3893, 0
        %v3915 = vsel %vm3838, %v3894, 0
        %v3918 = vsel %vm3838, %v3895, 0
        %v3921 = vsel %vm3838, %v3908, 0
        %v3924 = vsel %vm3838, %v3909, 0
        %v3927 = vsel %vm3838, %v3910, 0
        %3929 = vmatpush.bf16.xpose.msra.mxu0 0
        %3930 = vmatpush.bf16.xpose.msra.mxu0 0
        %3931 = vmatpush.bf16.xpose.msra.mxu0 0
        %3932 = vmatpush.bf16.xpose.msra.mxu0 0
        %3933 = vmatpush.bf16.xpose.msra.mxu0 0
        %3934 = vmatpush.bf16.xpose.msra.mxu0 %v3927
        %3935 = vmatpush.bf16.xpose.msra.mxu0 %v3924
        %3936 = vmatpush.bf16.xpose.msra.mxu0 %v3921
        %3937 = vmatmul.bf16.gmra.mxu0 %v3912
        %v3938 = vpop.f32.mrf.mxu0
        %v3939 = vadd.f32 %v3802, %v3938
        %v3940 = vpop.f32.mrf.mxu0
        %v3941 = vadd.f32 %v3803, %v3940
        %3942 = vmatmul.bf16.gmra.mxu0 %v3915
        %v3943 = vpop.f32.mrf.mxu0
        %v3944 = vadd.f32 %v3804, %v3943
        %v3945 = vpop.f32.mrf.mxu0
        %v3946 = vadd.f32 %v3805, %v3945
        %3947 = vmatmul.bf16.gmra.mxu0 %v3918
        %v3948 = vpop.f32.mrf.mxu0
        %v3949 = vadd.f32 %v3806, %v3948
        %v3950 = vpop.f32.mrf.mxu0
        %v3951 = vadd.f32 %v3807, %v3950
        %3952 = vdwg.mxu0
        %v3959 = vunpack.c.l.b16 %v2302
        %v3960 = vunpack.c.l.b16 %v2303
        %v3961 = vunpack.c.l.b16 %v2304
        %v3962 = vunpack.c.l.b16 %v2305
        %v3963 = vunpack.c.l.b16 %v2306
        %v3964 = vunpack.c.l.b16 %v2307
        %v3965 = vpack.c.b16 %v3960, %v3959
        %v3966 = vpack.c.b16 %v3962, %v3961
        %v3967 = vpack.c.b16 %v3964, %v3963
        %v3974 = vunpack.c.l.b16 %v3046
        %v3975 = vunpack.c.l.b16 %v3047
        %v3976 = vunpack.c.l.b16 %v3048
        %v3977 = vunpack.c.l.b16 %v3049
        %v3978 = vunpack.c.l.b16 %v3050
        %v3979 = vunpack.c.l.b16 %v3051
        %v3980 = vpack.c.b16 %v3975, %v3974
        %v3981 = vpack.c.b16 %v3977, %v3976
        %v3982 = vpack.c.b16 %v3979, %v3978
        %v3984 = vsel %vm3838, %v3965, 0
        %v3987 = vsel %vm3838, %v3966, 0
        %v3990 = vsel %vm3838, %v3967, 0
        %v3993 = vsel %vm3838, %v3980, 0
        %v3996 = vsel %vm3838, %v3981, 0
        %v3999 = vsel %vm3838, %v3982, 0
        %4001 = vmatpush.bf16.xpose.msra.mxu0 0
        %4002 = vmatpush.bf16.xpose.msra.mxu0 0
        %4003 = vmatpush.bf16.xpose.msra.mxu0 0
        %4004 = vmatpush.bf16.xpose.msra.mxu0 0
        %4005 = vmatpush.bf16.xpose.msra.mxu0 0
        %4006 = vmatpush.bf16.xpose.msra.mxu0 %v3999
        %4007 = vmatpush.bf16.xpose.msra.mxu0 %v3996
        %4008 = vmatpush.bf16.xpose.msra.mxu0 %v3993
        %4009 = vmatmul.bf16.gmra.mxu0 %v3984
        %v4010 = vpop.f32.mrf.mxu0
        %v4011 = vadd.f32 %v3802, %v4010
        %v4012 = vpop.f32.mrf.mxu0
        %v4013 = vadd.f32 %v3803, %v4012
        %4014 = vmatmul.bf16.gmra.mxu0 %v3987
        %v4015 = vpop.f32.mrf.mxu0
        %v4016 = vadd.f32 %v3804, %v4015
        %v4017 = vpop.f32.mrf.mxu0
        %v4018 = vadd.f32 %v3805, %v4017
        %4019 = vmatmul.bf16.gmra.mxu0 %v3990
        %v4020 = vpop.f32.mrf.mxu0
        %v4021 = vadd.f32 %v3806, %v4020
        %v4022 = vpop.f32.mrf.mxu0
        %v4023 = vadd.f32 %v3807, %v4022
        %4024 = vdwg.mxu0
        %v4031 = vunpack.c.l.b16 %v2308
        %v4032 = vunpack.c.l.b16 %v2309
        %v4033 = vunpack.c.l.b16 %v2310
        %v4034 = vunpack.c.l.b16 %v2311
        %v4035 = vunpack.c.l.b16 %v2312
        %v4036 = vunpack.c.l.b16 %v2313
        %v4037 = vpack.c.b16 %v4032, %v4031
        %v4038 = vpack.c.b16 %v4034, %v4033
        %v4039 = vpack.c.b16 %v4036, %v4035
        %v4046 = vunpack.c.l.b16 %v3052
        %v4047 = vunpack.c.l.b16 %v3053
        %v4048 = vunpack.c.l.b16 %v3054
        %v4049 = vunpack.c.l.b16 %v3055
        %v4050 = vunpack.c.l.b16 %v3056
        %v4051 = vunpack.c.l.b16 %v3057
        %v4052 = vpack.c.b16 %v4047, %v4046
        %v4053 = vpack.c.b16 %v4049, %v4048
        %v4054 = vpack.c.b16 %v4051, %v4050
        %v4056 = vsel %vm3838, %v4037, 0
        %v4059 = vsel %vm3838, %v4038, 0
        %v4062 = vsel %vm3838, %v4039, 0
        %v4065 = vsel %vm3838, %v4052, 0
        %v4068 = vsel %vm3838, %v4053, 0
        %v4071 = vsel %vm3838, %v4054, 0
        %4073 = vmatpush.bf16.xpose.msra.mxu0 0
        %4074 = vmatpush.bf16.xpose.msra.mxu0 0
        %4075 = vmatpush.bf16.xpose.msra.mxu0 0
        %4076 = vmatpush.bf16.xpose.msra.mxu0 0
        %4077 = vmatpush.bf16.xpose.msra.mxu0 0
        %4078 = vmatpush.bf16.xpose.msra.mxu0 %v4071
        %4079 = vmatpush.bf16.xpose.msra.mxu0 %v4068
        %4080 = vmatpush.bf16.xpose.msra.mxu0 %v4065
        %4081 = vmatmul.bf16.gmra.mxu0 %v4056
        %v4082 = vpop.f32.mrf.mxu0
        %v4083 = vadd.f32 %v3802, %v4082
        %v4084 = vpop.f32.mrf.mxu0
        %v4085 = vadd.f32 %v3803, %v4084
        %4086 = vmatmul.bf16.gmra.mxu0 %v4059
        %v4087 = vpop.f32.mrf.mxu0
        %v4088 = vadd.f32 %v3804, %v4087
        %v4089 = vpop.f32.mrf.mxu0
        %v4090 = vadd.f32 %v3805, %v4089
        %4091 = vmatmul.bf16.gmra.mxu0 %v4062
        %v4092 = vpop.f32.mrf.mxu0
        %v4093 = vadd.f32 %v3806, %v4092
        %v4094 = vpop.f32.mrf.mxu0
        %v4095 = vadd.f32 %v3807, %v4094
        %4096 = vdwg.mxu0
        %vm4097 = vcmask 392192
        %v4098 = vsel %vm4097, %v3867, -inf
        %4099 = vmax.xlane.f32.xlu0 %v4098
        %v4100 = vpop.xlane.xlu0 %4099
        %v4101 = vsel %vm4097, %v3869, -inf
        %4102 = vmax.xlane.f32.xlu0 %v4101
        %v4103 = vpop.xlane.xlu0 %4102
        %v4104 = vsel %vm4097, %v3872, -inf
        %4105 = vmax.xlane.f32.xlu0 %v4104
        %v4106 = vpop.xlane.xlu0 %4105
        %v4107 = vsel %vm4097, %v3874, -inf
        %4108 = vmax.xlane.f32.xlu0 %v4107
        %v4109 = vpop.xlane.xlu0 %4108
        %v4110 = vsel %vm4097, %v3877, -inf
        %4111 = vmax.xlane.f32.xlu0 %v4110
        %v4112 = vpop.xlane.xlu0 %4111
        %v4113 = vsel %vm4097, %v3879, -inf
        %4114 = vmax.xlane.f32.xlu0 %v4113
        %v4115 = vpop.xlane.xlu0 %4114
        %v4116 = vsel %vm4097, %v3939, -inf
        %4117 = vmax.xlane.f32.xlu0 %v4116
        %v4118 = vpop.xlane.xlu0 %4117
        %v4119 = vsel %vm4097, %v3941, -inf
        %4120 = vmax.xlane.f32.xlu0 %v4119
        %v4121 = vpop.xlane.xlu0 %4120
        %v4122 = vsel %vm4097, %v3944, -inf
        %4123 = vmax.xlane.f32.xlu0 %v4122
        %v4124 = vpop.xlane.xlu0 %4123
        %v4125 = vsel %vm4097, %v3946, -inf
        %4126 = vmax.xlane.f32.xlu0 %v4125
        %v4127 = vpop.xlane.xlu0 %4126
        %v4128 = vsel %vm4097, %v3949, -inf
        %4129 = vmax.xlane.f32.xlu0 %v4128
        %v4130 = vpop.xlane.xlu0 %4129
        %v4131 = vsel %vm4097, %v3951, -inf
        %4132 = vmax.xlane.f32.xlu0 %v4131
        %v4133 = vpop.xlane.xlu0 %4132
        %v4134 = vsel %vm4097, %v4011, -inf
        %4135 = vmax.xlane.f32.xlu0 %v4134
        %v4136 = vpop.xlane.xlu0 %4135
        %v4137 = vsel %vm4097, %v4013, -inf
        %4138 = vmax.xlane.f32.xlu0 %v4137
        %v4139 = vpop.xlane.xlu0 %4138
        %v4140 = vsel %vm4097, %v4016, -inf
        %4141 = vmax.xlane.f32.xlu0 %v4140
        %v4142 = vpop.xlane.xlu0 %4141
        %v4143 = vsel %vm4097, %v4018, -inf
        %4144 = vmax.xlane.f32.xlu0 %v4143
        %v4145 = vpop.xlane.xlu0 %4144
        %v4146 = vsel %vm4097, %v4021, -inf
        %4147 = vmax.xlane.f32.xlu0 %v4146
        %v4148 = vpop.xlane.xlu0 %4147
        %v4149 = vsel %vm4097, %v4023, -inf
        %4150 = vmax.xlane.f32.xlu0 %v4149
        %v4151 = vpop.xlane.xlu0 %4150
        %v4152 = vsel %vm4097, %v4083, -inf
        %4153 = vmax.xlane.f32.xlu0 %v4152
        %v4154 = vpop.xlane.xlu0 %4153
        %v4155 = vsel %vm4097, %v4085, -inf
        %4156 = vmax.xlane.f32.xlu0 %v4155
        %v4157 = vpop.xlane.xlu0 %4156
        %v4158 = vsel %vm4097, %v4088, -inf
        %4159 = vmax.xlane.f32.xlu0 %v4158
        %v4160 = vpop.xlane.xlu0 %4159
        %v4161 = vsel %vm4097, %v4090, -inf
        %4162 = vmax.xlane.f32.xlu0 %v4161
        %v4163 = vpop.xlane.xlu0 %4162
        %v4164 = vsel %vm4097, %v4093, -inf
        %4165 = vmax.xlane.f32.xlu0 %v4164
        %v4166 = vpop.xlane.xlu0 %4165
        %v4167 = vsel %vm4097, %v4095, -inf
        %4168 = vmax.xlane.f32.xlu0 %v4167
        %v4169 = vpop.xlane.xlu0 %4168
        %v4170 = vsub.f32 %v3867, %v4100
        %v4171 = vsub.f32 %v3869, %v4103
        %v4172 = vsub.f32 %v3872, %v4106
        %v4173 = vsub.f32 %v3874, %v4109
        %v4174 = vsub.f32 %v3877, %v4112
        %v4175 = vsub.f32 %v3879, %v4115
        %v4176 = vsub.f32 %v3939, %v4118
        %v4177 = vsub.f32 %v3941, %v4121
        %v4178 = vsub.f32 %v3944, %v4124
        %v4179 = vsub.f32 %v3946, %v4127
        %v4180 = vsub.f32 %v3949, %v4130
        %v4181 = vsub.f32 %v3951, %v4133
        %v4182 = vsub.f32 %v4011, %v4136
        %v4183 = vsub.f32 %v4013, %v4139
        %v4184 = vsub.f32 %v4016, %v4142
        %v4185 = vsub.f32 %v4018, %v4145
        %v4186 = vsub.f32 %v4021, %v4148
        %v4187 = vsub.f32 %v4023, %v4151
        %v4188 = vsub.f32 %v4083, %v4154
        %v4189 = vsub.f32 %v4085, %v4157
        %v4190 = vsub.f32 %v4088, %v4160
        %v4191 = vsub.f32 %v4090, %v4163
        %v4192 = vsub.f32 %v4093, %v4166
        %v4193 = vsub.f32 %v4095, %v4169
        %v4194 = vmul.f32 %v4170, 1.442695
        %v4195 = vpow.pop %v4194
        %v4196 = vmul.f32 %v4171, 1.442695
        %v4197 = vpow.pop %v4196
        %v4198 = vmul.f32 %v4172, 1.442695
        %v4199 = vpow.pop %v4198
        %v4200 = vmul.f32 %v4173, 1.442695
        %v4201 = vpow.pop %v4200
        %v4202 = vmul.f32 %v4174, 1.442695
        %v4203 = vpow.pop %v4202
        %v4204 = vmul.f32 %v4175, 1.442695
        %v4205 = vpow.pop %v4204
        %v4206 = vmul.f32 %v4176, 1.442695
        %v4207 = vpow.pop %v4206
        %v4208 = vmul.f32 %v4177, 1.442695
        %v4209 = vpow.pop %v4208
        %v4210 = vmul.f32 %v4178, 1.442695
        %v4211 = vpow.pop %v4210
        %v4212 = vmul.f32 %v4179, 1.442695
        %v4213 = vpow.pop %v4212
        %v4214 = vmul.f32 %v4180, 1.442695
        %v4215 = vpow.pop %v4214
        %v4216 = vmul.f32 %v4181, 1.442695
        %v4217 = vpow.pop %v4216
        %v4218 = vmul.f32 %v4182, 1.442695
        %v4219 = vpow.pop %v4218
        %v4220 = vmul.f32 %v4183, 1.442695
        %v4221 = vpow.pop %v4220
        %v4222 = vmul.f32 %v4184, 1.442695
        %v4223 = vpow.pop %v4222
        %v4224 = vmul.f32 %v4185, 1.442695
        %v4225 = vpow.pop %v4224
        %v4226 = vmul.f32 %v4186, 1.442695
        %v4227 = vpow.pop %v4226
        %v4228 = vmul.f32 %v4187, 1.442695
        %v4229 = vpow.pop %v4228
        %v4230 = vmul.f32 %v4188, 1.442695
        %v4231 = vpow.pop %v4230
        %v4232 = vmul.f32 %v4189, 1.442695
        %v4233 = vpow.pop %v4232
        %v4234 = vmul.f32 %v4190, 1.442695
        %v4235 = vpow.pop %v4234
        %v4236 = vmul.f32 %v4191, 1.442695
        %v4237 = vpow.pop %v4236
        %v4238 = vmul.f32 %v4192, 1.442695
        %v4239 = vpow.pop %v4238
        %v4240 = vmul.f32 %v4193, 1.442695
        %v4241 = vpow.pop %v4240
        %v4242 = vsel %vm4097, %v4195, 0.0
        %4243 = vadd.xlane.f32.xlu0 %v4242
        %v4244 = vpop.xlane.xlu0 %4243
        %v4245 = vsel %vm4097, %v4197, 0.0
        %4246 = vadd.xlane.f32.xlu0 %v4245
        %v4247 = vpop.xlane.xlu0 %4246
        %v4248 = vsel %vm4097, %v4199, 0.0
        %4249 = vadd.xlane.f32.xlu0 %v4248
        %v4250 = vpop.xlane.xlu0 %4249
        %v4251 = vsel %vm4097, %v4201, 0.0
        %4252 = vadd.xlane.f32.xlu0 %v4251
        %v4253 = vpop.xlane.xlu0 %4252
        %v4254 = vsel %vm4097, %v4203, 0.0
        %4255 = vadd.xlane.f32.xlu0 %v4254
        %v4256 = vpop.xlane.xlu0 %4255
        %v4257 = vsel %vm4097, %v4205, 0.0
        %4258 = vadd.xlane.f32.xlu0 %v4257
        %v4259 = vpop.xlane.xlu0 %4258
        %v4260 = vsel %vm4097, %v4207, 0.0
        %4261 = vadd.xlane.f32.xlu0 %v4260
        %v4262 = vpop.xlane.xlu0 %4261
        %v4263 = vsel %vm4097, %v4209, 0.0
        %4264 = vadd.xlane.f32.xlu0 %v4263
        %v4265 = vpop.xlane.xlu0 %4264
        %v4266 = vsel %vm4097, %v4211, 0.0
        %4267 = vadd.xlane.f32.xlu0 %v4266
        %v4268 = vpop.xlane.xlu0 %4267
        %v4269 = vsel %vm4097, %v4213, 0.0
        %4270 = vadd.xlane.f32.xlu0 %v4269
        %v4271 = vpop.xlane.xlu0 %4270
        %v4272 = vsel %vm4097, %v4215, 0.0
        %4273 = vadd.xlane.f32.xlu0 %v4272
        %v4274 = vpop.xlane.xlu0 %4273
        %v4275 = vsel %vm4097, %v4217, 0.0
        %4276 = vadd.xlane.f32.xlu0 %v4275
        %v4277 = vpop.xlane.xlu0 %4276
        %v4278 = vsel %vm4097, %v4219, 0.0
        %4279 = vadd.xlane.f32.xlu0 %v4278
        %v4280 = vpop.xlane.xlu0 %4279
        %v4281 = vsel %vm4097, %v4221, 0.0
        %4282 = vadd.xlane.f32.xlu0 %v4281
        %v4283 = vpop.xlane.xlu0 %4282
        %v4284 = vsel %vm4097, %v4223, 0.0
        %4285 = vadd.xlane.f32.xlu0 %v4284
        %v4286 = vpop.xlane.xlu0 %4285
        %v4287 = vsel %vm4097, %v4225, 0.0
        %4288 = vadd.xlane.f32.xlu0 %v4287
        %v4289 = vpop.xlane.xlu0 %4288
        %v4290 = vsel %vm4097, %v4227, 0.0
        %4291 = vadd.xlane.f32.xlu0 %v4290
        %v4292 = vpop.xlane.xlu0 %4291
        %v4293 = vsel %vm4097, %v4229, 0.0
        %4294 = vadd.xlane.f32.xlu0 %v4293
        %v4295 = vpop.xlane.xlu0 %4294
        %v4296 = vsel %vm4097, %v4231, 0.0
        %4297 = vadd.xlane.f32.xlu0 %v4296
        %v4298 = vpop.xlane.xlu0 %4297
        %v4299 = vsel %vm4097, %v4233, 0.0
        %4300 = vadd.xlane.f32.xlu0 %v4299
        %v4301 = vpop.xlane.xlu0 %4300
        %v4302 = vsel %vm4097, %v4235, 0.0
        %4303 = vadd.xlane.f32.xlu0 %v4302
        %v4304 = vpop.xlane.xlu0 %4303
        %v4305 = vsel %vm4097, %v4237, 0.0
        %4306 = vadd.xlane.f32.xlu0 %v4305
        %v4307 = vpop.xlane.xlu0 %4306
        %v4308 = vsel %vm4097, %v4239, 0.0
        %4309 = vadd.xlane.f32.xlu0 %v4308
        %v4310 = vpop.xlane.xlu0 %4309
        %v4311 = vsel %vm4097, %v4241, 0.0
        %4312 = vadd.xlane.f32.xlu0 %v4311
        %v4313 = vpop.xlane.xlu0 %4312
        %v4314 = vrcp.pop %v4244
        %v4315 = vrcp.pop %v4247
        %v4316 = vrcp.pop %v4250
        %v4317 = vrcp.pop %v4253
        %v4318 = vrcp.pop %v4256
        %v4319 = vrcp.pop %v4259
        %v4320 = vrcp.pop %v4262
        %v4321 = vrcp.pop %v4265
        %v4322 = vrcp.pop %v4268
        %v4323 = vrcp.pop %v4271
        %v4324 = vrcp.pop %v4274
        %v4325 = vrcp.pop %v4277
        %v4326 = vrcp.pop %v4280
        %v4327 = vrcp.pop %v4283
        %v4328 = vrcp.pop %v4286
        %v4329 = vrcp.pop %v4289
        %v4330 = vrcp.pop %v4292
        %v4331 = vrcp.pop %v4295
        %v4332 = vrcp.pop %v4298
        %v4333 = vrcp.pop %v4301
        %v4334 = vrcp.pop %v4304
        %v4335 = vrcp.pop %v4307
        %v4336 = vrcp.pop %v4310
        %v4337 = vrcp.pop %v4313
        %v4338 = vmul.f32 %v4195, %v4314
        %v4339 = vmul.f32 %v4197, %v4315
        %v4340 = vmul.f32 %v4199, %v4316
        %v4341 = vmul.f32 %v4201, %v4317
        %v4342 = vmul.f32 %v4203, %v4318
        %v4343 = vmul.f32 %v4205, %v4319
        %v4344 = vmul.f32 %v4207, %v4320
        %v4345 = vmul.f32 %v4209, %v4321
        %v4346 = vmul.f32 %v4211, %v4322
        %v4347 = vmul.f32 %v4213, %v4323
        %v4348 = vmul.f32 %v4215, %v4324
        %v4349 = vmul.f32 %v4217, %v4325
        %v4350 = vmul.f32 %v4219, %v4326
        %v4351 = vmul.f32 %v4221, %v4327
        %v4352 = vmul.f32 %v4223, %v4328
        %v4353 = vmul.f32 %v4225, %v4329
        %v4354 = vmul.f32 %v4227, %v4330
        %v4355 = vmul.f32 %v4229, %v4331
        %v4356 = vmul.f32 %v4231, %v4332
        %v4357 = vmul.f32 %v4233, %v4333
        %v4358 = vmul.f32 %v4235, %v4334
        %v4359 = vmul.f32 %v4237, %v4335
        %v4360 = vmul.f32 %v4239, %v4336
        %v4361 = vmul.f32 %v4241, %v4337
        %v4362 = vpack.c.bf16 %v4338, %v4338
        %v4363 = vpack.c.bf16 %v4339, %v4339
        %v4364 = vpack.c.bf16 %v4340, %v4340
        %v4365 = vpack.c.bf16 %v4341, %v4341
        %v4366 = vpack.c.bf16 %v4342, %v4342
        %v4367 = vpack.c.bf16 %v4343, %v4343
        %v4368 = vpack.c.bf16 %v4344, %v4344
        %v4369 = vpack.c.bf16 %v4345, %v4345
        %v4370 = vpack.c.bf16 %v4346, %v4346
        %v4371 = vpack.c.bf16 %v4347, %v4347
        %v4372 = vpack.c.bf16 %v4348, %v4348
        %v4373 = vpack.c.bf16 %v4349, %v4349
        %v4374 = vpack.c.bf16 %v4350, %v4350
        %v4375 = vpack.c.bf16 %v4351, %v4351
        %v4376 = vpack.c.bf16 %v4352, %v4352
        %v4377 = vpack.c.bf16 %v4353, %v4353
        %v4378 = vpack.c.bf16 %v4354, %v4354
        %v4379 = vpack.c.bf16 %v4355, %v4355
        %v4380 = vpack.c.bf16 %v4356, %v4356
        %v4381 = vpack.c.bf16 %v4357, %v4357
        %v4382 = vpack.c.bf16 %v4358, %v4358
        %v4383 = vpack.c.bf16 %v4359, %v4359
        %v4384 = vpack.c.bf16 %v4360, %v4360
        %v4385 = vpack.c.bf16 %v4361, %v4361
        %v4392 = vunpack.c.l.b16 %v4362
        %v4393 = vunpack.c.l.b16 %v4363
        %v4394 = vunpack.c.l.b16 %v4364
        %v4395 = vunpack.c.l.b16 %v4365
        %v4396 = vunpack.c.l.b16 %v4366
        %v4397 = vunpack.c.l.b16 %v4367
        %v4398 = vpack.c.b16 %v4393, %v4392
        %v4399 = vpack.c.b16 %v4395, %v4394
        %v4400 = vpack.c.b16 %v4397, %v4396
        %v4407 = vunpack.c.l.b16 %v3778
        %v4408 = vunpack.c.l.b16 %v3779
        %v4409 = vunpack.c.l.b16 %v3780
        %v4410 = vunpack.c.l.b16 %v3781
        %v4411 = vunpack.c.l.b16 %v3782
        %v4412 = vunpack.c.l.b16 %v3783
        %v4413 = vpack.c.b16 %v4408, %v4407
        %v4414 = vpack.c.b16 %v4410, %v4409
        %v4415 = vpack.c.b16 %v4412, %v4411
        %v4420 = vsel %vm4097, %v4398, 0
        %v4423 = vsel %vm4097, %v4399, 0
        %v4426 = vsel %vm4097, %v4400, 0
        %4428 = vmatpush.bf16.msra.mxu0 0
        %4429 = vmatpush.bf16.msra.mxu0 0
        %4430 = vmatpush.bf16.msra.mxu0 0
        %4431 = vmatpush.bf16.msra.mxu0 0
        %4432 = vmatpush.bf16.msra.mxu0 0
        %4433 = vmatpush.bf16.msra.mxu0 %v4415
        %4434 = vmatpush.bf16.msra.mxu0 %v4414
        %4435 = vmatpush.bf16.msra.mxu0 %v4413
        %4436 = vmatmul.bf16.gmra.mxu0 %v4420
        %v4437 = vpop.f32.mrf.mxu0
        %v4438 = vadd.f32 0.0, %v4437
        %v4439 = vpop.f32.mrf.mxu0
        %v4440 = vadd.f32 0.0, %v4439
        %4441 = vmatmul.bf16.gmra.mxu0 %v4423
        %v4442 = vpop.f32.mrf.mxu0
        %v4443 = vadd.f32 0.0, %v4442
        %v4444 = vpop.f32.mrf.mxu0
        %v4445 = vadd.f32 0.0, %v4444
        %4446 = vmatmul.bf16.gmra.mxu0 %v4426
        %v4447 = vpop.f32.mrf.mxu0
        %v4448 = vadd.f32 0.0, %v4447
        %v4449 = vpop.f32.mrf.mxu0
        %v4450 = vadd.f32 0.0, %v4449
        %4451 = vdwg.mxu0
        %v4458 = vunpack.c.l.b16 %v4368
        %v4459 = vunpack.c.l.b16 %v4369
        %v4460 = vunpack.c.l.b16 %v4370
        %v4461 = vunpack.c.l.b16 %v4371
        %v4462 = vunpack.c.l.b16 %v4372
        %v4463 = vunpack.c.l.b16 %v4373
        %v4464 = vpack.c.b16 %v4459, %v4458
        %v4465 = vpack.c.b16 %v4461, %v4460
        %v4466 = vpack.c.b16 %v4463, %v4462
        %v4473 = vunpack.c.l.b16 %v3784
        %v4474 = vunpack.c.l.b16 %v3785
        %v4475 = vunpack.c.l.b16 %v3786
        %v4476 = vunpack.c.l.b16 %v3787
        %v4477 = vunpack.c.l.b16 %v3788
        %v4478 = vunpack.c.l.b16 %v3789
        %v4479 = vpack.c.b16 %v4474, %v4473
        %v4480 = vpack.c.b16 %v4476, %v4475
        %v4481 = vpack.c.b16 %v4478, %v4477
        %v4486 = vsel %vm4097, %v4464, 0
        %v4489 = vsel %vm4097, %v4465, 0
        %v4492 = vsel %vm4097, %v4466, 0
        %4494 = vmatpush.bf16.msra.mxu0 0
        %4495 = vmatpush.bf16.msra.mxu0 0
        %4496 = vmatpush.bf16.msra.mxu0 0
        %4497 = vmatpush.bf16.msra.mxu0 0
        %4498 = vmatpush.bf16.msra.mxu0 0
        %4499 = vmatpush.bf16.msra.mxu0 %v4481
        %4500 = vmatpush.bf16.msra.mxu0 %v4480
        %4501 = vmatpush.bf16.msra.mxu0 %v4479
        %4502 = vmatmul.bf16.gmra.mxu0 %v4486
        %v4503 = vpop.f32.mrf.mxu0
        %v4504 = vadd.f32 0.0, %v4503
        %v4505 = vpop.f32.mrf.mxu0
        %v4506 = vadd.f32 0.0, %v4505
        %4507 = vmatmul.bf16.gmra.mxu0 %v4489
        %v4508 = vpop.f32.mrf.mxu0
        %v4509 = vadd.f32 0.0, %v4508
        %v4510 = vpop.f32.mrf.mxu0
        %v4511 = vadd.f32 0.0, %v4510
        %4512 = vmatmul.bf16.gmra.mxu0 %v4492
        %v4513 = vpop.f32.mrf.mxu0
        %v4514 = vadd.f32 0.0, %v4513
        %v4515 = vpop.f32.mrf.mxu0
        %v4516 = vadd.f32 0.0, %v4515
        %4517 = vdwg.mxu0
        %v4524 = vunpack.c.l.b16 %v4374
        %v4525 = vunpack.c.l.b16 %v4375
        %v4526 = vunpack.c.l.b16 %v4376
        %v4527 = vunpack.c.l.b16 %v4377
        %v4528 = vunpack.c.l.b16 %v4378
        %v4529 = vunpack.c.l.b16 %v4379
        %v4530 = vpack.c.b16 %v4525, %v4524
        %v4531 = vpack.c.b16 %v4527, %v4526
        %v4532 = vpack.c.b16 %v4529, %v4528
        %v4539 = vunpack.c.l.b16 %v3790
        %v4540 = vunpack.c.l.b16 %v3791
        %v4541 = vunpack.c.l.b16 %v3792
        %v4542 = vunpack.c.l.b16 %v3793
        %v4543 = vunpack.c.l.b16 %v3794
        %v4544 = vunpack.c.l.b16 %v3795
        %v4545 = vpack.c.b16 %v4540, %v4539
        %v4546 = vpack.c.b16 %v4542, %v4541
        %v4547 = vpack.c.b16 %v4544, %v4543
        %v4552 = vsel %vm4097, %v4530, 0
        %v4555 = vsel %vm4097, %v4531, 0
        %v4558 = vsel %vm4097, %v4532, 0
        %4560 = vmatpush.bf16.msra.mxu0 0
        %4561 = vmatpush.bf16.msra.mxu0 0
        %4562 = vmatpush.bf16.msra.mxu0 0
        %4563 = vmatpush.bf16.msra.mxu0 0
        %4564 = vmatpush.bf16.msra.mxu0 0
        %4565 = vmatpush.bf16.msra.mxu0 %v4547
        %4566 = vmatpush.bf16.msra.mxu0 %v4546
        %4567 = vmatpush.bf16.msra.mxu0 %v4545
        %4568 = vmatmul.bf16.gmra.mxu0 %v4552
        %v4569 = vpop.f32.mrf.mxu0
        %v4570 = vadd.f32 0.0, %v4569
        %v4571 = vpop.f32.mrf.mxu0
        %v4572 = vadd.f32 0.0, %v4571
        %4573 = vmatmul.bf16.gmra.mxu0 %v4555
        %v4574 = vpop.f32.mrf.mxu0
        %v4575 = vadd.f32 0.0, %v4574
        %v4576 = vpop.f32.mrf.mxu0
        %v4577 = vadd.f32 0.0, %v4576
        %4578 = vmatmul.bf16.gmra.mxu0 %v4558
        %v4579 = vpop.f32.mrf.mxu0
        %v4580 = vadd.f32 0.0, %v4579
        %v4581 = vpop.f32.mrf.mxu0
        %v4582 = vadd.f32 0.0, %v4581
        %4583 = vdwg.mxu0
        %v4590 = vunpack.c.l.b16 %v4380
        %v4591 = vunpack.c.l.b16 %v4381
        %v4592 = vunpack.c.l.b16 %v4382
        %v4593 = vunpack.c.l.b16 %v4383
        %v4594 = vunpack.c.l.b16 %v4384
        %v4595 = vunpack.c.l.b16 %v4385
        %v4596 = vpack.c.b16 %v4591, %v4590
        %v4597 = vpack.c.b16 %v4593, %v4592
        %v4598 = vpack.c.b16 %v4595, %v4594
        %v4605 = vunpack.c.l.b16 %v3796
        %v4606 = vunpack.c.l.b16 %v3797
        %v4607 = vunpack.c.l.b16 %v3798
        %v4608 = vunpack.c.l.b16 %v3799
        %v4609 = vunpack.c.l.b16 %v3800
        %v4610 = vunpack.c.l.b16 %v3801
        %v4611 = vpack.c.b16 %v4606, %v4605
        %v4612 = vpack.c.b16 %v4608, %v4607
        %v4613 = vpack.c.b16 %v4610, %v4609
        %v4618 = vsel %vm4097, %v4596, 0
        %v4621 = vsel %vm4097, %v4597, 0
        %v4624 = vsel %vm4097, %v4598, 0
        %4626 = vmatpush.bf16.msra.mxu0 0
        %4627 = vmatpush.bf16.msra.mxu0 0
        %4628 = vmatpush.bf16.msra.mxu0 0
        %4629 = vmatpush.bf16.msra.mxu0 0
        %4630 = vmatpush.bf16.msra.mxu0 0
        %4631 = vmatpush.bf16.msra.mxu0 %v4613
        %4632 = vmatpush.bf16.msra.mxu0 %v4612
        %4633 = vmatpush.bf16.msra.mxu0 %v4611
        %4634 = vmatmul.bf16.gmra.mxu0 %v4618
        %v4635 = vpop.f32.mrf.mxu0
        %v4636 = vadd.f32 0.0, %v4635
        %v4637 = vpop.f32.mrf.mxu0
        %v4638 = vadd.f32 0.0, %v4637
        %4639 = vmatmul.bf16.gmra.mxu0 %v4621
        %v4640 = vpop.f32.mrf.mxu0
        %v4641 = vadd.f32 0.0, %v4640
        %v4642 = vpop.f32.mrf.mxu0
        %v4643 = vadd.f32 0.0, %v4642
        %4644 = vmatmul.bf16.gmra.mxu0 %v4624
        %v4645 = vpop.f32.mrf.mxu0
        %v4646 = vadd.f32 0.0, %v4645
        %v4647 = vpop.f32.mrf.mxu0
        %v4648 = vadd.f32 0.0, %v4647
        %4649 = vdwg.mxu0
        %v4650 = vpack.c.bf16 %v4438, %v4438
        %v4651 = vpack.c.bf16 %v4440, %v4440
        %v4652 = vpack.c.bf16 %v4443, %v4443
        %v4653 = vpack.c.bf16 %v4445, %v4445
        %v4654 = vpack.c.bf16 %v4448, %v4448
        %v4655 = vpack.c.bf16 %v4450, %v4450
        %v4656 = vpack.c.bf16 %v4504, %v4504
        %v4657 = vpack.c.bf16 %v4506, %v4506
        %v4658 = vpack.c.bf16 %v4509, %v4509
        %v4659 = vpack.c.bf16 %v4511, %v4511
        %v4660 = vpack.c.bf16 %v4514, %v4514
        %v4661 = vpack.c.bf16 %v4516, %v4516
        %v4662 = vpack.c.bf16 %v4570, %v4570
        %v4663 = vpack.c.bf16 %v4572, %v4572
        %v4664 = vpack.c.bf16 %v4575, %v4575
        %v4665 = vpack.c.bf16 %v4577, %v4577
        %v4666 = vpack.c.bf16 %v4580, %v4580
        %v4667 = vpack.c.bf16 %v4582, %v4582
        %v4668 = vpack.c.bf16 %v4636, %v4636
        %v4669 = vpack.c.bf16 %v4638, %v4638
        %v4670 = vpack.c.bf16 %v4641, %v4641
        %v4671 = vpack.c.bf16 %v4643, %v4643
        %v4672 = vpack.c.bf16 %v4646, %v4646
        %v4673 = vpack.c.bf16 %v4648, %v4648
        %v4674 = vld [vmem:[%s883] sm:$0xf]
        %v4675 = vld [vmem:[%s883 + $0x4] sm:$0xf]
        %v4676 = vld [vmem:[%s883 + $0x8] sm:$0xf]
        %v4677 = vld [vmem:[%s883 + $0xc] sm:$0xf]
        %v4678 = vld [vmem:[%s883 + $0x10] sm:$0xf]
        %v4679 = vld [vmem:[%s883 + $0x14] sm:$0xf]
        %v4680 = vld [vmem:[%s883 + $0x18] sm:$0xf]
        %v4681 = vld [vmem:[%s883 + $0x1c] sm:$0xf]
        %v4682 = vld [vmem:[%s883 + $0x20] sm:$0xf]
        %v4683 = vld [vmem:[%s883 + $0x24] sm:$0xf]
        %v4684 = vld [vmem:[%s883 + $0x28] sm:$0xf]
        %v4685 = vld [vmem:[%s883 + $0x2c] sm:$0xf]
        %v4686 = vld [vmem:[%s883 + $0x30] sm:$0xf]
        %v4687 = vld [vmem:[%s883 + $0x34] sm:$0xf]
        %v4688 = vld [vmem:[%s883 + $0x38] sm:$0xf]
        %v4689 = vld [vmem:[%s883 + $0x3c] sm:$0xf]
        %v4696 = vunpack.c.l.b16 %v4650
        %v4697 = vunpack.c.l.b16 %v4651
        %v4698 = vunpack.c.l.b16 %v4652
        %v4699 = vunpack.c.l.b16 %v4653
        %v4700 = vunpack.c.l.b16 %v4654
        %v4701 = vunpack.c.l.b16 %v4655
        %v4702 = vpack.c.b16 %v4697, %v4696
        %v4703 = vpack.c.b16 %v4699, %v4698
        %v4704 = vpack.c.b16 %v4701, %v4700
        %v4709 = vunpack.c.l.b16 %v4674
        %v4710 = vunpack.c.l.b16 %v4675
        %v4711 = vunpack.c.l.b16 %v4676
        %v4712 = vunpack.c.l.b16 %v4677
        %v4713 = vpack.c.b16 %v4710, %v4709
        %v4714 = vpack.c.b16 %v4712, %v4711
        %v4718 = vsel %vm3838, %v4702, 0
        %v4721 = vsel %vm3838, %v4703, 0
        %v4724 = vsel %vm3838, %v4704, 0
        %4726 = vmatpush.bf16.msra.mxu0 0
        %4727 = vmatpush.bf16.msra.mxu0 0
        %4728 = vmatpush.bf16.msra.mxu0 0
        %4729 = vmatpush.bf16.msra.mxu0 0
        %4730 = vmatpush.bf16.msra.mxu0 0
        %4731 = vmatpush.bf16.msra.mxu0 0
        %4732 = vmatpush.bf16.msra.mxu0 %v4714
        %4733 = vmatpush.bf16.msra.mxu0 %v4713
        %4734 = vmatmul.bf16.gmra.mxu0 %v4718
        %v4735 = vpop.f32.mrf.mxu0
        %v4736 = vadd.f32 0.0, %v4735
        %v4737 = vpop.f32.mrf.mxu0
        %v4738 = vadd.f32 0.0, %v4737
        %4739 = vmatmul.bf16.gmra.mxu0 %v4721
        %v4740 = vpop.f32.mrf.mxu0
        %v4741 = vadd.f32 0.0, %v4740
        %v4742 = vpop.f32.mrf.mxu0
        %v4743 = vadd.f32 0.0, %v4742
        %4744 = vmatmul.bf16.gmra.mxu0 %v4724
        %v4745 = vpop.f32.mrf.mxu0
        %v4746 = vadd.f32 0.0, %v4745
        %v4747 = vpop.f32.mrf.mxu0
        %v4748 = vadd.f32 0.0, %v4747
        %4749 = vdwg.mxu0
        %v4756 = vunpack.c.l.b16 %v4656
        %v4757 = vunpack.c.l.b16 %v4657
        %v4758 = vunpack.c.l.b16 %v4658
        %v4759 = vunpack.c.l.b16 %v4659
        %v4760 = vunpack.c.l.b16 %v4660
        %v4761 = vunpack.c.l.b16 %v4661
        %v4762 = vpack.c.b16 %v4757, %v4756
        %v4763 = vpack.c.b16 %v4759, %v4758
        %v4764 = vpack.c.b16 %v4761, %v4760
        %v4769 = vunpack.c.l.b16 %v4678
        %v4770 = vunpack.c.l.b16 %v4679
        %v4771 = vunpack.c.l.b16 %v4680
        %v4772 = vunpack.c.l.b16 %v4681
        %v4773 = vpack.c.b16 %v4770, %v4769
        %v4774 = vpack.c.b16 %v4772, %v4771
        %v4778 = vsel %vm3838, %v4762, 0
        %v4781 = vsel %vm3838, %v4763, 0
        %v4784 = vsel %vm3838, %v4764, 0
        %4786 = vmatpush.bf16.msra.mxu0 0
        %4787 = vmatpush.bf16.msra.mxu0 0
        %4788 = vmatpush.bf16.msra.mxu0 0
        %4789 = vmatpush.bf16.msra.mxu0 0
        %4790 = vmatpush.bf16.msra.mxu0 0
        %4791 = vmatpush.bf16.msra.mxu0 0
        %4792 = vmatpush.bf16.msra.mxu0 %v4774
        %4793 = vmatpush.bf16.msra.mxu0 %v4773
        %4794 = vmatmul.bf16.gmra.mxu0 %v4778
        %v4795 = vpop.f32.mrf.mxu0
        %v4796 = vadd.f32 0.0, %v4795
        %v4797 = vpop.f32.mrf.mxu0
        %v4798 = vadd.f32 0.0, %v4797
        %4799 = vmatmul.bf16.gmra.mxu0 %v4781
        %v4800 = vpop.f32.mrf.mxu0
        %v4801 = vadd.f32 0.0, %v4800
        %v4802 = vpop.f32.mrf.mxu0
        %v4803 = vadd.f32 0.0, %v4802
        %4804 = vmatmul.bf16.gmra.mxu0 %v4784
        %v4805 = vpop.f32.mrf.mxu0
        %v4806 = vadd.f32 0.0, %v4805
        %v4807 = vpop.f32.mrf.mxu0
        %v4808 = vadd.f32 0.0, %v4807
        %4809 = vdwg.mxu0
        %v4816 = vunpack.c.l.b16 %v4662
        %v4817 = vunpack.c.l.b16 %v4663
        %v4818 = vunpack.c.l.b16 %v4664
        %v4819 = vunpack.c.l.b16 %v4665
        %v4820 = vunpack.c.l.b16 %v4666
        %v4821 = vunpack.c.l.b16 %v4667
        %v4822 = vpack.c.b16 %v4817, %v4816
        %v4823 = vpack.c.b16 %v4819, %v4818
        %v4824 = vpack.c.b16 %v4821, %v4820
        %v4829 = vunpack.c.l.b16 %v4682
        %v4830 = vunpack.c.l.b16 %v4683
        %v4831 = vunpack.c.l.b16 %v4684
        %v4832 = vunpack.c.l.b16 %v4685
        %v4833 = vpack.c.b16 %v4830, %v4829
        %v4834 = vpack.c.b16 %v4832, %v4831
        %v4838 = vsel %vm3838, %v4822, 0
        %v4841 = vsel %vm3838, %v4823, 0
        %v4844 = vsel %vm3838, %v4824, 0
        %4846 = vmatpush.bf16.msra.mxu0 0
        %4847 = vmatpush.bf16.msra.mxu0 0
        %4848 = vmatpush.bf16.msra.mxu0 0
        %4849 = vmatpush.bf16.msra.mxu0 0
        %4850 = vmatpush.bf16.msra.mxu0 0
        %4851 = vmatpush.bf16.msra.mxu0 0
        %4852 = vmatpush.bf16.msra.mxu0 %v4834
        %4853 = vmatpush.bf16.msra.mxu0 %v4833
        %4854 = vmatmul.bf16.gmra.mxu0 %v4838
        %v4855 = vpop.f32.mrf.mxu0
        %v4856 = vadd.f32 0.0, %v4855
        %v4857 = vpop.f32.mrf.mxu0
        %v4858 = vadd.f32 0.0, %v4857
        %4859 = vmatmul.bf16.gmra.mxu0 %v4841
        %v4860 = vpop.f32.mrf.mxu0
        %v4861 = vadd.f32 0.0, %v4860
        %v4862 = vpop.f32.mrf.mxu0
        %v4863 = vadd.f32 0.0, %v4862
        %4864 = vmatmul.bf16.gmra.mxu0 %v4844
        %v4865 = vpop.f32.mrf.mxu0
        %v4866 = vadd.f32 0.0, %v4865
        %v4867 = vpop.f32.mrf.mxu0
        %v4868 = vadd.f32 0.0, %v4867
        %4869 = vdwg.mxu0
        %v4876 = vunpack.c.l.b16 %v4668
        %v4877 = vunpack.c.l.b16 %v4669
        %v4878 = vunpack.c.l.b16 %v4670
        %v4879 = vunpack.c.l.b16 %v4671
        %v4880 = vunpack.c.l.b16 %v4672
        %v4881 = vunpack.c.l.b16 %v4673
        %v4882 = vpack.c.b16 %v4877, %v4876
        %v4883 = vpack.c.b16 %v4879, %v4878
        %v4884 = vpack.c.b16 %v4881, %v4880
        %v4889 = vunpack.c.l.b16 %v4686
        %v4890 = vunpack.c.l.b16 %v4687
        %v4891 = vunpack.c.l.b16 %v4688
        %v4892 = vunpack.c.l.b16 %v4689
        %v4893 = vpack.c.b16 %v4890, %v4889
        %v4894 = vpack.c.b16 %v4892, %v4891
        %v4898 = vsel %vm3838, %v4882, 0
        %v4901 = vsel %vm3838, %v4883, 0
        %v4904 = vsel %vm3838, %v4884, 0
        %4906 = vmatpush.bf16.msra.mxu0 0
        %4907 = vmatpush.bf16.msra.mxu0 0
        %4908 = vmatpush.bf16.msra.mxu0 0
        %4909 = vmatpush.bf16.msra.mxu0 0
        %4910 = vmatpush.bf16.msra.mxu0 0
        %4911 = vmatpush.bf16.msra.mxu0 0
        %4912 = vmatpush.bf16.msra.mxu0 %v4894
        %4913 = vmatpush.bf16.msra.mxu0 %v4893
        %4914 = vmatmul.bf16.gmra.mxu0 %v4898
        %v4915 = vpop.f32.mrf.mxu0
        %v4916 = vadd.f32 0.0, %v4915
        %v4917 = vpop.f32.mrf.mxu0
        %v4918 = vadd.f32 0.0, %v4917
        %4919 = vmatmul.bf16.gmra.mxu0 %v4901
        %v4920 = vpop.f32.mrf.mxu0
        %v4921 = vadd.f32 0.0, %v4920
        %v4922 = vpop.f32.mrf.mxu0
        %v4923 = vadd.f32 0.0, %v4922
        %4924 = vmatmul.bf16.gmra.mxu0 %v4904
        %v4925 = vpop.f32.mrf.mxu0
        %v4926 = vadd.f32 0.0, %v4925
        %v4927 = vpop.f32.mrf.mxu0
        %v4928 = vadd.f32 0.0, %v4927
        %4929 = vdwg.mxu0
        %v4930 = vadd.f32 %v4736, %v4796
        %v4931 = vadd.f32 %v4930, %v4856
        %v4932 = vadd.f32 %v4931, %v4916
        %v4933 = vadd.f32 %v4738, %v4798
        %v4934 = vadd.f32 %v4933, %v4858
        %v4935 = vadd.f32 %v4934, %v4918
        %v4936 = vadd.f32 %v4741, %v4801
        %v4937 = vadd.f32 %v4936, %v4861
        %v4938 = vadd.f32 %v4937, %v4921
        %v4939 = vadd.f32 %v4743, %v4803
        %v4940 = vadd.f32 %v4939, %v4863
        %v4941 = vadd.f32 %v4940, %v4923
        %v4942 = vadd.f32 %v4746, %v4806
        %v4943 = vadd.f32 %v4942, %v4866
        %v4944 = vadd.f32 %v4943, %v4926
        %v4945 = vadd.f32 %v4748, %v4808
        %v4946 = vadd.f32 %v4945, %v4868
        %v4947 = vadd.f32 %v4946, %v4928
        %v4948 = vld [vmem:[%s892] sm:$0x1]
        %v4950 = vperm.slane %v4948, 0
        %v4952 = vadd.f32 %v4932, %v4950
        %v4953 = vadd.f32 %v4935, %v4950
        %v4954 = vadd.f32 %v4938, %v4950
        %v4955 = vadd.f32 %v4941, %v4950
        %v4956 = vadd.f32 %v4944, %v4950
        %v4957 = vadd.f32 %v4947, %v4950
        %v4958 = vadd.f32 %v1173, %v4952
        %v4959 = vadd.f32 %v1174, %v4953
        %v4960 = vadd.f32 %v1175, %v4954
        %v4961 = vadd.f32 %v1176, %v4955
        %v4962 = vadd.f32 %v1177, %v4956
        %v4963 = vadd.f32 %v1178, %v4957
        %v4964 = vld [vmem:[%s901] sm:$0x1]
        %v4965 = vld [vmem:[%s910] sm:$0x1]
        %4966 = vadd.xlane.f32.xlu0 %v4958
        %v4967 = vpop.xlane.xlu0 %4966
        %4968 = vadd.xlane.f32.xlu0 %v4959
        %v4969 = vpop.xlane.xlu0 %4968
        %4970 = vadd.xlane.f32.xlu0 %v4960
        %v4971 = vpop.xlane.xlu0 %4970
        %4972 = vadd.xlane.f32.xlu0 %v4961
        %v4973 = vpop.xlane.xlu0 %4972
        %4974 = vadd.xlane.f32.xlu0 %v4962
        %v4975 = vpop.xlane.xlu0 %4974
        %4976 = vadd.xlane.f32.xlu0 %v4963
        %v4977 = vpop.xlane.xlu0 %4976
        %v4978 = vmul.f32 %v4967, %v1199
        %v4979 = vmul.f32 %v4969, %v1199
        %v4980 = vmul.f32 %v4971, %v1199
        %v4981 = vmul.f32 %v4973, %v1199
        %v4982 = vmul.f32 %v4975, %v1199
        %v4983 = vmul.f32 %v4977, %v1199
        %v4984 = vsub.f32 %v4958, %v4978
        %v4985 = vsub.f32 %v4959, %v4979
        %v4986 = vsub.f32 %v4960, %v4980
        %v4987 = vsub.f32 %v4961, %v4981
        %v4988 = vsub.f32 %v4962, %v4982
        %v4989 = vsub.f32 %v4963, %v4983
        %v4990 = vmul.f32 %v4984, %v4984
        %v4991 = vmul.f32 %v4985, %v4985
        %v4992 = vmul.f32 %v4986, %v4986
        %v4993 = vmul.f32 %v4987, %v4987
        %v4994 = vmul.f32 %v4988, %v4988
        %v4995 = vmul.f32 %v4989, %v4989
        %4996 = vadd.xlane.f32.xlu0 %v4990
        %v4997 = vpop.xlane.xlu0 %4996
        %4998 = vadd.xlane.f32.xlu0 %v4991
        %v4999 = vpop.xlane.xlu0 %4998
        %5000 = vadd.xlane.f32.xlu0 %v4992
        %v5001 = vpop.xlane.xlu0 %5000
        %5002 = vadd.xlane.f32.xlu0 %v4993
        %v5003 = vpop.xlane.xlu0 %5002
        %5004 = vadd.xlane.f32.xlu0 %v4994
        %v5005 = vpop.xlane.xlu0 %5004
        %5006 = vadd.xlane.f32.xlu0 %v4995
        %v5007 = vpop.xlane.xlu0 %5006
        %v5008 = vmul.f32 %v4997, %v1199
        %v5009 = vmul.f32 %v4999, %v1199
        %v5010 = vmul.f32 %v5001, %v1199
        %v5011 = vmul.f32 %v5003, %v1199
        %v5012 = vmul.f32 %v5005, %v1199
        %v5013 = vmul.f32 %v5007, %v1199
        %v5014 = vadd.f32 %v5008, 1e-05
        %v5015 = vadd.f32 %v5009, 1e-05
        %v5016 = vadd.f32 %v5010, 1e-05
        %v5017 = vadd.f32 %v5011, 1e-05
        %v5018 = vadd.f32 %v5012, 1e-05
        %v5019 = vadd.f32 %v5013, 1e-05
        %v5020 = vrsqrt.pop %v5014
        %v5021 = vmul.f32 %v5020, %v5014
        %v5022 = vmul.f32 %v5021, %v5020
        %v5023 = vmul.f32 0.5, %v5022
        %v5024 = vsub.f32 1.5, %v5023
        %v5025 = vmul.f32 %v5020, %v5024
        %vm5026 = vweird.f32 %v5014
        %vm5027 = vweird.f32 %v5020
        %vm5028 = vmor %vm5026, %vm5027
        %v5029 = vsel %vm5028, %v5020, %v5025
        %v5030 = vrsqrt.pop %v5015
        %v5031 = vmul.f32 %v5030, %v5015
        %v5032 = vmul.f32 %v5031, %v5030
        %v5033 = vmul.f32 0.5, %v5032
        %v5034 = vsub.f32 1.5, %v5033
        %v5035 = vmul.f32 %v5030, %v5034
        %vm5036 = vweird.f32 %v5015
        %vm5037 = vweird.f32 %v5030
        %vm5038 = vmor %vm5036, %vm5037
        %v5039 = vsel %vm5038, %v5030, %v5035
        %v5040 = vrsqrt.pop %v5016
        %v5041 = vmul.f32 %v5040, %v5016
        %v5042 = vmul.f32 %v5041, %v5040
        %v5043 = vmul.f32 0.5, %v5042
        %v5044 = vsub.f32 1.5, %v5043
        %v5045 = vmul.f32 %v5040, %v5044
        %vm5046 = vweird.f32 %v5016
        %vm5047 = vweird.f32 %v5040
        %vm5048 = vmor %vm5046, %vm5047
        %v5049 = vsel %vm5048, %v5040, %v5045
        %v5050 = vrsqrt.pop %v5017
        %v5051 = vmul.f32 %v5050, %v5017
        %v5052 = vmul.f32 %v5051, %v5050
        %v5053 = vmul.f32 0.5, %v5052
        %v5054 = vsub.f32 1.5, %v5053
        %v5055 = vmul.f32 %v5050, %v5054
        %vm5056 = vweird.f32 %v5017
        %vm5057 = vweird.f32 %v5050
        %vm5058 = vmor %vm5056, %vm5057
        %v5059 = vsel %vm5058, %v5050, %v5055
        %v5060 = vrsqrt.pop %v5018
        %v5061 = vmul.f32 %v5060, %v5018
        %v5062 = vmul.f32 %v5061, %v5060
        %v5063 = vmul.f32 0.5, %v5062
        %v5064 = vsub.f32 1.5, %v5063
        %v5065 = vmul.f32 %v5060, %v5064
        %vm5066 = vweird.f32 %v5018
        %vm5067 = vweird.f32 %v5060
        %vm5068 = vmor %vm5066, %vm5067
        %v5069 = vsel %vm5068, %v5060, %v5065
        %v5070 = vrsqrt.pop %v5019
        %v5071 = vmul.f32 %v5070, %v5019
        %v5072 = vmul.f32 %v5071, %v5070
        %v5073 = vmul.f32 0.5, %v5072
        %v5074 = vsub.f32 1.5, %v5073
        %v5075 = vmul.f32 %v5070, %v5074
        %vm5076 = vweird.f32 %v5019
        %vm5077 = vweird.f32 %v5070
        %vm5078 = vmor %vm5076, %vm5077
        %v5079 = vsel %vm5078, %v5070, %v5075
        %v5080 = vmul.f32 %v4984, %v5029
        %v5081 = vmul.f32 %v4985, %v5039
        %v5082 = vmul.f32 %v4986, %v5049
        %v5083 = vmul.f32 %v4987, %v5059
        %v5084 = vmul.f32 %v4988, %v5069
        %v5085 = vmul.f32 %v4989, %v5079
        %v5087 = vperm.slane %v4964, 0
        %v5089 = vmul.f32 %v5080, %v5087
        %v5090 = vmul.f32 %v5081, %v5087
        %v5091 = vmul.f32 %v5082, %v5087
        %v5092 = vmul.f32 %v5083, %v5087
        %v5093 = vmul.f32 %v5084, %v5087
        %v5094 = vmul.f32 %v5085, %v5087
        %v5096 = vperm.slane %v4965, 0
        %v5098 = vadd.f32 %v5089, %v5096
        %v5099 = vadd.f32 %v5090, %v5096
        %v5100 = vadd.f32 %v5091, %v5096
        %v5101 = vadd.f32 %v5092, %v5096
        %v5102 = vadd.f32 %v5093, %v5096
        %v5103 = vadd.f32 %v5094, %v5096
        %v5104 = vpack.c.bf16 %v5099, %v5098
        %v5105 = vpack.c.bf16 %v5101, %v5100
        %v5106 = vpack.c.bf16 %v5103, %v5102
        %v5107 = vld [vmem:[%s920] sm:$0xff]
        %v5108 = vld [vmem:[%s920 + $0x8] sm:$0xff]
        %v5109 = vld [vmem:[%s920 + $0x10] sm:$0xff]
        %v5110 = vld [vmem:[%s920 + $0x18] sm:$0xff]
        %v5111 = vld [vmem:[%s920 + $0x20] sm:$0xff]
        %v5112 = vld [vmem:[%s920 + $0x28] sm:$0xff]
        %v5113 = vld [vmem:[%s920 + $0x30] sm:$0xff]
        %v5114 = vld [vmem:[%s920 + $0x38] sm:$0xff]
        %v5115 = vld [vmem:[%s920 + $0x40] sm:$0xff]
        %v5116 = vld [vmem:[%s920 + $0x48] sm:$0xff]
        %v5117 = vld [vmem:[%s920 + $0x50] sm:$0xff]
        %v5118 = vld [vmem:[%s920 + $0x58] sm:$0xff]
        %v5119 = vld [vmem:[%s920 + $0x60] sm:$0xff]
        %v5120 = vld [vmem:[%s920 + $0x68] sm:$0xff]
        %v5121 = vld [vmem:[%s920 + $0x70] sm:$0xff]
        %v5122 = vld [vmem:[%s920 + $0x78] sm:$0xff]
        %v5123 = vld [vmem:[%s1040] sm:$0x3]
        %v5125 = vperm.slane %v5123, 0
        %v5126 = vperm.slane %v5123, 1
        %v5145 = vunpack.c.l.b16 %v5107
        %v5146 = vunpack.c.h.b16 %v5107
        %v5147 = vunpack.c.l.b16 %v5108
        %v5148 = vunpack.c.h.b16 %v5108
        %v5149 = vunpack.c.l.b16 %v5109
        %v5150 = vunpack.c.h.b16 %v5109
        %v5151 = vunpack.c.l.b16 %v5110
        %v5152 = vunpack.c.h.b16 %v5110
        %v5153 = vunpack.c.l.b16 %v5111
        %v5154 = vunpack.c.h.b16 %v5111
        %v5155 = vunpack.c.l.b16 %v5112
        %v5156 = vunpack.c.h.b16 %v5112
        %v5157 = vunpack.c.l.b16 %v5113
        %v5158 = vunpack.c.h.b16 %v5113
        %v5159 = vunpack.c.l.b16 %v5114
        %v5160 = vunpack.c.h.b16 %v5114
        %v5161 = vunpack.c.l.b16 %v5115
        %v5162 = vunpack.c.h.b16 %v5115
        %v5163 = vunpack.c.l.b16 %v5116
        %v5164 = vunpack.c.h.b16 %v5116
        %v5165 = vunpack.c.l.b16 %v5117
        %v5166 = vunpack.c.h.b16 %v5117
        %v5167 = vunpack.c.l.b16 %v5118
        %v5168 = vunpack.c.h.b16 %v5118
        %v5169 = vunpack.c.l.b16 %v5119
        %v5170 = vunpack.c.h.b16 %v5119
        %v5171 = vunpack.c.l.b16 %v5120
        %v5172 = vunpack.c.h.b16 %v5120
        %v5173 = vunpack.c.l.b16 %v5121
        %v5174 = vunpack.c.h.b16 %v5121
        %v5175 = vunpack.c.l.b16 %v5122
        %v5176 = vunpack.c.h.b16 %v5122
        %v5177 = vpack.c.b16 %v5147, %v5145
        %v5178 = vpack.c.b16 %v5148, %v5146
        %v5179 = vpack.c.b16 %v5151, %v5149
        %v5180 = vpack.c.b16 %v5152, %v5150
        %v5181 = vpack.c.b16 %v5155, %v5153
        %v5182 = vpack.c.b16 %v5156, %v5154
        %v5183 = vpack.c.b16 %v5159, %v5157
        %v5184 = vpack.c.b16 %v5160, %v5158
        %v5185 = vpack.c.b16 %v5163, %v5161
        %v5186 = vpack.c.b16 %v5164, %v5162
        %v5187 = vpack.c.b16 %v5167, %v5165
        %v5188 = vpack.c.b16 %v5168, %v5166
        %v5189 = vpack.c.b16 %v5171, %v5169
        %v5190 = vpack.c.b16 %v5172, %v5170
        %v5191 = vpack.c.b16 %v5175, %v5173
        %v5192 = vpack.c.b16 %v5176, %v5174
        %5209 = vmatpush.bf16.msra.mxu0 %v5191
        %5210 = vmatpush.bf16.msra.mxu0 %v5189
        %5211 = vmatpush.bf16.msra.mxu0 %v5187
        %5212 = vmatpush.bf16.msra.mxu0 %v5185
        %5213 = vmatpush.bf16.msra.mxu0 %v5183
        %5214 = vmatpush.bf16.msra.mxu0 %v5181
        %5215 = vmatpush.bf16.msra.mxu0 %v5179
        %5216 = vmatpush.bf16.msra.mxu0 %v5177
        %5217 = vmatmul.bf16.gmra.mxu0 %v5104
        %v5218 = vpop.f32.mrf.mxu0
        %v5219 = vadd.f32 %v5125, %v5218
        %v5220 = vpop.f32.mrf.mxu0
        %v5221 = vadd.f32 %v5125, %v5220
        %5222 = vmatmul.bf16.gmra.mxu0 %v5105
        %v5223 = vpop.f32.mrf.mxu0
        %v5224 = vadd.f32 %v5125, %v5223
        %v5225 = vpop.f32.mrf.mxu0
        %v5226 = vadd.f32 %v5125, %v5225
        %5227 = vmatmul.bf16.gmra.mxu0 %v5106
        %v5228 = vpop.f32.mrf.mxu0
        %v5229 = vadd.f32 %v5125, %v5228
        %v5230 = vpop.f32.mrf.mxu0
        %v5231 = vadd.f32 %v5125, %v5230
        %5232 = vdwg.mxu0
        %5233 = vmatpush.bf16.msra.mxu0 %v5192
        %5234 = vmatpush.bf16.msra.mxu0 %v5190
        %5235 = vmatpush.bf16.msra.mxu0 %v5188
        %5236 = vmatpush.bf16.msra.mxu0 %v5186
        %5237 = vmatpush.bf16.msra.mxu0 %v5184
        %5238 = vmatpush.bf16.msra.mxu0 %v5182
        %5239 = vmatpush.bf16.msra.mxu0 %v5180
        %5240 = vmatpush.bf16.msra.mxu0 %v5178
        %5241 = vmatmul.bf16.gmra.mxu0 %v5104
        %v5242 = vpop.f32.mrf.mxu0
        %v5243 = vadd.f32 %v5126, %v5242
        %v5244 = vpop.f32.mrf.mxu0
        %v5245 = vadd.f32 %v5126, %v5244
        %5246 = vmatmul.bf16.gmra.mxu0 %v5105
        %v5247 = vpop.f32.mrf.mxu0
        %v5248 = vadd.f32 %v5126, %v5247
        %v5249 = vpop.f32.mrf.mxu0
        %v5250 = vadd.f32 %v5126, %v5249
        %5251 = vmatmul.bf16.gmra.mxu0 %v5106
        %v5252 = vpop.f32.mrf.mxu0
        %v5253 = vadd.f32 %v5126, %v5252
        %v5254 = vpop.f32.mrf.mxu0
        %v5255 = vadd.f32 %v5126, %v5254
        %5256 = vdwg.mxu0
        %v5257 = vmul.f32 %v5219, 0.5
        %v5258 = vmul.f32 %v5243, 0.5
        %v5259 = vmul.f32 %v5221, 0.5
        %v5260 = vmul.f32 %v5245, 0.5
        %v5261 = vmul.f32 %v5224, 0.5
        %v5262 = vmul.f32 %v5248, 0.5
        %v5263 = vmul.f32 %v5226, 0.5
        %v5264 = vmul.f32 %v5250, 0.5
        %v5265 = vmul.f32 %v5229, 0.5
        %v5266 = vmul.f32 %v5253, 0.5
        %v5267 = vmul.f32 %v5231, 0.5
        %v5268 = vmul.f32 %v5255, 0.5
        %v5269 = vmul.f32 %v5219, 0.70710677
        %v5270 = vmul.f32 %v5243, 0.70710677
        %v5271 = vmul.f32 %v5221, 0.70710677
        %v5272 = vmul.f32 %v5245, 0.70710677
        %v5273 = vmul.f32 %v5224, 0.70710677
        %v5274 = vmul.f32 %v5248, 0.70710677
        %v5275 = vmul.f32 %v5226, 0.70710677
        %v5276 = vmul.f32 %v5250, 0.70710677
        %v5277 = vmul.f32 %v5229, 0.70710677
        %v5278 = vmul.f32 %v5253, 0.70710677
        %v5279 = vmul.f32 %v5231, 0.70710677
        %v5280 = vmul.f32 %v5255, 0.70710677
        %v5281 = vmul.f32 %v5269, %v5269
        %v5282 = vmin.f32 16.0, %v5281
        %v5283 = vmul.f32 %v5282, 2.1237322e-06
        %v5284 = vadd.f32 %v5283, 0.00028619796
        %v5285 = vmul.f32 %v5282, %v5284
        %v5286 = vadd.f32 %v5285, 0.0036580483
        %v5287 = vmul.f32 %v5282, %v5286
        %v5288 = vadd.f32 %v5287, 0.05243302
        %v5289 = vmul.f32 %v5282, %v5288
        %v5290 = vadd.f32 %v5289, 0.18741608
        %v5291 = vmul.f32 %v5282, %v5290
        %v5292 = vadd.f32 %v5291, 1.1283791
        %v5293 = vmul.f32 %v5269, %v5292
        %v5294 = vmul.f32 %v5282, 3.8918573e-05
        %v5295 = vadd.f32 %v5294, 0.001143296
        %v5296 = vmul.f32 %v5282, %v5295
        %v5297 = vadd.f32 %v5296, 0.014752088
        %v5298 = vmul.f32 %v5282, %v5297
        %v5299 = vadd.f32 %v5298, 0.112945676
        %v5300 = vmul.f32 %v5282, %v5299
        %v5301 = vadd.f32 %v5300, 0.4994258
        %v5302 = vmul.f32 %v5282, %v5301
        %v5303 = vadd.f32 %v5302, 1.0
        %v5304 = vrcp.pop %v5303
        %v5305 = vmul.f32 %v5303, %v5304
        %v5306 = vsub.f32 1.0, %v5305
        %v5307 = vmul.f32 %v5304, %v5306
        %v5308 = vadd.f32 %v5304, %v5307
        %vm5309 = vweird.f32 %v5303
        %vm5310 = vweird.f32 %v5304
        %vm5311 = vmor %vm5309, %vm5310
        %v5312 = vsel %vm5311, %v5304, %v5308
        %v5313 = vand.u32 2147483647, %v5303
        %vm5314 = vcmp.eq.f32.partialorder %v5313, 8.507059e+37
        %v5315 = vand.u32 %v5303, 2147483648
        %v5316 = vor.u32 1.1754944e-38, %v5315
        %v5317 = vsel %vm5314, %v5316, %v5312
        %v5318 = vmul.f32 %v5293, %v5317
        %v5319 = vmin.f32 %v5318, 1.0
        %v5320 = vmax.f32 %v5319, -1.0
        %v5321 = vmul.f32 %v5270, %v5270
        %v5322 = vmin.f32 16.0, %v5321
        %v5323 = vmul.f32 %v5322, 2.1237322e-06
        %v5324 = vadd.f32 %v5323, 0.00028619796
        %v5325 = vmul.f32 %v5322, %v5324
        %v5326 = vadd.f32 %v5325, 0.0036580483
        %v5327 = vmul.f32 %v5322, %v5326
        %v5328 = vadd.f32 %v5327, 0.05243302
        %v5329 = vmul.f32 %v5322, %v5328
        %v5330 = vadd.f32 %v5329, 0.18741608
        %v5331 = vmul.f32 %v5322, %v5330
        %v5332 = vadd.f32 %v5331, 1.1283791
        %v5333 = vmul.f32 %v5270, %v5332
        %v5334 = vmul.f32 %v5322, 3.8918573e-05
        %v5335 = vadd.f32 %v5334, 0.001143296
        %v5336 = vmul.f32 %v5322, %v5335
        %v5337 = vadd.f32 %v5336, 0.014752088
        %v5338 = vmul.f32 %v5322, %v5337
        %v5339 = vadd.f32 %v5338, 0.112945676
        %v5340 = vmul.f32 %v5322, %v5339
        %v5341 = vadd.f32 %v5340, 0.4994258
        %v5342 = vmul.f32 %v5322, %v5341
        %v5343 = vadd.f32 %v5342, 1.0
        %v5344 = vrcp.pop %v5343
        %v5345 = vmul.f32 %v5343, %v5344
        %v5346 = vsub.f32 1.0, %v5345
        %v5347 = vmul.f32 %v5344, %v5346
        %v5348 = vadd.f32 %v5344, %v5347
        %vm5349 = vweird.f32 %v5343
        %vm5350 = vweird.f32 %v5344
        %vm5351 = vmor %vm5349, %vm5350
        %v5352 = vsel %vm5351, %v5344, %v5348
        %v5353 = vand.u32 2147483647, %v5343
        %vm5354 = vcmp.eq.f32.partialorder %v5353, 8.507059e+37
        %v5355 = vand.u32 %v5343, 2147483648
        %v5356 = vor.u32 1.1754944e-38, %v5355
        %v5357 = vsel %vm5354, %v5356, %v5352
        %v5358 = vmul.f32 %v5333, %v5357
        %v5359 = vmin.f32 %v5358, 1.0
        %v5360 = vmax.f32 %v5359, -1.0
        %v5361 = vmul.f32 %v5271, %v5271
        %v5362 = vmin.f32 16.0, %v5361
        %v5363 = vmul.f32 %v5362, 2.1237322e-06
        %v5364 = vadd.f32 %v5363, 0.00028619796
        %v5365 = vmul.f32 %v5362, %v5364
        %v5366 = vadd.f32 %v5365, 0.0036580483
        %v5367 = vmul.f32 %v5362, %v5366
        %v5368 = vadd.f32 %v5367, 0.05243302
        %v5369 = vmul.f32 %v5362, %v5368
        %v5370 = vadd.f32 %v5369, 0.18741608
        %v5371 = vmul.f32 %v5362, %v5370
        %v5372 = vadd.f32 %v5371, 1.1283791
        %v5373 = vmul.f32 %v5271, %v5372
        %v5374 = vmul.f32 %v5362, 3.8918573e-05
        %v5375 = vadd.f32 %v5374, 0.001143296
        %v5376 = vmul.f32 %v5362, %v5375
        %v5377 = vadd.f32 %v5376, 0.014752088
        %v5378 = vmul.f32 %v5362, %v5377
        %v5379 = vadd.f32 %v5378, 0.112945676
        %v5380 = vmul.f32 %v5362, %v5379
        %v5381 = vadd.f32 %v5380, 0.4994258
        %v5382 = vmul.f32 %v5362, %v5381
        %v5383 = vadd.f32 %v5382, 1.0
        %v5384 = vrcp.pop %v5383
        %v5385 = vmul.f32 %v5383, %v5384
        %v5386 = vsub.f32 1.0, %v5385
        %v5387 = vmul.f32 %v5384, %v5386
        %v5388 = vadd.f32 %v5384, %v5387
        %vm5389 = vweird.f32 %v5383
        %vm5390 = vweird.f32 %v5384
        %vm5391 = vmor %vm5389, %vm5390
        %v5392 = vsel %vm5391, %v5384, %v5388
        %v5393 = vand.u32 2147483647, %v5383
        %vm5394 = vcmp.eq.f32.partialorder %v5393, 8.507059e+37
        %v5395 = vand.u32 %v5383, 2147483648
        %v5396 = vor.u32 1.1754944e-38, %v5395
        %v5397 = vsel %vm5394, %v5396, %v5392
        %v5398 = vmul.f32 %v5373, %v5397
        %v5399 = vmin.f32 %v5398, 1.0
        %v5400 = vmax.f32 %v5399, -1.0
        %v5401 = vmul.f32 %v5272, %v5272
        %v5402 = vmin.f32 16.0, %v5401
        %v5403 = vmul.f32 %v5402, 2.1237322e-06
        %v5404 = vadd.f32 %v5403, 0.00028619796
        %v5405 = vmul.f32 %v5402, %v5404
        %v5406 = vadd.f32 %v5405, 0.0036580483
        %v5407 = vmul.f32 %v5402, %v5406
        %v5408 = vadd.f32 %v5407, 0.05243302
        %v5409 = vmul.f32 %v5402, %v5408
        %v5410 = vadd.f32 %v5409, 0.18741608
        %v5411 = vmul.f32 %v5402, %v5410
        %v5412 = vadd.f32 %v5411, 1.1283791
        %v5413 = vmul.f32 %v5272, %v5412
        %v5414 = vmul.f32 %v5402, 3.8918573e-05
        %v5415 = vadd.f32 %v5414, 0.001143296
        %v5416 = vmul.f32 %v5402, %v5415
        %v5417 = vadd.f32 %v5416, 0.014752088
        %v5418 = vmul.f32 %v5402, %v5417
        %v5419 = vadd.f32 %v5418, 0.112945676
        %v5420 = vmul.f32 %v5402, %v5419
        %v5421 = vadd.f32 %v5420, 0.4994258
        %v5422 = vmul.f32 %v5402, %v5421
        %v5423 = vadd.f32 %v5422, 1.0
        %v5424 = vrcp.pop %v5423
        %v5425 = vmul.f32 %v5423, %v5424
        %v5426 = vsub.f32 1.0, %v5425
        %v5427 = vmul.f32 %v5424, %v5426
        %v5428 = vadd.f32 %v5424, %v5427
        %vm5429 = vweird.f32 %v5423
        %vm5430 = vweird.f32 %v5424
        %vm5431 = vmor %vm5429, %vm5430
        %v5432 = vsel %vm5431, %v5424, %v5428
        %v5433 = vand.u32 2147483647, %v5423
        %vm5434 = vcmp.eq.f32.partialorder %v5433, 8.507059e+37
        %v5435 = vand.u32 %v5423, 2147483648
        %v5436 = vor.u32 1.1754944e-38, %v5435
        %v5437 = vsel %vm5434, %v5436, %v5432
        %v5438 = vmul.f32 %v5413, %v5437
        %v5439 = vmin.f32 %v5438, 1.0
        %v5440 = vmax.f32 %v5439, -1.0
        %v5441 = vmul.f32 %v5273, %v5273
        %v5442 = vmin.f32 16.0, %v5441
        %v5443 = vmul.f32 %v5442, 2.1237322e-06
        %v5444 = vadd.f32 %v5443, 0.00028619796
        %v5445 = vmul.f32 %v5442, %v5444
        %v5446 = vadd.f32 %v5445, 0.0036580483
        %v5447 = vmul.f32 %v5442, %v5446
        %v5448 = vadd.f32 %v5447, 0.05243302
        %v5449 = vmul.f32 %v5442, %v5448
        %v5450 = vadd.f32 %v5449, 0.18741608
        %v5451 = vmul.f32 %v5442, %v5450
        %v5452 = vadd.f32 %v5451, 1.1283791
        %v5453 = vmul.f32 %v5273, %v5452
        %v5454 = vmul.f32 %v5442, 3.8918573e-05
        %v5455 = vadd.f32 %v5454, 0.001143296
        %v5456 = vmul.f32 %v5442, %v5455
        %v5457 = vadd.f32 %v5456, 0.014752088
        %v5458 = vmul.f32 %v5442, %v5457
        %v5459 = vadd.f32 %v5458, 0.112945676
        %v5460 = vmul.f32 %v5442, %v5459
        %v5461 = vadd.f32 %v5460, 0.4994258
        %v5462 = vmul.f32 %v5442, %v5461
        %v5463 = vadd.f32 %v5462, 1.0
        %v5464 = vrcp.pop %v5463
        %v5465 = vmul.f32 %v5463, %v5464
        %v5466 = vsub.f32 1.0, %v5465
        %v5467 = vmul.f32 %v5464, %v5466
        %v5468 = vadd.f32 %v5464, %v5467
        %vm5469 = vweird.f32 %v5463
        %vm5470 = vweird.f32 %v5464
        %vm5471 = vmor %vm5469, %vm5470
        %v5472 = vsel %vm5471, %v5464, %v5468
        %v5473 = vand.u32 2147483647, %v5463
        %vm5474 = vcmp.eq.f32.partialorder %v5473, 8.507059e+37
        %v5475 = vand.u32 %v5463, 2147483648
        %v5476 = vor.u32 1.1754944e-38, %v5475
        %v5477 = vsel %vm5474, %v5476, %v5472
        %v5478 = vmul.f32 %v5453, %v5477
        %v5479 = vmin.f32 %v5478, 1.0
        %v5480 = vmax.f32 %v5479, -1.0
        %v5481 = vmul.f32 %v5274, %v5274
        %v5482 = vmin.f32 16.0, %v5481
        %v5483 = vmul.f32 %v5482, 2.1237322e-06
        %v5484 = vadd.f32 %v5483, 0.00028619796
        %v5485 = vmul.f32 %v5482, %v5484
        %v5486 = vadd.f32 %v5485, 0.0036580483
        %v5487 = vmul.f32 %v5482, %v5486
        %v5488 = vadd.f32 %v5487, 0.05243302
        %v5489 = vmul.f32 %v5482, %v5488
        %v5490 = vadd.f32 %v5489, 0.18741608
        %v5491 = vmul.f32 %v5482, %v5490
        %v5492 = vadd.f32 %v5491, 1.1283791
        %v5493 = vmul.f32 %v5274, %v5492
        %v5494 = vmul.f32 %v5482, 3.8918573e-05
        %v5495 = vadd.f32 %v5494, 0.001143296
        %v5496 = vmul.f32 %v5482, %v5495
        %v5497 = vadd.f32 %v5496, 0.014752088
        %v5498 = vmul.f32 %v5482, %v5497
        %v5499 = vadd.f32 %v5498, 0.112945676
        %v5500 = vmul.f32 %v5482, %v5499
        %v5501 = vadd.f32 %v5500, 0.4994258
        %v5502 = vmul.f32 %v5482, %v5501
        %v5503 = vadd.f32 %v5502, 1.0
        %v5504 = vrcp.pop %v5503
        %v5505 = vmul.f32 %v5503, %v5504
        %v5506 = vsub.f32 1.0, %v5505
        %v5507 = vmul.f32 %v5504, %v5506
        %v5508 = vadd.f32 %v5504, %v5507
        %vm5509 = vweird.f32 %v5503
        %vm5510 = vweird.f32 %v5504
        %vm5511 = vmor %vm5509, %vm5510
        %v5512 = vsel %vm5511, %v5504, %v5508
        %v5513 = vand.u32 2147483647, %v5503
        %vm5514 = vcmp.eq.f32.partialorder %v5513, 8.507059e+37
        %v5515 = vand.u32 %v5503, 2147483648
        %v5516 = vor.u32 1.1754944e-38, %v5515
        %v5517 = vsel %vm5514, %v5516, %v5512
        %v5518 = vmul.f32 %v5493, %v5517
        %v5519 = vmin.f32 %v5518, 1.0
        %v5520 = vmax.f32 %v5519, -1.0
        %v5521 = vmul.f32 %v5275, %v5275
        %v5522 = vmin.f32 16.0, %v5521
        %v5523 = vmul.f32 %v5522, 2.1237322e-06
        %v5524 = vadd.f32 %v5523, 0.00028619796
        %v5525 = vmul.f32 %v5522, %v5524
        %v5526 = vadd.f32 %v5525, 0.0036580483
        %v5527 = vmul.f32 %v5522, %v5526
        %v5528 = vadd.f32 %v5527, 0.05243302
        %v5529 = vmul.f32 %v5522, %v5528
        %v5530 = vadd.f32 %v5529, 0.18741608
        %v5531 = vmul.f32 %v5522, %v5530
        %v5532 = vadd.f32 %v5531, 1.1283791
        %v5533 = vmul.f32 %v5275, %v5532
        %v5534 = vmul.f32 %v5522, 3.8918573e-05
        %v5535 = vadd.f32 %v5534, 0.001143296
        %v5536 = vmul.f32 %v5522, %v5535
        %v5537 = vadd.f32 %v5536, 0.014752088
        %v5538 = vmul.f32 %v5522, %v5537
        %v5539 = vadd.f32 %v5538, 0.112945676
        %v5540 = vmul.f32 %v5522, %v5539
        %v5541 = vadd.f32 %v5540, 0.4994258
        %v5542 = vmul.f32 %v5522, %v5541
        %v5543 = vadd.f32 %v5542, 1.0
        %v5544 = vrcp.pop %v5543
        %v5545 = vmul.f32 %v5543, %v5544
        %v5546 = vsub.f32 1.0, %v5545
        %v5547 = vmul.f32 %v5544, %v5546
        %v5548 = vadd.f32 %v5544, %v5547
        %vm5549 = vweird.f32 %v5543
        %vm5550 = vweird.f32 %v5544
        %vm5551 = vmor %vm5549, %vm5550
        %v5552 = vsel %vm5551, %v5544, %v5548
        %v5553 = vand.u32 2147483647, %v5543
        %vm5554 = vcmp.eq.f32.partialorder %v5553, 8.507059e+37
        %v5555 = vand.u32 %v5543, 2147483648
        %v5556 = vor.u32 1.1754944e-38, %v5555
        %v5557 = vsel %vm5554, %v5556, %v5552
        %v5558 = vmul.f32 %v5533, %v5557
        %v5559 = vmin.f32 %v5558, 1.0
        %v5560 = vmax.f32 %v5559, -1.0
        %v5561 = vmul.f32 %v5276, %v5276
        %v5562 = vmin.f32 16.0, %v5561
        %v5563 = vmul.f32 %v5562, 2.1237322e-06
        %v5564 = vadd.f32 %v5563, 0.00028619796
        %v5565 = vmul.f32 %v5562, %v5564
        %v5566 = vadd.f32 %v5565, 0.0036580483
        %v5567 = vmul.f32 %v5562, %v5566
        %v5568 = vadd.f32 %v5567, 0.05243302
        %v5569 = vmul.f32 %v5562, %v5568
        %v5570 = vadd.f32 %v5569, 0.18741608
        %v5571 = vmul.f32 %v5562, %v5570
        %v5572 = vadd.f32 %v5571, 1.1283791
        %v5573 = vmul.f32 %v5276, %v5572
        %v5574 = vmul.f32 %v5562, 3.8918573e-05
        %v5575 = vadd.f32 %v5574, 0.001143296
        %v5576 = vmul.f32 %v5562, %v5575
        %v5577 = vadd.f32 %v5576, 0.014752088
        %v5578 = vmul.f32 %v5562, %v5577
        %v5579 = vadd.f32 %v5578, 0.112945676
        %v5580 = vmul.f32 %v5562, %v5579
        %v5581 = vadd.f32 %v5580, 0.4994258
        %v5582 = vmul.f32 %v5562, %v5581
        %v5583 = vadd.f32 %v5582, 1.0
        %v5584 = vrcp.pop %v5583
        %v5585 = vmul.f32 %v5583, %v5584
        %v5586 = vsub.f32 1.0, %v5585
        %v5587 = vmul.f32 %v5584, %v5586
        %v5588 = vadd.f32 %v5584, %v5587
        %vm5589 = vweird.f32 %v5583
        %vm5590 = vweird.f32 %v5584
        %vm5591 = vmor %vm5589, %vm5590
        %v5592 = vsel %vm5591, %v5584, %v5588
        %v5593 = vand.u32 2147483647, %v5583
        %vm5594 = vcmp.eq.f32.partialorder %v5593, 8.507059e+37
        %v5595 = vand.u32 %v5583, 2147483648
        %v5596 = vor.u32 1.1754944e-38, %v5595
        %v5597 = vsel %vm5594, %v5596, %v5592
        %v5598 = vmul.f32 %v5573, %v5597
        %v5599 = vmin.f32 %v5598, 1.0
        %v5600 = vmax.f32 %v5599, -1.0
        %v5601 = vmul.f32 %v5277, %v5277
        %v5602 = vmin.f32 16.0, %v5601
        %v5603 = vmul.f32 %v5602, 2.1237322e-06
        %v5604 = vadd.f32 %v5603, 0.00028619796
        %v5605 = vmul.f32 %v5602, %v5604
        %v5606 = vadd.f32 %v5605, 0.0036580483
        %v5607 = vmul.f32 %v5602, %v5606
        %v5608 = vadd.f32 %v5607, 0.05243302
        %v5609 = vmul.f32 %v5602, %v5608
        %v5610 = vadd.f32 %v5609, 0.18741608
        %v5611 = vmul.f32 %v5602, %v5610
        %v5612 = vadd.f32 %v5611, 1.1283791
        %v5613 = vmul.f32 %v5277, %v5612
        %v5614 = vmul.f32 %v5602, 3.8918573e-05
        %v5615 = vadd.f32 %v5614, 0.001143296
        %v5616 = vmul.f32 %v5602, %v5615
        %v5617 = vadd.f32 %v5616, 0.014752088
        %v5618 = vmul.f32 %v5602, %v5617
        %v5619 = vadd.f32 %v5618, 0.112945676
        %v5620 = vmul.f32 %v5602, %v5619
        %v5621 = vadd.f32 %v5620, 0.4994258
        %v5622 = vmul.f32 %v5602, %v5621
        %v5623 = vadd.f32 %v5622, 1.0
        %v5624 = vrcp.pop %v5623
        %v5625 = vmul.f32 %v5623, %v5624
        %v5626 = vsub.f32 1.0, %v5625
        %v5627 = vmul.f32 %v5624, %v5626
        %v5628 = vadd.f32 %v5624, %v5627
        %vm5629 = vweird.f32 %v5623
        %vm5630 = vweird.f32 %v5624
        %vm5631 = vmor %vm5629, %vm5630
        %v5632 = vsel %vm5631, %v5624, %v5628
        %v5633 = vand.u32 2147483647, %v5623
        %vm5634 = vcmp.eq.f32.partialorder %v5633, 8.507059e+37
        %v5635 = vand.u32 %v5623, 2147483648
        %v5636 = vor.u32 1.1754944e-38, %v5635
        %v5637 = vsel %vm5634, %v5636, %v5632
        %v5638 = vmul.f32 %v5613, %v5637
        %v5639 = vmin.f32 %v5638, 1.0
        %v5640 = vmax.f32 %v5639, -1.0
        %v5641 = vmul.f32 %v5278, %v5278
        %v5642 = vmin.f32 16.0, %v5641
        %v5643 = vmul.f32 %v5642, 2.1237322e-06
        %v5644 = vadd.f32 %v5643, 0.00028619796
        %v5645 = vmul.f32 %v5642, %v5644
        %v5646 = vadd.f32 %v5645, 0.0036580483
        %v5647 = vmul.f32 %v5642, %v5646
        %v5648 = vadd.f32 %v5647, 0.05243302
        %v5649 = vmul.f32 %v5642, %v5648
        %v5650 = vadd.f32 %v5649, 0.18741608
        %v5651 = vmul.f32 %v5642, %v5650
        %v5652 = vadd.f32 %v5651, 1.1283791
        %v5653 = vmul.f32 %v5278, %v5652
        %v5654 = vmul.f32 %v5642, 3.8918573e-05
        %v5655 = vadd.f32 %v5654, 0.001143296
        %v5656 = vmul.f32 %v5642, %v5655
        %v5657 = vadd.f32 %v5656, 0.014752088
        %v5658 = vmul.f32 %v5642, %v5657
        %v5659 = vadd.f32 %v5658, 0.112945676
        %v5660 = vmul.f32 %v5642, %v5659
        %v5661 = vadd.f32 %v5660, 0.4994258
        %v5662 = vmul.f32 %v5642, %v5661
        %v5663 = vadd.f32 %v5662, 1.0
        %v5664 = vrcp.pop %v5663
        %v5665 = vmul.f32 %v5663, %v5664
        %v5666 = vsub.f32 1.0, %v5665
        %v5667 = vmul.f32 %v5664, %v5666
        %v5668 = vadd.f32 %v5664, %v5667
        %vm5669 = vweird.f32 %v5663
        %vm5670 = vweird.f32 %v5664
        %vm5671 = vmor %vm5669, %vm5670
        %v5672 = vsel %vm5671, %v5664, %v5668
        %v5673 = vand.u32 2147483647, %v5663
        %vm5674 = vcmp.eq.f32.partialorder %v5673, 8.507059e+37
        %v5675 = vand.u32 %v5663, 2147483648
        %v5676 = vor.u32 1.1754944e-38, %v5675
        %v5677 = vsel %vm5674, %v5676, %v5672
        %v5678 = vmul.f32 %v5653, %v5677
        %v5679 = vmin.f32 %v5678, 1.0
        %v5680 = vmax.f32 %v5679, -1.0
        %v5681 = vmul.f32 %v5279, %v5279
        %v5682 = vmin.f32 16.0, %v5681
        %v5683 = vmul.f32 %v5682, 2.1237322e-06
        %v5684 = vadd.f32 %v5683, 0.00028619796
        %v5685 = vmul.f32 %v5682, %v5684
        %v5686 = vadd.f32 %v5685, 0.0036580483
        %v5687 = vmul.f32 %v5682, %v5686
        %v5688 = vadd.f32 %v5687, 0.05243302
        %v5689 = vmul.f32 %v5682, %v5688
        %v5690 = vadd.f32 %v5689, 0.18741608
        %v5691 = vmul.f32 %v5682, %v5690
        %v5692 = vadd.f32 %v5691, 1.1283791
        %v5693 = vmul.f32 %v5279, %v5692
        %v5694 = vmul.f32 %v5682, 3.8918573e-05
        %v5695 = vadd.f32 %v5694, 0.001143296
        %v5696 = vmul.f32 %v5682, %v5695
        %v5697 = vadd.f32 %v5696, 0.014752088
        %v5698 = vmul.f32 %v5682, %v5697
        %v5699 = vadd.f32 %v5698, 0.112945676
        %v5700 = vmul.f32 %v5682, %v5699
        %v5701 = vadd.f32 %v5700, 0.4994258
        %v5702 = vmul.f32 %v5682, %v5701
        %v5703 = vadd.f32 %v5702, 1.0
        %v5704 = vrcp.pop %v5703
        %v5705 = vmul.f32 %v5703, %v5704
        %v5706 = vsub.f32 1.0, %v5705
        %v5707 = vmul.f32 %v5704, %v5706
        %v5708 = vadd.f32 %v5704, %v5707
        %vm5709 = vweird.f32 %v5703
        %vm5710 = vweird.f32 %v5704
        %vm5711 = vmor %vm5709, %vm5710
        %v5712 = vsel %vm5711, %v5704, %v5708
        %v5713 = vand.u32 2147483647, %v5703
        %vm5714 = vcmp.eq.f32.partialorder %v5713, 8.507059e+37
        %v5715 = vand.u32 %v5703, 2147483648
        %v5716 = vor.u32 1.1754944e-38, %v5715
        %v5717 = vsel %vm5714, %v5716, %v5712
        %v5718 = vmul.f32 %v5693, %v5717
        %v5719 = vmin.f32 %v5718, 1.0
        %v5720 = vmax.f32 %v5719, -1.0
        %v5721 = vmul.f32 %v5280, %v5280
        %v5722 = vmin.f32 16.0, %v5721
        %v5723 = vmul.f32 %v5722, 2.1237322e-06
        %v5724 = vadd.f32 %v5723, 0.00028619796
        %v5725 = vmul.f32 %v5722, %v5724
        %v5726 = vadd.f32 %v5725, 0.0036580483
        %v5727 = vmul.f32 %v5722, %v5726
        %v5728 = vadd.f32 %v5727, 0.05243302
        %v5729 = vmul.f32 %v5722, %v5728
        %v5730 = vadd.f32 %v5729, 0.18741608
        %v5731 = vmul.f32 %v5722, %v5730
        %v5732 = vadd.f32 %v5731, 1.1283791
        %v5733 = vmul.f32 %v5280, %v5732
        %v5734 = vmul.f32 %v5722, 3.8918573e-05
        %v5735 = vadd.f32 %v5734, 0.001143296
        %v5736 = vmul.f32 %v5722, %v5735
        %v5737 = vadd.f32 %v5736, 0.014752088
        %v5738 = vmul.f32 %v5722, %v5737
        %v5739 = vadd.f32 %v5738, 0.112945676
        %v5740 = vmul.f32 %v5722, %v5739
        %v5741 = vadd.f32 %v5740, 0.4994258
        %v5742 = vmul.f32 %v5722, %v5741
        %v5743 = vadd.f32 %v5742, 1.0
        %v5744 = vrcp.pop %v5743
        %v5745 = vmul.f32 %v5743, %v5744
        %v5746 = vsub.f32 1.0, %v5745
        %v5747 = vmul.f32 %v5744, %v5746
        %v5748 = vadd.f32 %v5744, %v5747
        %vm5749 = vweird.f32 %v5743
        %vm5750 = vweird.f32 %v5744
        %vm5751 = vmor %vm5749, %vm5750
        %v5752 = vsel %vm5751, %v5744, %v5748
        %v5753 = vand.u32 2147483647, %v5743
        %vm5754 = vcmp.eq.f32.partialorder %v5753, 8.507059e+37
        %v5755 = vand.u32 %v5743, 2147483648
        %v5756 = vor.u32 1.1754944e-38, %v5755
        %v5757 = vsel %vm5754, %v5756, %v5752
        %v5758 = vmul.f32 %v5733, %v5757
        %v5759 = vmin.f32 %v5758, 1.0
        %v5760 = vmax.f32 %v5759, -1.0
        %v5761 = vadd.f32 %v5320, 1.0
        %v5762 = vadd.f32 %v5360, 1.0
        %v5763 = vadd.f32 %v5400, 1.0
        %v5764 = vadd.f32 %v5440, 1.0
        %v5765 = vadd.f32 %v5480, 1.0
        %v5766 = vadd.f32 %v5520, 1.0
        %v5767 = vadd.f32 %v5560, 1.0
        %v5768 = vadd.f32 %v5600, 1.0
        %v5769 = vadd.f32 %v5640, 1.0
        %v5770 = vadd.f32 %v5680, 1.0
        %v5771 = vadd.f32 %v5720, 1.0
        %v5772 = vadd.f32 %v5760, 1.0
        %v5773 = vmul.f32 %v5257, %v5761
        %v5774 = vmul.f32 %v5258, %v5762
        %v5775 = vmul.f32 %v5259, %v5763
        %v5776 = vmul.f32 %v5260, %v5764
        %v5777 = vmul.f32 %v5261, %v5765
        %v5778 = vmul.f32 %v5262, %v5766
        %v5779 = vmul.f32 %v5263, %v5767
        %v5780 = vmul.f32 %v5264, %v5768
        %v5781 = vmul.f32 %v5265, %v5769
        %v5782 = vmul.f32 %v5266, %v5770
        %v5783 = vmul.f32 %v5267, %v5771
        %v5784 = vmul.f32 %v5268, %v5772
        %v5785 = vpack.c.bf16 %v5775, %v5773
        %v5786 = vpack.c.bf16 %v5776, %v5774
        %v5787 = vpack.c.bf16 %v5779, %v5777
        %v5788 = vpack.c.bf16 %v5780, %v5778
        %v5789 = vpack.c.bf16 %v5783, %v5781
        %v5790 = vpack.c.bf16 %v5784, %v5782
        %v5791 = vld [vmem:[%s930] sm:$0xf]
        %v5792 = vld [vmem:[%s930 + $0x4] sm:$0xf]
        %v5793 = vld [vmem:[%s930 + $0x8] sm:$0xf]
        %v5794 = vld [vmem:[%s930 + $0xc] sm:$0xf]
        %v5795 = vld [vmem:[%s930 + $0x10] sm:$0xf]
        %v5796 = vld [vmem:[%s930 + $0x14] sm:$0xf]
        %v5797 = vld [vmem:[%s930 + $0x18] sm:$0xf]
        %v5798 = vld [vmem:[%s930 + $0x1c] sm:$0xf]
        %v5799 = vld [vmem:[%s930 + $0x20] sm:$0xf]
        %v5800 = vld [vmem:[%s930 + $0x24] sm:$0xf]
        %v5801 = vld [vmem:[%s930 + $0x28] sm:$0xf]
        %v5802 = vld [vmem:[%s930 + $0x2c] sm:$0xf]
        %v5803 = vld [vmem:[%s930 + $0x30] sm:$0xf]
        %v5804 = vld [vmem:[%s930 + $0x34] sm:$0xf]
        %v5805 = vld [vmem:[%s930 + $0x38] sm:$0xf]
        %v5806 = vld [vmem:[%s930 + $0x3c] sm:$0xf]
        %v5807 = vld [vmem:[%s930 + $0x40] sm:$0xf]
        %v5808 = vld [vmem:[%s930 + $0x44] sm:$0xf]
        %v5809 = vld [vmem:[%s930 + $0x48] sm:$0xf]
        %v5810 = vld [vmem:[%s930 + $0x4c] sm:$0xf]
        %v5811 = vld [vmem:[%s930 + $0x50] sm:$0xf]
        %v5812 = vld [vmem:[%s930 + $0x54] sm:$0xf]
        %v5813 = vld [vmem:[%s930 + $0x58] sm:$0xf]
        %v5814 = vld [vmem:[%s930 + $0x5c] sm:$0xf]
        %v5815 = vld [vmem:[%s930 + $0x60] sm:$0xf]
        %v5816 = vld [vmem:[%s930 + $0x64] sm:$0xf]
        %v5817 = vld [vmem:[%s930 + $0x68] sm:$0xf]
        %v5818 = vld [vmem:[%s930 + $0x6c] sm:$0xf]
        %v5819 = vld [vmem:[%s930 + $0x70] sm:$0xf]
        %v5820 = vld [vmem:[%s930 + $0x74] sm:$0xf]
        %v5821 = vld [vmem:[%s930 + $0x78] sm:$0xf]
        %v5822 = vld [vmem:[%s930 + $0x7c] sm:$0xf]
        %v5823 = vld [vmem:[%s1043] sm:$0x1]
        %v5825 = vperm.slane %v5823, 0
        %v5859 = vunpack.c.l.b16 %v5791
        %v5860 = vunpack.c.l.b16 %v5792
        %v5861 = vunpack.c.l.b16 %v5793
        %v5862 = vunpack.c.l.b16 %v5794
        %v5863 = vunpack.c.l.b16 %v5795
        %v5864 = vunpack.c.l.b16 %v5796
        %v5865 = vunpack.c.l.b16 %v5797
        %v5866 = vunpack.c.l.b16 %v5798
        %v5867 = vunpack.c.l.b16 %v5799
        %v5868 = vunpack.c.l.b16 %v5800
        %v5869 = vunpack.c.l.b16 %v5801
        %v5870 = vunpack.c.l.b16 %v5802
        %v5871 = vunpack.c.l.b16 %v5803
        %v5872 = vunpack.c.l.b16 %v5804
        %v5873 = vunpack.c.l.b16 %v5805
        %v5874 = vunpack.c.l.b16 %v5806
        %v5875 = vunpack.c.l.b16 %v5807
        %v5876 = vunpack.c.l.b16 %v5808
        %v5877 = vunpack.c.l.b16 %v5809
        %v5878 = vunpack.c.l.b16 %v5810
        %v5879 = vunpack.c.l.b16 %v5811
        %v5880 = vunpack.c.l.b16 %v5812
        %v5881 = vunpack.c.l.b16 %v5813
        %v5882 = vunpack.c.l.b16 %v5814
        %v5883 = vunpack.c.l.b16 %v5815
        %v5884 = vunpack.c.l.b16 %v5816
        %v5885 = vunpack.c.l.b16 %v5817
        %v5886 = vunpack.c.l.b16 %v5818
        %v5887 = vunpack.c.l.b16 %v5819
        %v5888 = vunpack.c.l.b16 %v5820
        %v5889 = vunpack.c.l.b16 %v5821
        %v5890 = vunpack.c.l.b16 %v5822
        %v5891 = vpack.c.b16 %v5860, %v5859
        %v5892 = vpack.c.b16 %v5862, %v5861
        %v5893 = vpack.c.b16 %v5864, %v5863
        %v5894 = vpack.c.b16 %v5866, %v5865
        %v5895 = vpack.c.b16 %v5868, %v5867
        %v5896 = vpack.c.b16 %v5870, %v5869
        %v5897 = vpack.c.b16 %v5872, %v5871
        %v5898 = vpack.c.b16 %v5874, %v5873
        %v5899 = vpack.c.b16 %v5876, %v5875
        %v5900 = vpack.c.b16 %v5878, %v5877
        %v5901 = vpack.c.b16 %v5880, %v5879
        %v5902 = vpack.c.b16 %v5882, %v5881
        %v5903 = vpack.c.b16 %v5884, %v5883
        %v5904 = vpack.c.b16 %v5886, %v5885
        %v5905 = vpack.c.b16 %v5888, %v5887
        %v5906 = vpack.c.b16 %v5890, %v5889
        %5923 = vmatpush.bf16.msra.mxu0 %v5898
        %5924 = vmatpush.bf16.msra.mxu0 %v5897
        %5925 = vmatpush.bf16.msra.mxu0 %v5896
        %5926 = vmatpush.bf16.msra.mxu0 %v5895
        %5927 = vmatpush.bf16.msra.mxu0 %v5894
        %5928 = vmatpush.bf16.msra.mxu0 %v5893
        %5929 = vmatpush.bf16.msra.mxu0 %v5892
        %5930 = vmatpush.bf16.msra.mxu0 %v5891
        %5931 = vmatmul.bf16.gmra.mxu0 %v5785
        %v5932 = vpop.f32.mrf.mxu0
        %v5933 = vadd.f32 %v5825, %v5932
        %v5934 = vpop.f32.mrf.mxu0
        %v5935 = vadd.f32 %v5825, %v5934
        %5936 = vmatmul.bf16.gmra.mxu0 %v5787
        %v5937 = vpop.f32.mrf.mxu0
        %v5938 = vadd.f32 %v5825, %v5937
        %v5939 = vpop.f32.mrf.mxu0
        %v5940 = vadd.f32 %v5825, %v5939
        %5941 = vmatmul.bf16.gmra.mxu0 %v5789
        %v5942 = vpop.f32.mrf.mxu0
        %v5943 = vadd.f32 %v5825, %v5942
        %v5944 = vpop.f32.mrf.mxu0
        %v5945 = vadd.f32 %v5825, %v5944
        %5946 = vdwg.mxu0
        %5947 = vmatpush.bf16.msra.mxu0 %v5906
        %5948 = vmatpush.bf16.msra.mxu0 %v5905
        %5949 = vmatpush.bf16.msra.mxu0 %v5904
        %5950 = vmatpush.bf16.msra.mxu0 %v5903
        %5951 = vmatpush.bf16.msra.mxu0 %v5902
        %5952 = vmatpush.bf16.msra.mxu0 %v5901
        %5953 = vmatpush.bf16.msra.mxu0 %v5900
        %5954 = vmatpush.bf16.msra.mxu0 %v5899
        %5955 = vmatmul.bf16.gmra.mxu0 %v5786
        %v5956 = vpop.f32.mrf.mxu0
        %v5957 = vadd.f32 %v5933, %v5956
        %v5958 = vpop.f32.mrf.mxu0
        %v5959 = vadd.f32 %v5935, %v5958
        %5960 = vmatmul.bf16.gmra.mxu0 %v5788
        %v5961 = vpop.f32.mrf.mxu0
        %v5962 = vadd.f32 %v5938, %v5961
        %v5963 = vpop.f32.mrf.mxu0
        %v5964 = vadd.f32 %v5940, %v5963
        %5965 = vmatmul.bf16.gmra.mxu0 %v5790
        %v5966 = vpop.f32.mrf.mxu0
        %v5967 = vadd.f32 %v5943, %v5966
        %v5968 = vpop.f32.mrf.mxu0
        %v5969 = vadd.f32 %v5945, %v5968
        %5970 = vdwg.mxu0
        %v5971 = vadd.f32 %v4958, %v5957
        %v5972 = vadd.f32 %v4959, %v5959
        %v5973 = vadd.f32 %v4960, %v5962
        %v5974 = vadd.f32 %v4961, %v5964
        %v5975 = vadd.f32 %v4962, %v5967
        %v5976 = vadd.f32 %v4963, %v5969
        %5977 = vst [vmem:[#allocation2] sm:$0xff] %v5971
        %5978 = vst [vmem:[#allocation2 + $0x8] sm:$0xff] %v5972
        %5979 = vst [vmem:[#allocation2 + $0x10] sm:$0xff] %v5973
        %5980 = vst [vmem:[#allocation2 + $0x18] sm:$0xff] %v5974
        %5981 = vst [vmem:[#allocation2 + $0x20] sm:$0xff] %v5975
        %5982 = vst [vmem:[#allocation2 + $0x28] sm:$0xff] %v5976
        %p5983 = scmp.eq.s32.totalorder %s35, 2
        // Predicated region
        $region161: #{tpu_custom_call.1} parent=99 // pred_check
          %p5984 = pneg %p5983
        $region162: #{tpu_custom_call.1} parent=99 // pred_check_branch
          %5986 = sbr.rel (%p5984) target = $region164
        $region163: #{tpu_custom_call.1} parent=99 // pred_region
          %v5987 = vld [vmem:[%s16] sm:$0x1]
          %v5988 = vld [vmem:[%s17] sm:$0x1]
          %5989 = vadd.xlane.f32.xlu0 %v5971
          %v5990 = vpop.xlane.xlu0 %5989
          %v5991 = vmul.f32 %v5990, %v1199
          %v5992 = vsub.f32 %v5971, %v5991
          %v5993 = vmul.f32 %v5992, %v5992
          %5994 = vadd.xlane.f32.xlu0 %v5993
          %v5995 = vpop.xlane.xlu0 %5994
          %v5996 = vmul.f32 %v5995, %v1199
          %v5997 = vadd.f32 %v5996, 1e-05
          %v5998 = vrsqrt.pop %v5997
          %v5999 = vmul.f32 %v5998, %v5997
          %v6000 = vmul.f32 %v5999, %v5998
          %v6001 = vmul.f32 0.5, %v6000
          %v6002 = vsub.f32 1.5, %v6001
          %v6003 = vmul.f32 %v5998, %v6002
          %vm6004 = vweird.f32 %v5997
          %vm6005 = vweird.f32 %v5998
          %vm6006 = vmor %vm6004, %vm6005
          %v6007 = vsel %vm6006, %v5998, %v6003
          %v6008 = vmul.f32 %v5992, %v6007
          %v6010 = vperm.slane %v5987, 0
          %v6012 = vmul.f32 %v6008, %v6010
          %v6014 = vperm.slane %v5988, 0
          %v6016 = vadd.f32 %v6012, %v6014
          %v6017 = vpack.c.bf16 %v6016, %v6016
          %v6018 = vld [vmem:[#allocation20] sm:$0xf]
          %v6019 = vld [vmem:[#allocation20 + $0x4] sm:$0xf]
          %v6020 = vld [vmem:[#allocation20 + $0x8] sm:$0xf]
          %v6021 = vld [vmem:[#allocation20 + $0xc] sm:$0xf]
          %v6022 = vld [vmem:[#allocation20 + $0x10] sm:$0xf]
          %v6023 = vld [vmem:[#allocation20 + $0x14] sm:$0xf]
          %v6024 = vld [vmem:[#allocation20 + $0x18] sm:$0xf]
          %v6025 = vld [vmem:[#allocation20 + $0x1c] sm:$0xf]
          %v6026 = vld [vmem:[#allocation20 + $0x20] sm:$0xf]
          %v6027 = vld [vmem:[#allocation20 + $0x24] sm:$0xf]
          %v6028 = vld [vmem:[#allocation20 + $0x28] sm:$0xf]
          %v6029 = vld [vmem:[#allocation20 + $0x2c] sm:$0xf]
          %v6030 = vld [vmem:[#allocation20 + $0x30] sm:$0xf]
          %v6031 = vld [vmem:[#allocation20 + $0x34] sm:$0xf]
          %v6032 = vld [vmem:[#allocation20 + $0x38] sm:$0xf]
          %v6033 = vld [vmem:[#allocation20 + $0x3c] sm:$0xf]
          %v6034 = vld [vmem:[%s19] sm:$0x1]
          %v6036 = vperm.slane %v6034, 0
          %v6054 = vunpack.c.l.b16 %v6018
          %v6055 = vunpack.c.l.b16 %v6019
          %v6056 = vunpack.c.l.b16 %v6020
          %v6057 = vunpack.c.l.b16 %v6021
          %v6058 = vunpack.c.l.b16 %v6022
          %v6059 = vunpack.c.l.b16 %v6023
          %v6060 = vunpack.c.l.b16 %v6024
          %v6061 = vunpack.c.l.b16 %v6025
          %v6062 = vunpack.c.l.b16 %v6026
          %v6063 = vunpack.c.l.b16 %v6027
          %v6064 = vunpack.c.l.b16 %v6028
          %v6065 = vunpack.c.l.b16 %v6029
          %v6066 = vunpack.c.l.b16 %v6030
          %v6067 = vunpack.c.l.b16 %v6031
          %v6068 = vunpack.c.l.b16 %v6032
          %v6069 = vunpack.c.l.b16 %v6033
          %v6070 = vpack.c.b16 %v6055, %v6054
          %v6071 = vpack.c.b16 %v6057, %v6056
          %v6072 = vpack.c.b16 %v6059, %v6058
          %v6073 = vpack.c.b16 %v6061, %v6060
          %v6074 = vpack.c.b16 %v6063, %v6062
          %v6075 = vpack.c.b16 %v6065, %v6064
          %v6076 = vpack.c.b16 %v6067, %v6066
          %v6077 = vpack.c.b16 %v6069, %v6068
          %6086 = vmatpush.bf16.msra.mxu0 %v6077
          %6087 = vmatpush.bf16.msra.mxu0 %v6076
          %6088 = vmatpush.bf16.msra.mxu0 %v6075
          %6089 = vmatpush.bf16.msra.mxu0 %v6074
          %6090 = vmatpush.bf16.msra.mxu0 %v6073
          %6091 = vmatpush.bf16.msra.mxu0 %v6072
          %6092 = vmatpush.bf16.msra.mxu0 %v6071
          %6093 = vmatpush.bf16.msra.mxu0 %v6070
          %6094 = vmatmul.bf16.gmra.mxu0 %v6017
          %v6095 = vpop.f32.mrf.mxu0
          %v6096 = vadd.f32 %v6036, %v6095
          %v6097 = vpop.f32.mrf.mxu0
          %6098 = vdwg.mxu0
          %6099 = vst [vmem:[#allocation21] sm:$0xff] %v6096
        $region164: #{tpu_custom_call.1} parent=99 // pred_fallthru
          _
        // Predicated region
        $region165: #{tpu_custom_call.1} parent=99 // pred_check
          %p6100 = pneg %p528
        $region166: #{tpu_custom_call.1} parent=99 // pred_check_branch
          %6102 = sbr.rel (%p6100) target = $region168
        $region167: #{tpu_custom_call.1} parent=99 // pred_region
          %6104 = vsyncadd [#allocation5], 0
          %s6106 = sshll.u32 [#allocation21], 4
          %s6107 = int_to_ptr.vmem [resolvable:$true] %s6106
          %s6108 = sshll.u32 %s20, 4
          %s6109 = int_to_ptr.hbm [resolvable:$true] %s6108
          %6111 = dma.vmem_to_hbm [thread:$0]  %s6107, 128, %s6109, [#allocation5]
        $region168: #{tpu_custom_call.1} parent=99 // pred_fallthru
          _
        // Predicated region
        $region169: #{tpu_custom_call.1} parent=99 // pred_check
          %p6112 = pneg %p528
        $region170: #{tpu_custom_call.1} parent=99 // pred_check_branch
          %6114 = sbr.rel (%p6112) target = $region172
        $region171: #{tpu_custom_call.1} parent=99 // pred_region
          %6116 = dma.done [#allocation5], 128
        $region172: #{tpu_custom_call.1} parent=99 // pred_fallthru
          _
      $region100: #{tpu_custom_call.1} parent=5 // pred_fallthru
        _
      %p6117 = scmp.le.s32.totalorder 2, %s30
      // Predicated region
      $region173: #{tpu_custom_call.1} parent=5 // pred_check
        %p6118 = pneg %p6117
      $region174: #{tpu_custom_call.1} parent=5 // pred_check_branch
        %6120 = sbr.rel (%p6118) target = $region176
      $region175: #{tpu_custom_call.1} parent=5 // pred_region
        %s6121 = ssub.s32 %s30, 2
      $region176: #{tpu_custom_call.1} parent=5 // pred_fallthru
        _
    $region6: #{tpu_custom_call.1} parent=1 // loop_footer
      %s34 = sadd.s32 1, %s30
    $region7: #{tpu_custom_call.1} parent=1 // loop_footer_branch
      %29 = sbr.rel target = $region3
    $region8: #{tpu_custom_call.1} parent=1 // loop_exit
      _
    %6122 = vsyncpa [#allocation4], 1
    %s6123 = scalar_lea.sflag [#allocation4], 1
    %6124 = vsyncpa %s6123, 1
    %6125 = vsyncpa [#allocation7], 1
    %6126 = vsyncpa [#allocation10], 1
    %6127 = vsyncpa [#allocation5], 1
    %s6128 = scalar_lea.sflag [#allocation5], 1
    %6129 = vsyncpa %s6128, 1

</llo_original>
